<compile_context>
chip_gen: v7x
topology: tpu7x:2x2x1
jax: 0.10.0
libtpu: 0.0.40
codegen_flags: <defaults>
</compile_context>

<pallas_src>
import jax
import jax.numpy as jnp
from jax.experimental import pallas as pl
from jax.experimental.pallas import tpu as pltpu


# ------------------------- fused refinement-stage kernel -------------------- #

def _run_stage_pallas(params, img_raw, verts_padded, adj, vert_feats_padded):
    """Run the whole refinement stage in one Pallas kernel, gridded over meshes.

    img_raw:            (N, V, sum(img_channels))  raw vert_align features
    verts_padded:       (N, V, 3)
    adj:                (N, V, V)  per-mesh symmetric adjacency (block-diag form)
    vert_feats_padded:  (N, V, F) or None
    returns (new_verts (N, V, 3), vert_feats_out (N, V, hidden))
    """
    N, V, _ = img_raw.shape
    H = params["bottleneck"]["wT"].shape[1]
    num_layers = len(params["res_gconvs"])
    has_vf = vert_feats_padded is not None

    names, args, in_specs = [], [], []

    def add_mesh(name, arr):            # per-mesh data, tiled over the mesh grid axis
        names.append(name)
        args.append(arr)
        in_specs.append(pl.BlockSpec((None, V, arr.shape[-1]), lambda n: (n, 0, 0)))

    def add_param(name, arr):           # tiny weight / bias, VMEM-resident across grid
        names.append(name)
        args.append(arr)
        in_specs.append(pl.BlockSpec(arr.shape, lambda n, _nd=arr.ndim: (0,) * _nd))

    add_mesh("img_raw", img_raw)
    add_mesh("verts", verts_padded)
    if has_vf:
        add_mesh("vfeat", vert_feats_padded)
    add_mesh("adj", adj)

    add_param("bt_w", params["bottleneck"]["wT"])
    add_param("bt_b", params["bottleneck"]["b"])

    # Layer-0 input is conceptually relu([vert_feats? | img_feats | verts]); split
    # the layer-0 weights along K in the wrapper so the concat never hits HBM.
    chunk_keys = (["vfeat"] if has_vf else []) + ["img", "verts"]
    chunk_sizes = ([vert_feats_padded.shape[-1]] if has_vf else []) + [H, 3]

    for li, layer in enumerate(params["res_gconvs"]):
        gc1, gc2, skip = layer["gc1"], layer["gc2"], layer["skip"]
        if li == 0:
            off = 0
            for key, sz in zip(chunk_keys, chunk_sizes):
                add_param(f"l0_gc1_w0_{key}", gc1["w0T"][off:off + sz])
                add_param(f"l0_gc1_w1_{key}", gc1["w1T"][off:off + sz])
                add_param(f"l0_skip_w_{key}", skip["wT"][off:off + sz])
                off += sz
            add_param("l0_gc1_b0", gc1["b0"])
            add_param("l0_gc1_b1", gc1["b1"])
            add_param("l0_skip_b", skip["b"])
        else:
            add_param(f"l{li}_gc1_w0", gc1["w0T"])
            add_param(f"l{li}_gc1_b0", gc1["b0"])
            add_param(f"l{li}_gc1_w1", gc1["w1T"])
            add_param(f"l{li}_gc1_b1", gc1["b1"])
        add_param(f"l{li}_gc2_w0", gc2["w0T"])
        add_param(f"l{li}_gc2_b0", gc2["b0"])
        add_param(f"l{li}_gc2_w1", gc2["w1T"])
        add_param(f"l{li}_gc2_b1", gc2["b1"])

    add_param("gf_w0", params["gconv"]["w0T"])
    add_param("gf_b0", params["gconv"]["b0"])
    add_param("gf_w1", params["gconv"]["w1T"])
    add_param("gf_b1", params["gconv"]["b1"])

    n_in = len(args)

    def kernel(*refs):
        r = dict(zip(names, refs[:n_in]))
        verts_out_ref, vf_out_ref = refs[n_in:]

        def mm(a, b):
            return jnp.dot(a, b, preferred_element_type=jnp.float32)

        A = r["adj"][...]                                  # (V, V) mesh adjacency
        verts = r["verts"][...]                            # (V, 3)

        # Bottleneck Linear + ReLU (fused; output feeds layer 0 directly).
        img = jnp.maximum(
            mm(r["img_raw"][...], r["bt_w"][...]) + r["bt_b"][...], 0.0)   # (V, H)

        # relu of the (virtual) concatenated layer-0 input, chunk by chunk.
        acts = {"img": img, "verts": jnp.maximum(verts, 0.0)}
        if has_vf:
            acts["vfeat"] = jnp.maximum(r["vfeat"][...], 0.0)

        vf = None
        for li in range(num_layers):
            if li == 0:
                h0 = r["l0_gc1_b0"][...]
                h1 = r["l0_gc1_b1"][...]
                sk = r["l0_skip_b"][...]
                for key in chunk_keys:                     # K-split partial matmuls
                    a = acts[key]
                    h0 = h0 + mm(a, r[f"l0_gc1_w0_{key}"][...])
                    h1 = h1 + mm(a, r[f"l0_gc1_w1_{key}"][...])
                    sk = sk + mm(a, r[f"l0_skip_w_{key}"][...])
                g1 = h0 + mm(A, h1)                        # GraphConv1 output
                skip_val = sk                              # skip projection of relu(x)
            else:
                rx = jnp.maximum(vf, 0.0)
                g1 = (mm(rx, r[f"l{li}_gc1_w0"][...]) + r[f"l{li}_gc1_b0"][...]
                      + mm(A, mm(rx, r[f"l{li}_gc1_w1"][...]) + r[f"l{li}_gc1_b1"][...]))
                skip_val = rx                              # identity skip on relu(x)
            rg1 = jnp.maximum(g1, 0.0)
            g2 = (mm(rg1, r[f"l{li}_gc2_w0"][...]) + r[f"l{li}_gc2_b0"][...]
                  + mm(A, mm(rg1, r[f"l{li}_gc2_w1"][...]) + r[f"l{li}_gc2_b1"][...]))
            vf = g2 + skip_val

        vf_out_ref[...] = vf

        # Final GraphConv (hidden -> 3) + tanh deform + vertex offset, fused.
        pre = (mm(vf, r["gf_w0"][...]) + r["gf_b0"][...]
               + mm(A, mm(vf, r["gf_w1"][...]) + r["gf_b1"][...]))
        verts_out_ref[...] = verts + jnp.tanh(pre)

    out_shape = (jax.ShapeDtypeStruct((N, V, 3), jnp.float32),
                 jax.ShapeDtypeStruct((N, V, H), jnp.float32))
    out_specs = (pl.BlockSpec((None, V, 3), lambda n: (n, 0, 0)),
                 pl.BlockSpec((None, V, H), lambda n: (n, 0, 0)))

    return pl.pallas_call(
        kernel,
        grid=(N,),
        out_shape=out_shape,
        in_specs=in_specs,
        out_specs=out_specs,
        compiler_params=pltpu.CompilerParams(
            dimension_semantics=("parallel",)),    # v7x: shard meshes over 2 TCs
    )(*args)


# ------------------------------- JAX glue ----------------------------------- #

def vert_align_jax(feats, verts):
    """PyTorch3D vert_align: bilinear, padding_mode='border', align_corners=True.

    feats: (N, C, H, W); verts: (N, V, 3) with x, y in [-1, 1]. Returns (N, V, C).
    """
    # TODO(synk): data-dependent bilinear gather kept in plain JAX (no clean
    # rectangular-tile Pallas mapping for the per-vertex (iy, ix) gather).
    N, C, H, W = feats.shape
    x = verts[..., 0]
    y = verts[..., 1]
    ix = jnp.clip((x + 1.0) * 0.5 * (W - 1), 0.0, W - 1)   # border padding
    iy = jnp.clip((y + 1.0) * 0.5 * (H - 1), 0.0, H - 1)
    ix0f = jnp.floor(ix)
    iy0f = jnp.floor(iy)
    wx1 = ix - ix0f
    wy1 = iy - iy0f
    ix0 = jnp.clip(ix0f.astype(jnp.int32), 0, W - 1)
    iy0 = jnp.clip(iy0f.astype(jnp.int32), 0, H - 1)
    ix1 = jnp.clip(ix0 + 1, 0, W - 1)
    iy1 = jnp.clip(iy0 + 1, 0, H - 1)
    bidx = jnp.arange(N)[:, None]

    def g(iyc, ixc):                      # -> (N, V, C)
        return feats[bidx, :, iyc, ixc]

    return (g(iy0, ix0) * ((1.0 - wx1) * (1.0 - wy1))[..., None]
            + g(iy0, ix1) * (wx1 * (1.0 - wy1))[..., None]
            + g(iy1, ix0) * ((1.0 - wx1) * wy1)[..., None]
            + g(iy1, ix1) * (wx1 * wy1)[..., None])


def build_mesh_adjacency(edges_packed, num_meshes, verts_per_mesh):
    """Per-mesh symmetric adjacency (N, V, V): A[n] @ f == undirected
    gather_scatter(f, edges) restricted to mesh n.  Build once per topology and
    pass into the forward (hoisted out of the per-call path)."""
    e0 = edges_packed[:, 0]
    e1 = edges_packed[:, 1]
    m = e0 // verts_per_mesh
    i = e0 % verts_per_mesh
    j = e1 % verts_per_mesh
    A = jnp.zeros((num_meshes, verts_per_mesh, verts_per_mesh), jnp.float32)
    A = A.at[m, i, j].add(1.0)
    A = A.at[m, j, i].add(1.0)
    return A


def build_dense_adjacency(edges_packed, num_verts):
    """Dense global adjacency (only used by the pure-JAX reference)."""
    A = jnp.zeros((num_verts, num_verts), jnp.float32)
    A = A.at[edges_packed[:, 0], edges_packed[:, 1]].add(1.0)
    A = A.at[edges_packed[:, 1], edges_packed[:, 0]].add(1.0)
    return A


# --------------------------- parameter creation ----------------------------- #

def _linear_params(key, din, dout, std=0.01):
    w = jax.random.normal(key, (dout, din), jnp.float32) * std
    b = jnp.zeros((1, dout), jnp.float32)
    return {"wT": w.T, "b": b}


def _gconv_params(key, din, dout):
    k0, k1 = jax.random.split(key)
    p0 = _linear_params(k0, din, dout)
    p1 = _linear_params(k1, din, dout)
    return {"w0T": p0["wT"], "b0": p0["b"], "w1T": p1["wT"], "b1": p1["b"]}


def init_mesh_refinement_params(key, img_channels, vert_feat_dim, hidden_dim,
                                num_res_graph_convs):
    keys = jax.random.split(key, 4 * num_res_graph_convs + 4)
    ki = iter(range(len(keys)))
    params = {"bottleneck": _linear_params(keys[next(ki)], sum(img_channels), hidden_dim)}
    res = []
    for i in range(num_res_graph_convs):
        din = hidden_dim + vert_feat_dim + 3 if i == 0 else hidden_dim
        layer = {
            "gc1": _gconv_params(keys[next(ki)], din, hidden_dim),
            "gc2": _gconv_params(keys[next(ki)], hidden_dim, hidden_dim),
            "skip": (_linear_params(keys[next(ki)], din, hidden_dim, std=0.05)
                     if din != hidden_dim else None),
        }
        res.append(layer)
    params["res_gconvs"] = res
    params["gconv"] = _gconv_params(keys[next(ki)], hidden_dim, 3)
    return params


# ------------------------------ forward pass -------------------------------- #

def mesh_refinement_stage_forward(params, feats_list, verts_padded, edges_packed,
                                  vert_feats=None, adj=None):
    N, V, _ = verts_padded.shape
    H = params["bottleneck"]["wT"].shape[1]
    if adj is None:   # convenience; prefer precomputing once per topology
        adj = build_mesh_adjacency(edges_packed, N, V)

    img_raw = jnp.concatenate(
        [vert_align_jax(f, verts_padded) for f in feats_list], axis=-1)   # (N, V, Csum)
    vfeat = None if vert_feats is None else vert_feats.reshape(N, V, -1)

    new_verts, vf_out = _run_stage_pallas(params, img_raw, verts_padded, adj, vfeat)
    return new_verts.reshape(N * V, 3), vf_out.reshape(N * V, H)


# --------------------------- pure-JAX reference ----------------------------- #

def _ref_gc(x, p, adj):
    return (x @ p["w0T"] + p["b0"]) + adj @ (x @ p["w1T"] + p["b1"])


def reference_forward(params, feats_list, verts_padded, edges_packed,
                      vert_feats=None):
    N, V, _ = verts_padded.shape
    verts_packed = verts_padded.reshape(N * V, 3)
    img_feats = jnp.concatenate(
        [vert_align_jax(f, verts_padded).reshape(N * V, -1) for f in feats_list],
        axis=1)
    bt = params["bottleneck"]
    img_feats = jnp.maximum(img_feats @ bt["wT"] + bt["b"], 0.0)
    vf = (jnp.concatenate([img_feats, verts_packed], axis=1) if vert_feats is None
          else jnp.concatenate([vert_feats, img_feats, verts_packed], axis=1))
    adj = build_dense_adjacency(edges_packed, N * V)
    for layer in params["res_gconvs"]:
        rx = jnp.maximum(vf, 0.0)
        h1 = _ref_gc(rx, layer["gc1"], adj)
        h2 = _ref_gc(jnp.maximum(h1, 0.0), layer["gc2"], adj)
        skip = rx if layer["skip"] is None else rx @ layer["skip"]["wT"] + layer["skip"]["b"]
        vf = h2 + skip
    pre = _ref_gc(vf, params["gconv"], adj)
    return verts_packed + jnp.tanh(pre), vf


# ---------------------------------- main ------------------------------------ #

if __name__ == "__main__":
    key = jax.random.PRNGKey(0)
    k_param, k_vert, *k_feat = jax.random.split(key, 7)

    # Module config (small, consistent with the forward pass).
    img_channels = [4, 8, 8, 16]
    spatial = [16, 8, 4, 2]
    hidden_dim = 32
    vert_feat_dim = 0
    num_res_graph_convs = 2

    # Synthetic batch of meshes: N meshes, V verts each, ring edges per mesh.
    N, V = 2, 12
    verts_padded = jax.random.uniform(k_vert, (N, V, 3), jnp.float32,
                                      minval=-1.0, maxval=1.0)
    edges = []
    for n in range(N):
        for i in range(V):
            edges.append((n * V + i, n * V + (i + 1) % V))
    edges_packed = jnp.asarray(edges, dtype=jnp.int32)  # (N*V, 2)

    feats_list = [
        jax.random.normal(k_feat[i], (N, img_channels[i], spatial[i], spatial[i]),
                          jnp.float32)
        for i in range(4)
    ]

    params = init_mesh_refinement_params(k_param, img_channels, vert_feat_dim,
                                         hidden_dim, num_res_graph_convs)

    # Mesh topology is static: build the block-diagonal adjacency once, reuse it.
    adj = build_mesh_adjacency(edges_packed, N, V)

    forward = jax.jit(mesh_refinement_stage_forward)
    new_verts, vert_feats_out = forward(params, feats_list, verts_padded,
                                        edges_packed, adj=adj)
    jax.block_until_ready(new_verts)
    jax.block_until_ready(vert_feats_out)

    ref_verts, ref_vf = reference_forward(params, feats_list, verts_padded,
                                          edges_packed, vert_feats=None)
    assert new_verts.shape == (N * V, 3)
    assert vert_feats_out.shape == (N * V, hidden_dim)
    assert jnp.allclose(new_verts, ref_verts, atol=5e-4, rtol=5e-4)
    assert jnp.allclose(vert_feats_out, ref_vf, atol=5e-4, rtol=5e-4)

    print("KERNEL_OK")
</pallas_src>

<mosaic_0001>
module attributes {stable_mosaic.version = 11 : i64} {
  func.func @kernel(%arg0: i32, %arg1: memref<1x12x36xf32, #tpu.memory_space<vmem>>, %arg2: memref<1x12x3xf32, #tpu.memory_space<vmem>>, %arg3: memref<1x12x12xf32, #tpu.memory_space<vmem>>, %arg4: memref<36x32xf32, #tpu.memory_space<vmem>>, %arg5: memref<1x32xf32, #tpu.memory_space<vmem>>, %arg6: memref<32x32xf32, #tpu.memory_space<vmem>>, %arg7: memref<32x32xf32, #tpu.memory_space<vmem>>, %arg8: memref<32x32xf32, #tpu.memory_space<vmem>>, %arg9: memref<3x32xf32, #tpu.memory_space<vmem>>, %arg10: memref<3x32xf32, #tpu.memory_space<vmem>>, %arg11: memref<3x32xf32, #tpu.memory_space<vmem>>, %arg12: memref<1x32xf32, #tpu.memory_space<vmem>>, %arg13: memref<1x32xf32, #tpu.memory_space<vmem>>, %arg14: memref<1x32xf32, #tpu.memory_space<vmem>>, %arg15: memref<32x32xf32, #tpu.memory_space<vmem>>, %arg16: memref<1x32xf32, #tpu.memory_space<vmem>>, %arg17: memref<32x32xf32, #tpu.memory_space<vmem>>, %arg18: memref<1x32xf32, #tpu.memory_space<vmem>>, %arg19: memref<32x32xf32, #tpu.memory_space<vmem>>, %arg20: memref<1x32xf32, #tpu.memory_space<vmem>>, %arg21: memref<32x32xf32, #tpu.memory_space<vmem>>, %arg22: memref<1x32xf32, #tpu.memory_space<vmem>>, %arg23: memref<32x32xf32, #tpu.memory_space<vmem>>, %arg24: memref<1x32xf32, #tpu.memory_space<vmem>>, %arg25: memref<32x32xf32, #tpu.memory_space<vmem>>, %arg26: memref<1x32xf32, #tpu.memory_space<vmem>>, %arg27: memref<32x3xf32, #tpu.memory_space<vmem>>, %arg28: memref<1x3xf32, #tpu.memory_space<vmem>>, %arg29: memref<32x3xf32, #tpu.memory_space<vmem>>, %arg30: memref<1x3xf32, #tpu.memory_space<vmem>>, %arg31: memref<1x12x3xf32, #tpu.memory_space<vmem>>, %arg32: memref<1x12x32xf32, #tpu.memory_space<vmem>>) attributes {dimension_semantics = [#tpu.dimension_semantics<parallel>], iteration_bounds = array<i64: 2>, scalar_prefetch = 0 : i64, scratch_operands = 0 : i64, tpu.core_type = #tpu.core_type<tc>, window_params = [{transform_indices = @transform_0, window_bounds = array<i64: 1, 12, 36>}, {transform_indices = @transform_1, window_bounds = array<i64: 1, 12, 3>}, {transform_indices = @transform_2, window_bounds = array<i64: 1, 12, 12>}, {pipeline_mode = #tpu.pipeline_mode<synchronous>, transform_indices = @transform_3, window_bounds = array<i64: 36, 32>}, {pipeline_mode = #tpu.pipeline_mode<synchronous>, transform_indices = @transform_4, window_bounds = array<i64: 1, 32>}, {pipeline_mode = #tpu.pipeline_mode<synchronous>, transform_indices = @transform_5, window_bounds = array<i64: 32, 32>}, {pipeline_mode = #tpu.pipeline_mode<synchronous>, transform_indices = @transform_6, window_bounds = array<i64: 32, 32>}, {pipeline_mode = #tpu.pipeline_mode<synchronous>, transform_indices = @transform_7, window_bounds = array<i64: 32, 32>}, {pipeline_mode = #tpu.pipeline_mode<synchronous>, transform_indices = @transform_8, window_bounds = array<i64: 3, 32>}, {pipeline_mode = #tpu.pipeline_mode<synchronous>, transform_indices = @transform_9, window_bounds = array<i64: 3, 32>}, {pipeline_mode = #tpu.pipeline_mode<synchronous>, transform_indices = @transform_10, window_bounds = array<i64: 3, 32>}, {pipeline_mode = #tpu.pipeline_mode<synchronous>, transform_indices = @transform_11, window_bounds = array<i64: 1, 32>}, {pipeline_mode = #tpu.pipeline_mode<synchronous>, transform_indices = @transform_12, window_bounds = array<i64: 1, 32>}, {pipeline_mode = #tpu.pipeline_mode<synchronous>, transform_indices = @transform_13, window_bounds = array<i64: 1, 32>}, {pipeline_mode = #tpu.pipeline_mode<synchronous>, transform_indices = @transform_14, window_bounds = array<i64: 32, 32>}, {pipeline_mode = #tpu.pipeline_mode<synchronous>, transform_indices = @transform_15, window_bounds = array<i64: 1, 32>}, {pipeline_mode = #tpu.pipeline_mode<synchronous>, transform_indices = @transform_16, window_bounds = array<i64: 32, 32>}, {pipeline_mode = #tpu.pipeline_mode<synchronous>, transform_indices = @transform_17, window_bounds = array<i64: 1, 32>}, {pipeline_mode = #tpu.pipeline_mode<synchronous>, transform_indices = @transform_18, window_bounds = array<i64: 32, 32>}, {pipeline_mode = #tpu.pipeline_mode<synchronous>, transform_indices = @transform_19, window_bounds = array<i64: 1, 32>}, {pipeline_mode = #tpu.pipeline_mode<synchronous>, transform_indices = @transform_20, window_bounds = array<i64: 32, 32>}, {pipeline_mode = #tpu.pipeline_mode<synchronous>, transform_indices = @transform_21, window_bounds = array<i64: 1, 32>}, {pipeline_mode = #tpu.pipeline_mode<synchronous>, transform_indices = @transform_22, window_bounds = array<i64: 32, 32>}, {pipeline_mode = #tpu.pipeline_mode<synchronous>, transform_indices = @transform_23, window_bounds = array<i64: 1, 32>}, {pipeline_mode = #tpu.pipeline_mode<synchronous>, transform_indices = @transform_24, window_bounds = array<i64: 32, 32>}, {pipeline_mode = #tpu.pipeline_mode<synchronous>, transform_indices = @transform_25, window_bounds = array<i64: 1, 32>}, {pipeline_mode = #tpu.pipeline_mode<synchronous>, transform_indices = @transform_26, window_bounds = array<i64: 32, 3>}, {pipeline_mode = #tpu.pipeline_mode<synchronous>, transform_indices = @transform_27, window_bounds = array<i64: 1, 3>}, {pipeline_mode = #tpu.pipeline_mode<synchronous>, transform_indices = @transform_28, window_bounds = array<i64: 32, 3>}, {pipeline_mode = #tpu.pipeline_mode<synchronous>, transform_indices = @transform_29, window_bounds = array<i64: 1, 3>}, {transform_indices = @transform_30, window_bounds = array<i64: 1, 12, 3>}, {transform_indices = @transform_31, window_bounds = array<i64: 1, 12, 32>}]} {
    %c0 = arith.constant 0 : index
    %c0_0 = arith.constant 0 : index
    %c0_1 = arith.constant 0 : index
    %0 = vector.load %arg3[%c0, %c0_0, %c0_1] : memref<1x12x12xf32, #tpu.memory_space<vmem>>, vector<1x12x12xf32>
    %1 = vector.shape_cast %0 : vector<1x12x12xf32> to vector<12x12xf32>
    %c0_2 = arith.constant 0 : index
    %c0_3 = arith.constant 0 : index
    %c0_4 = arith.constant 0 : index
    %2 = vector.load %arg2[%c0_2, %c0_3, %c0_4] : memref<1x12x3xf32, #tpu.memory_space<vmem>>, vector<1x12x3xf32>
    %3 = vector.shape_cast %2 : vector<1x12x3xf32> to vector<12x3xf32>
    %c0_5 = arith.constant 0 : index
    %c0_6 = arith.constant 0 : index
    %c0_7 = arith.constant 0 : index
    %4 = vector.load %arg1[%c0_5, %c0_6, %c0_7] : memref<1x12x36xf32, #tpu.memory_space<vmem>>, vector<1x12x36xf32>
    %5 = vector.shape_cast %4 : vector<1x12x36xf32> to vector<12x36xf32>
    %c0_8 = arith.constant 0 : index
    %c0_9 = arith.constant 0 : index
    %6 = vector.load %arg4[%c0_8, %c0_9] : memref<36x32xf32, #tpu.memory_space<vmem>>, vector<36x32xf32>
    %cst = arith.constant dense<0.000000e+00> : vector<12x32xf32>
    %7 = tpu.matmul %5, %6, %cst {dimension_numbers = #tpu.dot_dimension_numbers<[1], [0], [0], [1], [0, 0, 1, 1], [], []>} : vector<12x36xf32>, vector<36x32xf32>, vector<12x32xf32> -> vector<12x32xf32>
    %c0_10 = arith.constant 0 : index
    %c0_11 = arith.constant 0 : index
    %8 = vector.load %arg5[%c0_10, %c0_11] : memref<1x32xf32, #tpu.memory_space<vmem>>, vector<1x32xf32>
    %9 = vector.broadcast %8 : vector<1x32xf32> to vector<12x32xf32>
    %10 = arith.addf %7, %9 : vector<12x32xf32>
    %cst_12 = arith.constant 0.000000e+00 : f32
    %11 = vector.broadcast %cst_12 : f32 to vector<12x32xf32>
    %12 = arith.maximumf %10, %11 : vector<12x32xf32>
    %cst_13 = arith.constant 0.000000e+00 : f32
    %13 = vector.broadcast %cst_13 : f32 to vector<12x3xf32>
    %14 = arith.maximumf %3, %13 : vector<12x3xf32>
    %c0_14 = arith.constant 0 : index
    %c0_15 = arith.constant 0 : index
    %15 = vector.load %arg12[%c0_14, %c0_15] : memref<1x32xf32, #tpu.memory_space<vmem>>, vector<1x32xf32>
    %c0_16 = arith.constant 0 : index
    %c0_17 = arith.constant 0 : index
    %16 = vector.load %arg13[%c0_16, %c0_17] : memref<1x32xf32, #tpu.memory_space<vmem>>, vector<1x32xf32>
    %c0_18 = arith.constant 0 : index
    %c0_19 = arith.constant 0 : index
    %17 = vector.load %arg14[%c0_18, %c0_19] : memref<1x32xf32, #tpu.memory_space<vmem>>, vector<1x32xf32>
    %c0_20 = arith.constant 0 : index
    %c0_21 = arith.constant 0 : index
    %18 = vector.load %arg6[%c0_20, %c0_21] : memref<32x32xf32, #tpu.memory_space<vmem>>, vector<32x32xf32>
    %cst_22 = arith.constant dense<0.000000e+00> : vector<12x32xf32>
    %19 = tpu.matmul %12, %18, %cst_22 {dimension_numbers = #tpu.dot_dimension_numbers<[1], [0], [0], [1], [0, 0, 1, 1], [], []>} : vector<12x32xf32>, vector<32x32xf32>, vector<12x32xf32> -> vector<12x32xf32>
    %20 = vector.broadcast %15 : vector<1x32xf32> to vector<12x32xf32>
    %21 = arith.addf %20, %19 : vector<12x32xf32>
    %c0_23 = arith.constant 0 : index
    %c0_24 = arith.constant 0 : index
    %22 = vector.load %arg7[%c0_23, %c0_24] : memref<32x32xf32, #tpu.memory_space<vmem>>, vector<32x32xf32>
    %cst_25 = arith.constant dense<0.000000e+00> : vector<12x32xf32>
    %23 = tpu.matmul %12, %22, %cst_25 {dimension_numbers = #tpu.dot_dimension_numbers<[1], [0], [0], [1], [0, 0, 1, 1], [], []>} : vector<12x32xf32>, vector<32x32xf32>, vector<12x32xf32> -> vector<12x32xf32>
    %24 = vector.broadcast %16 : vector<1x32xf32> to vector<12x32xf32>
    %25 = arith.addf %24, %23 : vector<12x32xf32>
    %c0_26 = arith.constant 0 : index
    %c0_27 = arith.constant 0 : index
    %26 = vector.load %arg8[%c0_26, %c0_27] : memref<32x32xf32, #tpu.memory_space<vmem>>, vector<32x32xf32>
    %cst_28 = arith.constant dense<0.000000e+00> : vector<12x32xf32>
    %27 = tpu.matmul %12, %26, %cst_28 {dimension_numbers = #tpu.dot_dimension_numbers<[1], [0], [0], [1], [0, 0, 1, 1], [], []>} : vector<12x32xf32>, vector<32x32xf32>, vector<12x32xf32> -> vector<12x32xf32>
    %28 = vector.broadcast %17 : vector<1x32xf32> to vector<12x32xf32>
    %29 = arith.addf %28, %27 : vector<12x32xf32>
    %c0_29 = arith.constant 0 : index
    %c0_30 = arith.constant 0 : index
    %30 = vector.load %arg9[%c0_29, %c0_30] : memref<3x32xf32, #tpu.memory_space<vmem>>, vector<3x32xf32>
    %cst_31 = arith.constant dense<0.000000e+00> : vector<12x32xf32>
    %31 = tpu.matmul %14, %30, %cst_31 {dimension_numbers = #tpu.dot_dimension_numbers<[1], [0], [0], [1], [0, 0, 1, 1], [], []>} : vector<12x3xf32>, vector<3x32xf32>, vector<12x32xf32> -> vector<12x32xf32>
    %32 = arith.addf %21, %31 : vector<12x32xf32>
    %c0_32 = arith.constant 0 : index
    %c0_33 = arith.constant 0 : index
    %33 = vector.load %arg10[%c0_32, %c0_33] : memref<3x32xf32, #tpu.memory_space<vmem>>, vector<3x32xf32>
    %cst_34 = arith.constant dense<0.000000e+00> : vector<12x32xf32>
    %34 = tpu.matmul %14, %33, %cst_34 {dimension_numbers = #tpu.dot_dimension_numbers<[1], [0], [0], [1], [0, 0, 1, 1], [], []>} : vector<12x3xf32>, vector<3x32xf32>, vector<12x32xf32> -> vector<12x32xf32>
    %35 = arith.addf %25, %34 : vector<12x32xf32>
    %c0_35 = arith.constant 0 : index
    %c0_36 = arith.constant 0 : index
    %36 = vector.load %arg11[%c0_35, %c0_36] : memref<3x32xf32, #tpu.memory_space<vmem>>, vector<3x32xf32>
    %cst_37 = arith.constant dense<0.000000e+00> : vector<12x32xf32>
    %37 = tpu.matmul %14, %36, %cst_37 {dimension_numbers = #tpu.dot_dimension_numbers<[1], [0], [0], [1], [0, 0, 1, 1], [], []>} : vector<12x3xf32>, vector<3x32xf32>, vector<12x32xf32> -> vector<12x32xf32>
    %38 = arith.addf %29, %37 : vector<12x32xf32>
    %cst_38 = arith.constant dense<0.000000e+00> : vector<12x32xf32>
    %39 = tpu.matmul %1, %35, %cst_38 {dimension_numbers = #tpu.dot_dimension_numbers<[1], [0], [0], [1], [0, 0, 1, 1], [], []>} : vector<12x12xf32>, vector<12x32xf32>, vector<12x32xf32> -> vector<12x32xf32>
    %40 = arith.addf %32, %39 : vector<12x32xf32>
    %cst_39 = arith.constant 0.000000e+00 : f32
    %41 = vector.broadcast %cst_39 : f32 to vector<12x32xf32>
    %42 = arith.maximumf %40, %41 : vector<12x32xf32>
    %c0_40 = arith.constant 0 : index
    %c0_41 = arith.constant 0 : index
    %43 = vector.load %arg15[%c0_40, %c0_41] : memref<32x32xf32, #tpu.memory_space<vmem>>, vector<32x32xf32>
    %cst_42 = arith.constant dense<0.000000e+00> : vector<12x32xf32>
    %44 = tpu.matmul %42, %43, %cst_42 {dimension_numbers = #tpu.dot_dimension_numbers<[1], [0], [0], [1], [0, 0, 1, 1], [], []>} : vector<12x32xf32>, vector<32x32xf32>, vector<12x32xf32> -> vector<12x32xf32>
    %c0_43 = arith.constant 0 : index
    %c0_44 = arith.constant 0 : index
    %45 = vector.load %arg16[%c0_43, %c0_44] : memref<1x32xf32, #tpu.memory_space<vmem>>, vector<1x32xf32>
    %46 = vector.broadcast %45 : vector<1x32xf32> to vector<12x32xf32>
    %47 = arith.addf %44, %46 : vector<12x32xf32>
    %c0_45 = arith.constant 0 : index
    %c0_46 = arith.constant 0 : index
    %48 = vector.load %arg17[%c0_45, %c0_46] : memref<32x32xf32, #tpu.memory_space<vmem>>, vector<32x32xf32>
    %cst_47 = arith.constant dense<0.000000e+00> : vector<12x32xf32>
    %49 = tpu.matmul %42, %48, %cst_47 {dimension_numbers = #tpu.dot_dimension_numbers<[1], [0], [0], [1], [0, 0, 1, 1], [], []>} : vector<12x32xf32>, vector<32x32xf32>, vector<12x32xf32> -> vector<12x32xf32>
    %c0_48 = arith.constant 0 : index
    %c0_49 = arith.constant 0 : index
    %50 = vector.load %arg18[%c0_48, %c0_49] : memref<1x32xf32, #tpu.memory_space<vmem>>, vector<1x32xf32>
    %51 = vector.broadcast %50 : vector<1x32xf32> to vector<12x32xf32>
    %52 = arith.addf %49, %51 : vector<12x32xf32>
    %cst_50 = arith.constant dense<0.000000e+00> : vector<12x32xf32>
    %53 = tpu.matmul %1, %52, %cst_50 {dimension_numbers = #tpu.dot_dimension_numbers<[1], [0], [0], [1], [0, 0, 1, 1], [], []>} : vector<12x12xf32>, vector<12x32xf32>, vector<12x32xf32> -> vector<12x32xf32>
    %54 = arith.addf %47, %53 : vector<12x32xf32>
    %55 = arith.addf %54, %38 : vector<12x32xf32>
    %cst_51 = arith.constant 0.000000e+00 : f32
    %56 = vector.broadcast %cst_51 : f32 to vector<12x32xf32>
    %57 = arith.maximumf %55, %56 : vector<12x32xf32>
    %c0_52 = arith.constant 0 : index
    %c0_53 = arith.constant 0 : index
    %58 = vector.load %arg19[%c0_52, %c0_53] : memref<32x32xf32, #tpu.memory_space<vmem>>, vector<32x32xf32>
    %cst_54 = arith.constant dense<0.000000e+00> : vector<12x32xf32>
    %59 = tpu.matmul %57, %58, %cst_54 {dimension_numbers = #tpu.dot_dimension_numbers<[1], [0], [0], [1], [0, 0, 1, 1], [], []>} : vector<12x32xf32>, vector<32x32xf32>, vector<12x32xf32> -> vector<12x32xf32>
    %c0_55 = arith.constant 0 : index
    %c0_56 = arith.constant 0 : index
    %60 = vector.load %arg20[%c0_55, %c0_56] : memref<1x32xf32, #tpu.memory_space<vmem>>, vector<1x32xf32>
    %61 = vector.broadcast %60 : vector<1x32xf32> to vector<12x32xf32>
    %62 = arith.addf %59, %61 : vector<12x32xf32>
    %c0_57 = arith.constant 0 : index
    %c0_58 = arith.constant 0 : index
    %63 = vector.load %arg21[%c0_57, %c0_58] : memref<32x32xf32, #tpu.memory_space<vmem>>, vector<32x32xf32>
    %cst_59 = arith.constant dense<0.000000e+00> : vector<12x32xf32>
    %64 = tpu.matmul %57, %63, %cst_59 {dimension_numbers = #tpu.dot_dimension_numbers<[1], [0], [0], [1], [0, 0, 1, 1], [], []>} : vector<12x32xf32>, vector<32x32xf32>, vector<12x32xf32> -> vector<12x32xf32>
    %c0_60 = arith.constant 0 : index
    %c0_61 = arith.constant 0 : index
    %65 = vector.load %arg22[%c0_60, %c0_61] : memref<1x32xf32, #tpu.memory_space<vmem>>, vector<1x32xf32>
    %66 = vector.broadcast %65 : vector<1x32xf32> to vector<12x32xf32>
    %67 = arith.addf %64, %66 : vector<12x32xf32>
    %cst_62 = arith.constant dense<0.000000e+00> : vector<12x32xf32>
    %68 = tpu.matmul %1, %67, %cst_62 {dimension_numbers = #tpu.dot_dimension_numbers<[1], [0], [0], [1], [0, 0, 1, 1], [], []>} : vector<12x12xf32>, vector<12x32xf32>, vector<12x32xf32> -> vector<12x32xf32>
    %69 = arith.addf %62, %68 : vector<12x32xf32>
    %cst_63 = arith.constant 0.000000e+00 : f32
    %70 = vector.broadcast %cst_63 : f32 to vector<12x32xf32>
    %71 = arith.maximumf %69, %70 : vector<12x32xf32>
    %c0_64 = arith.constant 0 : index
    %c0_65 = arith.constant 0 : index
    %72 = vector.load %arg23[%c0_64, %c0_65] : memref<32x32xf32, #tpu.memory_space<vmem>>, vector<32x32xf32>
    %cst_66 = arith.constant dense<0.000000e+00> : vector<12x32xf32>
    %73 = tpu.matmul %71, %72, %cst_66 {dimension_numbers = #tpu.dot_dimension_numbers<[1], [0], [0], [1], [0, 0, 1, 1], [], []>} : vector<12x32xf32>, vector<32x32xf32>, vector<12x32xf32> -> vector<12x32xf32>
    %c0_67 = arith.constant 0 : index
    %c0_68 = arith.constant 0 : index
    %74 = vector.load %arg24[%c0_67, %c0_68] : memref<1x32xf32, #tpu.memory_space<vmem>>, vector<1x32xf32>
    %75 = vector.broadcast %74 : vector<1x32xf32> to vector<12x32xf32>
    %76 = arith.addf %73, %75 : vector<12x32xf32>
    %c0_69 = arith.constant 0 : index
    %c0_70 = arith.constant 0 : index
    %77 = vector.load %arg25[%c0_69, %c0_70] : memref<32x32xf32, #tpu.memory_space<vmem>>, vector<32x32xf32>
    %cst_71 = arith.constant dense<0.000000e+00> : vector<12x32xf32>
    %78 = tpu.matmul %71, %77, %cst_71 {dimension_numbers = #tpu.dot_dimension_numbers<[1], [0], [0], [1], [0, 0, 1, 1], [], []>} : vector<12x32xf32>, vector<32x32xf32>, vector<12x32xf32> -> vector<12x32xf32>
    %c0_72 = arith.constant 0 : index
    %c0_73 = arith.constant 0 : index
    %79 = vector.load %arg26[%c0_72, %c0_73] : memref<1x32xf32, #tpu.memory_space<vmem>>, vector<1x32xf32>
    %80 = vector.broadcast %79 : vector<1x32xf32> to vector<12x32xf32>
    %81 = arith.addf %78, %80 : vector<12x32xf32>
    %cst_74 = arith.constant dense<0.000000e+00> : vector<12x32xf32>
    %82 = tpu.matmul %1, %81, %cst_74 {dimension_numbers = #tpu.dot_dimension_numbers<[1], [0], [0], [1], [0, 0, 1, 1], [], []>} : vector<12x12xf32>, vector<12x32xf32>, vector<12x32xf32> -> vector<12x32xf32>
    %83 = arith.addf %76, %82 : vector<12x32xf32>
    %84 = arith.addf %83, %57 : vector<12x32xf32>
    %c0_75 = arith.constant 0 : index
    %c0_76 = arith.constant 0 : index
    %c0_77 = arith.constant 0 : index
    %85 = vector.load %arg32[%c0_75, %c0_76, %c0_77] : memref<1x12x32xf32, #tpu.memory_space<vmem>>, vector<1x12x32xf32>
    %86 = vector.shape_cast %85 : vector<1x12x32xf32> to vector<12x32xf32>
    %87 = vector.shape_cast %84 : vector<12x32xf32> to vector<1x12x32xf32>
    tpu.vector_store %arg32[%c0_75, %c0_76, %c0_77], %87 {strides = array<i32>} : memref<1x12x32xf32, #tpu.memory_space<vmem>>, vector<1x12x32xf32>,
    %c0_78 = arith.constant 0 : index
    %c0_79 = arith.constant 0 : index
    %88 = vector.load %arg27[%c0_78, %c0_79] : memref<32x3xf32, #tpu.memory_space<vmem>>, vector<32x3xf32>
    %cst_80 = arith.constant dense<0.000000e+00> : vector<12x3xf32>
    %89 = tpu.matmul %84, %88, %cst_80 {dimension_numbers = #tpu.dot_dimension_numbers<[1], [0], [0], [1], [0, 0, 1, 1], [], []>} : vector<12x32xf32>, vector<32x3xf32>, vector<12x3xf32> -> vector<12x3xf32>
    %c0_81 = arith.constant 0 : index
    %c0_82 = arith.constant 0 : index
    %90 = vector.load %arg28[%c0_81, %c0_82] : memref<1x3xf32, #tpu.memory_space<vmem>>, vector<1x3xf32>
    %91 = vector.broadcast %90 : vector<1x3xf32> to vector<12x3xf32>
    %92 = arith.addf %89, %91 : vector<12x3xf32>
    %c0_83 = arith.constant 0 : index
    %c0_84 = arith.constant 0 : index
    %93 = vector.load %arg29[%c0_83, %c0_84] : memref<32x3xf32, #tpu.memory_space<vmem>>, vector<32x3xf32>
    %cst_85 = arith.constant dense<0.000000e+00> : vector<12x3xf32>
    %94 = tpu.matmul %84, %93, %cst_85 {dimension_numbers = #tpu.dot_dimension_numbers<[1], [0], [0], [1], [0, 0, 1, 1], [], []>} : vector<12x32xf32>, vector<32x3xf32>, vector<12x3xf32> -> vector<12x3xf32>
    %c0_86 = arith.constant 0 : index
    %c0_87 = arith.constant 0 : index
    %95 = vector.load %arg30[%c0_86, %c0_87] : memref<1x3xf32, #tpu.memory_space<vmem>>, vector<1x3xf32>
    %96 = vector.broadcast %95 : vector<1x3xf32> to vector<12x3xf32>
    %97 = arith.addf %94, %96 : vector<12x3xf32>
    %cst_88 = arith.constant dense<0.000000e+00> : vector<12x3xf32>
    %98 = tpu.matmul %1, %97, %cst_88 {dimension_numbers = #tpu.dot_dimension_numbers<[1], [0], [0], [1], [0, 0, 1, 1], [], []>} : vector<12x12xf32>, vector<12x3xf32>, vector<12x3xf32> -> vector<12x3xf32>
    %99 = arith.addf %92, %98 : vector<12x3xf32>
    %100 = math.tanh %99 : vector<12x3xf32>
    %101 = arith.addf %3, %100 : vector<12x3xf32>
    %c0_89 = arith.constant 0 : index
    %c0_90 = arith.constant 0 : index
    %c0_91 = arith.constant 0 : index
    %102 = vector.load %arg31[%c0_89, %c0_90, %c0_91] : memref<1x12x3xf32, #tpu.memory_space<vmem>>, vector<1x12x3xf32>
    %103 = vector.shape_cast %102 : vector<1x12x3xf32> to vector<12x3xf32>
    %104 = vector.shape_cast %101 : vector<12x3xf32> to vector<1x12x3xf32>
    tpu.vector_store %arg31[%c0_89, %c0_90, %c0_91], %104 {strides = array<i32>} : memref<1x12x3xf32, #tpu.memory_space<vmem>>, vector<1x12x3xf32>,
    return
  }
  func.func @transform_0(%arg0: i32) -> (i32, i32, i32) {
    %c0_i32 = arith.constant 0 : i32
    %c0_i32_0 = arith.constant 0 : i32
    %c0_i32_1 = arith.constant 0 : i32
    return %arg0, %c0_i32, %c0_i32_0 : i32, i32, i32
  }
  func.func @transform_1(%arg0: i32) -> (i32, i32, i32) {
    %c0_i32 = arith.constant 0 : i32
    %c0_i32_0 = arith.constant 0 : i32
    %c0_i32_1 = arith.constant 0 : i32
    return %arg0, %c0_i32, %c0_i32_0 : i32, i32, i32
  }
  func.func @transform_2(%arg0: i32) -> (i32, i32, i32) {
    %c0_i32 = arith.constant 0 : i32
    %c0_i32_0 = arith.constant 0 : i32
    %c0_i32_1 = arith.constant 0 : i32
    return %arg0, %c0_i32, %c0_i32_0 : i32, i32, i32
  }
  func.func @transform_3(%arg0: i32) -> (i32, i32) {
    %c0_i32 = arith.constant 0 : i32
    %c0_i32_0 = arith.constant 0 : i32
    %c0_i32_1 = arith.constant 0 : i32
    return %c0_i32, %c0_i32_0 : i32, i32
  }
  func.func @transform_4(%arg0: i32) -> (i32, i32) {
    %c0_i32 = arith.constant 0 : i32
    %c0_i32_0 = arith.constant 0 : i32
    %c0_i32_1 = arith.constant 0 : i32
    return %c0_i32, %c0_i32_0 : i32, i32
  }
  func.func @transform_5(%arg0: i32) -> (i32, i32) {
    %c0_i32 = arith.constant 0 : i32
    %c0_i32_0 = arith.constant 0 : i32
    %c0_i32_1 = arith.constant 0 : i32
    return %c0_i32, %c0_i32_0 : i32, i32
  }
  func.func @transform_6(%arg0: i32) -> (i32, i32) {
    %c0_i32 = arith.constant 0 : i32
    %c0_i32_0 = arith.constant 0 : i32
    %c0_i32_1 = arith.constant 0 : i32
    return %c0_i32, %c0_i32_0 : i32, i32
  }
  func.func @transform_7(%arg0: i32) -> (i32, i32) {
    %c0_i32 = arith.constant 0 : i32
    %c0_i32_0 = arith.constant 0 : i32
    %c0_i32_1 = arith.constant 0 : i32
    return %c0_i32, %c0_i32_0 : i32, i32
  }
  func.func @transform_8(%arg0: i32) -> (i32, i32) {
    %c0_i32 = arith.constant 0 : i32
    %c0_i32_0 = arith.constant 0 : i32
    %c0_i32_1 = arith.constant 0 : i32
    return %c0_i32, %c0_i32_0 : i32, i32
  }
  func.func @transform_9(%arg0: i32) -> (i32, i32) {
    %c0_i32 = arith.constant 0 : i32
    %c0_i32_0 = arith.constant 0 : i32
    %c0_i32_1 = arith.constant 0 : i32
    return %c0_i32, %c0_i32_0 : i32, i32
  }
  func.func @transform_10(%arg0: i32) -> (i32, i32) {
    %c0_i32 = arith.constant 0 : i32
    %c0_i32_0 = arith.constant 0 : i32
    %c0_i32_1 = arith.constant 0 : i32
    return %c0_i32, %c0_i32_0 : i32, i32
  }
  func.func @transform_11(%arg0: i32) -> (i32, i32) {
    %c0_i32 = arith.constant 0 : i32
    %c0_i32_0 = arith.constant 0 : i32
    %c0_i32_1 = arith.constant 0 : i32
    return %c0_i32, %c0_i32_0 : i32, i32
  }
  func.func @transform_12(%arg0: i32) -> (i32, i32) {
    %c0_i32 = arith.constant 0 : i32
    %c0_i32_0 = arith.constant 0 : i32
    %c0_i32_1 = arith.constant 0 : i32
    return %c0_i32, %c0_i32_0 : i32, i32
  }
  func.func @transform_13(%arg0: i32) -> (i32, i32) {
    %c0_i32 = arith.constant 0 : i32
    %c0_i32_0 = arith.constant 0 : i32
    %c0_i32_1 = arith.constant 0 : i32
    return %c0_i32, %c0_i32_0 : i32, i32
  }
  func.func @transform_14(%arg0: i32) -> (i32, i32) {
    %c0_i32 = arith.constant 0 : i32
    %c0_i32_0 = arith.constant 0 : i32
    %c0_i32_1 = arith.constant 0 : i32
    return %c0_i32, %c0_i32_0 : i32, i32
  }
  func.func @transform_15(%arg0: i32) -> (i32, i32) {
    %c0_i32 = arith.constant 0 : i32
    %c0_i32_0 = arith.constant 0 : i32
    %c0_i32_1 = arith.constant 0 : i32
    return %c0_i32, %c0_i32_0 : i32, i32
  }
  func.func @transform_16(%arg0: i32) -> (i32, i32) {
    %c0_i32 = arith.constant 0 : i32
    %c0_i32_0 = arith.constant 0 : i32
    %c0_i32_1 = arith.constant 0 : i32
    return %c0_i32, %c0_i32_0 : i32, i32
  }
  func.func @transform_17(%arg0: i32) -> (i32, i32) {
    %c0_i32 = arith.constant 0 : i32
    %c0_i32_0 = arith.constant 0 : i32
    %c0_i32_1 = arith.constant 0 : i32
    return %c0_i32, %c0_i32_0 : i32, i32
  }
  func.func @transform_18(%arg0: i32) -> (i32, i32) {
    %c0_i32 = arith.constant 0 : i32
    %c0_i32_0 = arith.constant 0 : i32
    %c0_i32_1 = arith.constant 0 : i32
    return %c0_i32, %c0_i32_0 : i32, i32
  }
  func.func @transform_19(%arg0: i32) -> (i32, i32) {
    %c0_i32 = arith.constant 0 : i32
    %c0_i32_0 = arith.constant 0 : i32
    %c0_i32_1 = arith.constant 0 : i32
    return %c0_i32, %c0_i32_0 : i32, i32
  }
  func.func @transform_20(%arg0: i32) -> (i32, i32) {
    %c0_i32 = arith.constant 0 : i32
    %c0_i32_0 = arith.constant 0 : i32
    %c0_i32_1 = arith.constant 0 : i32
    return %c0_i32, %c0_i32_0 : i32, i32
  }
  func.func @transform_21(%arg0: i32) -> (i32, i32) {
    %c0_i32 = arith.constant 0 : i32
    %c0_i32_0 = arith.constant 0 : i32
    %c0_i32_1 = arith.constant 0 : i32
    return %c0_i32, %c0_i32_0 : i32, i32
  }
  func.func @transform_22(%arg0: i32) -> (i32, i32) {
    %c0_i32 = arith.constant 0 : i32
    %c0_i32_0 = arith.constant 0 : i32
    %c0_i32_1 = arith.constant 0 : i32
    return %c0_i32, %c0_i32_0 : i32, i32
  }
  func.func @transform_23(%arg0: i32) -> (i32, i32) {
    %c0_i32 = arith.constant 0 : i32
    %c0_i32_0 = arith.constant 0 : i32
    %c0_i32_1 = arith.constant 0 : i32
    return %c0_i32, %c0_i32_0 : i32, i32
  }
  func.func @transform_24(%arg0: i32) -> (i32, i32) {
    %c0_i32 = arith.constant 0 : i32
    %c0_i32_0 = arith.constant 0 : i32
    %c0_i32_1 = arith.constant 0 : i32
    return %c0_i32, %c0_i32_0 : i32, i32
  }
  func.func @transform_25(%arg0: i32) -> (i32, i32) {
    %c0_i32 = arith.constant 0 : i32
    %c0_i32_0 = arith.constant 0 : i32
    %c0_i32_1 = arith.constant 0 : i32
    return %c0_i32, %c0_i32_0 : i32, i32
  }
  func.func @transform_26(%arg0: i32) -> (i32, i32) {
    %c0_i32 = arith.constant 0 : i32
    %c0_i32_0 = arith.constant 0 : i32
    %c0_i32_1 = arith.constant 0 : i32
    return %c0_i32, %c0_i32_0 : i32, i32
  }
  func.func @transform_27(%arg0: i32) -> (i32, i32) {
    %c0_i32 = arith.constant 0 : i32
    %c0_i32_0 = arith.constant 0 : i32
    %c0_i32_1 = arith.constant 0 : i32
    return %c0_i32, %c0_i32_0 : i32, i32
  }
  func.func @transform_28(%arg0: i32) -> (i32, i32) {
    %c0_i32 = arith.constant 0 : i32
    %c0_i32_0 = arith.constant 0 : i32
    %c0_i32_1 = arith.constant 0 : i32
    return %c0_i32, %c0_i32_0 : i32, i32
  }
  func.func @transform_29(%arg0: i32) -> (i32, i32) {
    %c0_i32 = arith.constant 0 : i32
    %c0_i32_0 = arith.constant 0 : i32
    %c0_i32_1 = arith.constant 0 : i32
    return %c0_i32, %c0_i32_0 : i32, i32
  }
  func.func @transform_30(%arg0: i32) -> (i32, i32, i32) {
    %c0_i32 = arith.constant 0 : i32
    %c0_i32_0 = arith.constant 0 : i32
    %c0_i32_1 = arith.constant 0 : i32
    return %arg0, %c0_i32, %c0_i32_0 : i32, i32, i32
  }
  func.func @transform_31(%arg0: i32) -> (i32, i32, i32) {
    %c0_i32 = arith.constant 0 : i32
    %c0_i32_0 = arith.constant 0 : i32
    %c0_i32_1 = arith.constant 0 : i32
    return %arg0, %c0_i32, %c0_i32_0 : i32, i32, i32
  }
}

</mosaic_0001>

<llo_original>
// kernel: mesh_refinement_stage_forward.1
$region0: #{mesh_refinement_stage_forward.1}
  #allocation0 [shape = 'u32[]', space=smem, size = 0x4, offset = 0x4, fixed_abs, tag = 'smem constant byte address 0x4 - core index']
  #allocation1 [shape = 'u32[144,128]{1,0:T(1,128)}', space=vmem, size = 0x12000, scoped, tag = 'internal scratch']
  %s0 = inlined_call_operand.smem [shape: u32[32], index: -1, kind: input, shape index: {}]
  %s1 = sld [smem:[%s0]]
  %s2 = scalar_lea.smem %s0, 1
  %s3 = sld [smem:[%s2]]
  %s4 = scalar_lea.smem %s0, 2
  %s5 = sld [smem:[%s4]]
  %s6 = scalar_lea.smem %s0, 3
  %s7 = sld [smem:[%s6]]
  %s8 = scalar_lea.smem %s0, 4
  %s9 = sld [smem:[%s8]]
  %s10 = scalar_lea.smem %s0, 5
  %s11 = sld [smem:[%s10]]
  %s12 = scalar_lea.smem %s0, 6
  %s13 = sld [smem:[%s12]]
  %s14 = scalar_lea.smem %s0, 7
  %s15 = sld [smem:[%s14]]
  %s16 = scalar_lea.smem %s0, 8
  %s17 = sld [smem:[%s16]]
  %s18 = scalar_lea.smem %s0, 9
  %s19 = sld [smem:[%s18]]
  %s20 = scalar_lea.smem %s0, 10
  %s21 = sld [smem:[%s20]]
  %s22 = scalar_lea.smem %s0, 11
  %s23 = sld [smem:[%s22]]
  %s24 = scalar_lea.smem %s0, 12
  %s25 = sld [smem:[%s24]]
  %s26 = scalar_lea.smem %s0, 13
  %s27 = sld [smem:[%s26]]
  %s28 = scalar_lea.smem %s0, 14
  %s29 = sld [smem:[%s28]]
  %s30 = scalar_lea.smem %s0, 15
  %s31 = sld [smem:[%s30]]
  %s32 = scalar_lea.smem %s0, 16
  %s33 = sld [smem:[%s32]]
  %s34 = scalar_lea.smem %s0, 17
  %s35 = sld [smem:[%s34]]
  %s36 = scalar_lea.smem %s0, 18
  %s37 = sld [smem:[%s36]]
  %s38 = scalar_lea.smem %s0, 19
  %s39 = sld [smem:[%s38]]
  %s40 = scalar_lea.smem %s0, 20
  %s41 = sld [smem:[%s40]]
  %s42 = scalar_lea.smem %s0, 21
  %s43 = sld [smem:[%s42]]
  %s44 = scalar_lea.smem %s0, 22
  %s45 = sld [smem:[%s44]]
  %s46 = scalar_lea.smem %s0, 23
  %s47 = sld [smem:[%s46]]
  %s48 = scalar_lea.smem %s0, 24
  %s49 = sld [smem:[%s48]]
  %s50 = scalar_lea.smem %s0, 25
  %s51 = sld [smem:[%s50]]
  %s52 = scalar_lea.smem %s0, 26
  %s53 = sld [smem:[%s52]]
  %s54 = scalar_lea.smem %s0, 27
  %s55 = sld [smem:[%s54]]
  %s56 = scalar_lea.smem %s0, 28
  %s57 = sld [smem:[%s56]]
  %s58 = scalar_lea.smem %s0, 29
  %s59 = sld [smem:[%s58]]
  %s60 = scalar_lea.smem %s0, 30
  %s61 = sld [smem:[%s60]]
  %s62 = scalar_lea.smem %s0, 31
  %s63 = sld [smem:[%s62]]
  %64 = xla_tuple %s61, %s63
  %s65 = sld [smem:[#allocation0]]
  $region161: #{mesh_refinement_stage_forward.1} parent=0
    _
  %s67 = ssub.s32 1, %s65
  %s68 = scalar_select 0, %s67, %s65
  loop: start=0, step=1, limit=4
  $region2: #{mesh_refinement_stage_forward.1} parent=0 // loop_pre_header
    _
  $region3: #{mesh_refinement_stage_forward.1} parent=0 // loop_header
    %s70 = sphi 0, %s74
    %p71 = scmp.ge.s32.totalorder %s70, 4
    %s80 = sphi 0, %s82
    %s83 = sphi 0, %s80
    %s84 = sphi 0, %s83
    %s100 = sphi 0, %s84
    %s106 = sphi 0, %s108
    %s109 = sphi 0, %s106
    %s110 = sphi 0, %s109
    %s126 = sphi 0, %s110
    %s132 = sphi 0, %s134
    %s135 = sphi 0, %s132
    %s136 = sphi 0, %s135
    %s152 = sphi 0, %s136
    %s156 = sphi 0, %s156
    %s158 = sphi 0, %s156
    %s159 = sphi 0, %s158
    %s173 = sphi 0, %s159
    %s177 = sphi 0, %s177
    %s179 = sphi 0, %s177
    %s180 = sphi 0, %s179
    %s194 = sphi 0, %s180
    %s198 = sphi 0, %s198
    %s200 = sphi 0, %s198
    %s201 = sphi 0, %s200
    %s215 = sphi 0, %s201
    %s219 = sphi 0, %s219
    %s221 = sphi 0, %s219
    %s222 = sphi 0, %s221
    %s236 = sphi 0, %s222
    %s240 = sphi 0, %s240
    %s242 = sphi 0, %s240
    %s243 = sphi 0, %s242
    %s257 = sphi 0, %s243
    %s261 = sphi 0, %s261
    %s263 = sphi 0, %s261
    %s264 = sphi 0, %s263
    %s278 = sphi 0, %s264
    %s282 = sphi 0, %s282
    %s284 = sphi 0, %s282
    %s285 = sphi 0, %s284
    %s299 = sphi 0, %s285
    %s303 = sphi 0, %s303
    %s305 = sphi 0, %s303
    %s306 = sphi 0, %s305
    %s320 = sphi 0, %s306
    %s324 = sphi 0, %s324
    %s326 = sphi 0, %s324
    %s327 = sphi 0, %s326
    %s341 = sphi 0, %s327
    %s345 = sphi 0, %s345
    %s347 = sphi 0, %s345
    %s348 = sphi 0, %s347
    %s362 = sphi 0, %s348
    %s366 = sphi 0, %s366
    %s368 = sphi 0, %s366
    %s369 = sphi 0, %s368
    %s383 = sphi 0, %s369
    %s387 = sphi 0, %s387
    %s389 = sphi 0, %s387
    %s390 = sphi 0, %s389
    %s404 = sphi 0, %s390
    %s408 = sphi 0, %s408
    %s410 = sphi 0, %s408
    %s411 = sphi 0, %s410
    %s425 = sphi 0, %s411
    %s429 = sphi 0, %s429
    %s431 = sphi 0, %s429
    %s432 = sphi 0, %s431
    %s446 = sphi 0, %s432
    %s450 = sphi 0, %s450
    %s452 = sphi 0, %s450
    %s453 = sphi 0, %s452
    %s467 = sphi 0, %s453
    %s471 = sphi 0, %s471
    %s473 = sphi 0, %s471
    %s474 = sphi 0, %s473
    %s488 = sphi 0, %s474
    %s492 = sphi 0, %s492
    %s494 = sphi 0, %s492
    %s495 = sphi 0, %s494
    %s509 = sphi 0, %s495
    %s513 = sphi 0, %s513
    %s515 = sphi 0, %s513
    %s516 = sphi 0, %s515
    %s530 = sphi 0, %s516
    %s534 = sphi 0, %s534
    %s536 = sphi 0, %s534
    %s537 = sphi 0, %s536
    %s551 = sphi 0, %s537
    %s555 = sphi 0, %s555
    %s557 = sphi 0, %s555
    %s558 = sphi 0, %s557
    %s572 = sphi 0, %s558
    %s576 = sphi 0, %s576
    %s578 = sphi 0, %s576
    %s579 = sphi 0, %s578
    %s593 = sphi 0, %s579
    %s597 = sphi 0, %s597
    %s599 = sphi 0, %s597
    %s600 = sphi 0, %s599
    %s614 = sphi 0, %s600
    %s618 = sphi 0, %s618
    %s620 = sphi 0, %s618
    %s621 = sphi 0, %s620
    %s635 = sphi 0, %s621
    %s639 = sphi 0, %s639
    %s641 = sphi 0, %s639
    %s642 = sphi 0, %s641
    %s656 = sphi 0, %s642
    %s660 = sphi 0, %s660
    %s662 = sphi 0, %s660
    %s663 = sphi 0, %s662
    %s677 = sphi 0, %s663
    %s681 = sphi 0, %s681
    %s683 = sphi 0, %s681
    %s684 = sphi 0, %s683
    %s698 = sphi 0, %s684
    %s702 = sphi 0, %s702
    %s704 = sphi 0, %s702
    %s705 = sphi 0, %s704
    %s719 = sphi 0, %s705
    %s725 = sphi 0, %s727
    %s728 = sphi 0, %s725
    %s729 = sphi 0, %s728
    %s745 = sphi 0, %s729
    %s751 = sphi 0, %s753
    %s754 = sphi 0, %s751
    %s755 = sphi 0, %s754
    %s771 = sphi 0, %s755
  $region4: #{mesh_refinement_stage_forward.1} parent=0 // loop_header_branch
    %73 = sbr.rel (%p71) target = $region8
  $region5: #{mesh_refinement_stage_forward.1} parent=0 // loop_body
    %s75 = ssub.s32 %s70, 1
    %s76 = ssub.s32 %s70, 2
    %s77 = sadd.s32 %s70, 1
    %s78 = ssub.s32 %s70, %s77
    %p79 = scmp.eq.s32.totalorder %s78, 0
    %s81 = sadd.s32 %s80, 1
    %s82 = scalar_select %p79, %s80, %s81
    %p85 = pneg %p79
    %p86 = scmp.eq.s32.totalorder %s70, 1
    %p87 = por %p85, %p86
    %p88 = scmp.ne.s32.totalorder %s80, %s83
    %p89 = scmp.eq.s32.totalorder %s70, 0
    %p90 = por %p88, %p89
    %p91 = scmp.ne.s32.totalorder %s80, %s83
    %p92 = scmp.eq.s32.totalorder %s75, 1
    %p93 = por %p91, %p92
    %p94 = scmp.ne.s32.totalorder %s83, %s84
    %p95 = scmp.eq.s32.totalorder %s75, 0
    %p96 = por %p94, %p95
    %p97 = scmp.ne.s32.totalorder %s83, %s84
    %p98 = scmp.eq.s32.totalorder %s76, 1
    %p99 = por %p97, %p98
    %p101 = scmp.ne.s32.totalorder %s84, %s100
    %p102 = scmp.eq.s32.totalorder %s76, 0
    %p103 = por %p101, %p102
    %s104 = ssub.s32 %s70, %s77
    %p105 = scmp.eq.s32.totalorder %s104, 0
    %s107 = sadd.s32 %s106, 1
    %s108 = scalar_select %p105, %s106, %s107
    %p111 = pneg %p105
    %p112 = scmp.eq.s32.totalorder %s70, 1
    %p113 = por %p111, %p112
    %p114 = scmp.ne.s32.totalorder %s106, %s109
    %p115 = scmp.eq.s32.totalorder %s70, 0
    %p116 = por %p114, %p115
    %p117 = scmp.ne.s32.totalorder %s106, %s109
    %p118 = scmp.eq.s32.totalorder %s75, 1
    %p119 = por %p117, %p118
    %p120 = scmp.ne.s32.totalorder %s109, %s110
    %p121 = scmp.eq.s32.totalorder %s75, 0
    %p122 = por %p120, %p121
    %p123 = scmp.ne.s32.totalorder %s109, %s110
    %p124 = scmp.eq.s32.totalorder %s76, 1
    %p125 = por %p123, %p124
    %p127 = scmp.ne.s32.totalorder %s110, %s126
    %p128 = scmp.eq.s32.totalorder %s76, 0
    %p129 = por %p127, %p128
    %s130 = ssub.s32 %s70, %s77
    %p131 = scmp.eq.s32.totalorder %s130, 0
    %s133 = sadd.s32 %s132, 1
    %s134 = scalar_select %p131, %s132, %s133
    %p137 = pneg %p131
    %p138 = scmp.eq.s32.totalorder %s70, 1
    %p139 = por %p137, %p138
    %p140 = scmp.ne.s32.totalorder %s132, %s135
    %p141 = scmp.eq.s32.totalorder %s70, 0
    %p142 = por %p140, %p141
    %p143 = scmp.ne.s32.totalorder %s132, %s135
    %p144 = scmp.eq.s32.totalorder %s75, 1
    %p145 = por %p143, %p144
    %p146 = scmp.ne.s32.totalorder %s135, %s136
    %p147 = scmp.eq.s32.totalorder %s75, 0
    %p148 = por %p146, %p147
    %p149 = scmp.ne.s32.totalorder %s135, %s136
    %p150 = scmp.eq.s32.totalorder %s76, 1
    %p151 = por %p149, %p150
    %p153 = scmp.ne.s32.totalorder %s136, %s152
    %p154 = scmp.eq.s32.totalorder %s76, 0
    %p155 = por %p153, %p154
    %s157 = sadd.s32 %s156, 1
    %p160 = scmp.eq.s32.totalorder %s70, 1
    %p161 = scmp.ne.s32.totalorder %s156, %s158
    %p162 = scmp.eq.s32.totalorder %s70, 0
    %p163 = por %p161, %p162
    %p164 = scmp.ne.s32.totalorder %s156, %s158
    %p165 = scmp.eq.s32.totalorder %s75, 1
    %p166 = por %p164, %p165
    %p167 = scmp.ne.s32.totalorder %s158, %s159
    %p168 = scmp.eq.s32.totalorder %s75, 0
    %p169 = por %p167, %p168
    %p170 = scmp.ne.s32.totalorder %s158, %s159
    %p171 = scmp.eq.s32.totalorder %s76, 1
    %p172 = por %p170, %p171
    %p174 = scmp.ne.s32.totalorder %s159, %s173
    %p175 = scmp.eq.s32.totalorder %s76, 0
    %p176 = por %p174, %p175
    %s178 = sadd.s32 %s177, 1
    %p181 = scmp.eq.s32.totalorder %s70, 1
    %p182 = scmp.ne.s32.totalorder %s177, %s179
    %p183 = scmp.eq.s32.totalorder %s70, 0
    %p184 = por %p182, %p183
    %p185 = scmp.ne.s32.totalorder %s177, %s179
    %p186 = scmp.eq.s32.totalorder %s75, 1
    %p187 = por %p185, %p186
    %p188 = scmp.ne.s32.totalorder %s179, %s180
    %p189 = scmp.eq.s32.totalorder %s75, 0
    %p190 = por %p188, %p189
    %p191 = scmp.ne.s32.totalorder %s179, %s180
    %p192 = scmp.eq.s32.totalorder %s76, 1
    %p193 = por %p191, %p192
    %p195 = scmp.ne.s32.totalorder %s180, %s194
    %p196 = scmp.eq.s32.totalorder %s76, 0
    %p197 = por %p195, %p196
    %s199 = sadd.s32 %s198, 1
    %p202 = scmp.eq.s32.totalorder %s70, 1
    %p203 = scmp.ne.s32.totalorder %s198, %s200
    %p204 = scmp.eq.s32.totalorder %s70, 0
    %p205 = por %p203, %p204
    %p206 = scmp.ne.s32.totalorder %s198, %s200
    %p207 = scmp.eq.s32.totalorder %s75, 1
    %p208 = por %p206, %p207
    %p209 = scmp.ne.s32.totalorder %s200, %s201
    %p210 = scmp.eq.s32.totalorder %s75, 0
    %p211 = por %p209, %p210
    %p212 = scmp.ne.s32.totalorder %s200, %s201
    %p213 = scmp.eq.s32.totalorder %s76, 1
    %p214 = por %p212, %p213
    %p216 = scmp.ne.s32.totalorder %s201, %s215
    %p217 = scmp.eq.s32.totalorder %s76, 0
    %p218 = por %p216, %p217
    %s220 = sadd.s32 %s219, 1
    %p223 = scmp.eq.s32.totalorder %s70, 1
    %p224 = scmp.ne.s32.totalorder %s219, %s221
    %p225 = scmp.eq.s32.totalorder %s70, 0
    %p226 = por %p224, %p225
    %p227 = scmp.ne.s32.totalorder %s219, %s221
    %p228 = scmp.eq.s32.totalorder %s75, 1
    %p229 = por %p227, %p228
    %p230 = scmp.ne.s32.totalorder %s221, %s222
    %p231 = scmp.eq.s32.totalorder %s75, 0
    %p232 = por %p230, %p231
    %p233 = scmp.ne.s32.totalorder %s221, %s222
    %p234 = scmp.eq.s32.totalorder %s76, 1
    %p235 = por %p233, %p234
    %p237 = scmp.ne.s32.totalorder %s222, %s236
    %p238 = scmp.eq.s32.totalorder %s76, 0
    %p239 = por %p237, %p238
    %s241 = sadd.s32 %s240, 1
    %p244 = scmp.eq.s32.totalorder %s70, 1
    %p245 = scmp.ne.s32.totalorder %s240, %s242
    %p246 = scmp.eq.s32.totalorder %s70, 0
    %p247 = por %p245, %p246
    %p248 = scmp.ne.s32.totalorder %s240, %s242
    %p249 = scmp.eq.s32.totalorder %s75, 1
    %p250 = por %p248, %p249
    %p251 = scmp.ne.s32.totalorder %s242, %s243
    %p252 = scmp.eq.s32.totalorder %s75, 0
    %p253 = por %p251, %p252
    %p254 = scmp.ne.s32.totalorder %s242, %s243
    %p255 = scmp.eq.s32.totalorder %s76, 1
    %p256 = por %p254, %p255
    %p258 = scmp.ne.s32.totalorder %s243, %s257
    %p259 = scmp.eq.s32.totalorder %s76, 0
    %p260 = por %p258, %p259
    %s262 = sadd.s32 %s261, 1
    %p265 = scmp.eq.s32.totalorder %s70, 1
    %p266 = scmp.ne.s32.totalorder %s261, %s263
    %p267 = scmp.eq.s32.totalorder %s70, 0
    %p268 = por %p266, %p267
    %p269 = scmp.ne.s32.totalorder %s261, %s263
    %p270 = scmp.eq.s32.totalorder %s75, 1
    %p271 = por %p269, %p270
    %p272 = scmp.ne.s32.totalorder %s263, %s264
    %p273 = scmp.eq.s32.totalorder %s75, 0
    %p274 = por %p272, %p273
    %p275 = scmp.ne.s32.totalorder %s263, %s264
    %p276 = scmp.eq.s32.totalorder %s76, 1
    %p277 = por %p275, %p276
    %p279 = scmp.ne.s32.totalorder %s264, %s278
    %p280 = scmp.eq.s32.totalorder %s76, 0
    %p281 = por %p279, %p280
    %s283 = sadd.s32 %s282, 1
    %p286 = scmp.eq.s32.totalorder %s70, 1
    %p287 = scmp.ne.s32.totalorder %s282, %s284
    %p288 = scmp.eq.s32.totalorder %s70, 0
    %p289 = por %p287, %p288
    %p290 = scmp.ne.s32.totalorder %s282, %s284
    %p291 = scmp.eq.s32.totalorder %s75, 1
    %p292 = por %p290, %p291
    %p293 = scmp.ne.s32.totalorder %s284, %s285
    %p294 = scmp.eq.s32.totalorder %s75, 0
    %p295 = por %p293, %p294
    %p296 = scmp.ne.s32.totalorder %s284, %s285
    %p297 = scmp.eq.s32.totalorder %s76, 1
    %p298 = por %p296, %p297
    %p300 = scmp.ne.s32.totalorder %s285, %s299
    %p301 = scmp.eq.s32.totalorder %s76, 0
    %p302 = por %p300, %p301
    %s304 = sadd.s32 %s303, 1
    %p307 = scmp.eq.s32.totalorder %s70, 1
    %p308 = scmp.ne.s32.totalorder %s303, %s305
    %p309 = scmp.eq.s32.totalorder %s70, 0
    %p310 = por %p308, %p309
    %p311 = scmp.ne.s32.totalorder %s303, %s305
    %p312 = scmp.eq.s32.totalorder %s75, 1
    %p313 = por %p311, %p312
    %p314 = scmp.ne.s32.totalorder %s305, %s306
    %p315 = scmp.eq.s32.totalorder %s75, 0
    %p316 = por %p314, %p315
    %p317 = scmp.ne.s32.totalorder %s305, %s306
    %p318 = scmp.eq.s32.totalorder %s76, 1
    %p319 = por %p317, %p318
    %p321 = scmp.ne.s32.totalorder %s306, %s320
    %p322 = scmp.eq.s32.totalorder %s76, 0
    %p323 = por %p321, %p322
    %s325 = sadd.s32 %s324, 1
    %p328 = scmp.eq.s32.totalorder %s70, 1
    %p329 = scmp.ne.s32.totalorder %s324, %s326
    %p330 = scmp.eq.s32.totalorder %s70, 0
    %p331 = por %p329, %p330
    %p332 = scmp.ne.s32.totalorder %s324, %s326
    %p333 = scmp.eq.s32.totalorder %s75, 1
    %p334 = por %p332, %p333
    %p335 = scmp.ne.s32.totalorder %s326, %s327
    %p336 = scmp.eq.s32.totalorder %s75, 0
    %p337 = por %p335, %p336
    %p338 = scmp.ne.s32.totalorder %s326, %s327
    %p339 = scmp.eq.s32.totalorder %s76, 1
    %p340 = por %p338, %p339
    %p342 = scmp.ne.s32.totalorder %s327, %s341
    %p343 = scmp.eq.s32.totalorder %s76, 0
    %p344 = por %p342, %p343
    %s346 = sadd.s32 %s345, 1
    %p349 = scmp.eq.s32.totalorder %s70, 1
    %p350 = scmp.ne.s32.totalorder %s345, %s347
    %p351 = scmp.eq.s32.totalorder %s70, 0
    %p352 = por %p350, %p351
    %p353 = scmp.ne.s32.totalorder %s345, %s347
    %p354 = scmp.eq.s32.totalorder %s75, 1
    %p355 = por %p353, %p354
    %p356 = scmp.ne.s32.totalorder %s347, %s348
    %p357 = scmp.eq.s32.totalorder %s75, 0
    %p358 = por %p356, %p357
    %p359 = scmp.ne.s32.totalorder %s347, %s348
    %p360 = scmp.eq.s32.totalorder %s76, 1
    %p361 = por %p359, %p360
    %p363 = scmp.ne.s32.totalorder %s348, %s362
    %p364 = scmp.eq.s32.totalorder %s76, 0
    %p365 = por %p363, %p364
    %s367 = sadd.s32 %s366, 1
    %p370 = scmp.eq.s32.totalorder %s70, 1
    %p371 = scmp.ne.s32.totalorder %s366, %s368
    %p372 = scmp.eq.s32.totalorder %s70, 0
    %p373 = por %p371, %p372
    %p374 = scmp.ne.s32.totalorder %s366, %s368
    %p375 = scmp.eq.s32.totalorder %s75, 1
    %p376 = por %p374, %p375
    %p377 = scmp.ne.s32.totalorder %s368, %s369
    %p378 = scmp.eq.s32.totalorder %s75, 0
    %p379 = por %p377, %p378
    %p380 = scmp.ne.s32.totalorder %s368, %s369
    %p381 = scmp.eq.s32.totalorder %s76, 1
    %p382 = por %p380, %p381
    %p384 = scmp.ne.s32.totalorder %s369, %s383
    %p385 = scmp.eq.s32.totalorder %s76, 0
    %p386 = por %p384, %p385
    %s388 = sadd.s32 %s387, 1
    %p391 = scmp.eq.s32.totalorder %s70, 1
    %p392 = scmp.ne.s32.totalorder %s387, %s389
    %p393 = scmp.eq.s32.totalorder %s70, 0
    %p394 = por %p392, %p393
    %p395 = scmp.ne.s32.totalorder %s387, %s389
    %p396 = scmp.eq.s32.totalorder %s75, 1
    %p397 = por %p395, %p396
    %p398 = scmp.ne.s32.totalorder %s389, %s390
    %p399 = scmp.eq.s32.totalorder %s75, 0
    %p400 = por %p398, %p399
    %p401 = scmp.ne.s32.totalorder %s389, %s390
    %p402 = scmp.eq.s32.totalorder %s76, 1
    %p403 = por %p401, %p402
    %p405 = scmp.ne.s32.totalorder %s390, %s404
    %p406 = scmp.eq.s32.totalorder %s76, 0
    %p407 = por %p405, %p406
    %s409 = sadd.s32 %s408, 1
    %p412 = scmp.eq.s32.totalorder %s70, 1
    %p413 = scmp.ne.s32.totalorder %s408, %s410
    %p414 = scmp.eq.s32.totalorder %s70, 0
    %p415 = por %p413, %p414
    %p416 = scmp.ne.s32.totalorder %s408, %s410
    %p417 = scmp.eq.s32.totalorder %s75, 1
    %p418 = por %p416, %p417
    %p419 = scmp.ne.s32.totalorder %s410, %s411
    %p420 = scmp.eq.s32.totalorder %s75, 0
    %p421 = por %p419, %p420
    %p422 = scmp.ne.s32.totalorder %s410, %s411
    %p423 = scmp.eq.s32.totalorder %s76, 1
    %p424 = por %p422, %p423
    %p426 = scmp.ne.s32.totalorder %s411, %s425
    %p427 = scmp.eq.s32.totalorder %s76, 0
    %p428 = por %p426, %p427
    %s430 = sadd.s32 %s429, 1
    %p433 = scmp.eq.s32.totalorder %s70, 1
    %p434 = scmp.ne.s32.totalorder %s429, %s431
    %p435 = scmp.eq.s32.totalorder %s70, 0
    %p436 = por %p434, %p435
    %p437 = scmp.ne.s32.totalorder %s429, %s431
    %p438 = scmp.eq.s32.totalorder %s75, 1
    %p439 = por %p437, %p438
    %p440 = scmp.ne.s32.totalorder %s431, %s432
    %p441 = scmp.eq.s32.totalorder %s75, 0
    %p442 = por %p440, %p441
    %p443 = scmp.ne.s32.totalorder %s431, %s432
    %p444 = scmp.eq.s32.totalorder %s76, 1
    %p445 = por %p443, %p444
    %p447 = scmp.ne.s32.totalorder %s432, %s446
    %p448 = scmp.eq.s32.totalorder %s76, 0
    %p449 = por %p447, %p448
    %s451 = sadd.s32 %s450, 1
    %p454 = scmp.eq.s32.totalorder %s70, 1
    %p455 = scmp.ne.s32.totalorder %s450, %s452
    %p456 = scmp.eq.s32.totalorder %s70, 0
    %p457 = por %p455, %p456
    %p458 = scmp.ne.s32.totalorder %s450, %s452
    %p459 = scmp.eq.s32.totalorder %s75, 1
    %p460 = por %p458, %p459
    %p461 = scmp.ne.s32.totalorder %s452, %s453
    %p462 = scmp.eq.s32.totalorder %s75, 0
    %p463 = por %p461, %p462
    %p464 = scmp.ne.s32.totalorder %s452, %s453
    %p465 = scmp.eq.s32.totalorder %s76, 1
    %p466 = por %p464, %p465
    %p468 = scmp.ne.s32.totalorder %s453, %s467
    %p469 = scmp.eq.s32.totalorder %s76, 0
    %p470 = por %p468, %p469
    %s472 = sadd.s32 %s471, 1
    %p475 = scmp.eq.s32.totalorder %s70, 1
    %p476 = scmp.ne.s32.totalorder %s471, %s473
    %p477 = scmp.eq.s32.totalorder %s70, 0
    %p478 = por %p476, %p477
    %p479 = scmp.ne.s32.totalorder %s471, %s473
    %p480 = scmp.eq.s32.totalorder %s75, 1
    %p481 = por %p479, %p480
    %p482 = scmp.ne.s32.totalorder %s473, %s474
    %p483 = scmp.eq.s32.totalorder %s75, 0
    %p484 = por %p482, %p483
    %p485 = scmp.ne.s32.totalorder %s473, %s474
    %p486 = scmp.eq.s32.totalorder %s76, 1
    %p487 = por %p485, %p486
    %p489 = scmp.ne.s32.totalorder %s474, %s488
    %p490 = scmp.eq.s32.totalorder %s76, 0
    %p491 = por %p489, %p490
    %s493 = sadd.s32 %s492, 1
    %p496 = scmp.eq.s32.totalorder %s70, 1
    %p497 = scmp.ne.s32.totalorder %s492, %s494
    %p498 = scmp.eq.s32.totalorder %s70, 0
    %p499 = por %p497, %p498
    %p500 = scmp.ne.s32.totalorder %s492, %s494
    %p501 = scmp.eq.s32.totalorder %s75, 1
    %p502 = por %p500, %p501
    %p503 = scmp.ne.s32.totalorder %s494, %s495
    %p504 = scmp.eq.s32.totalorder %s75, 0
    %p505 = por %p503, %p504
    %p506 = scmp.ne.s32.totalorder %s494, %s495
    %p507 = scmp.eq.s32.totalorder %s76, 1
    %p508 = por %p506, %p507
    %p510 = scmp.ne.s32.totalorder %s495, %s509
    %p511 = scmp.eq.s32.totalorder %s76, 0
    %p512 = por %p510, %p511
    %s514 = sadd.s32 %s513, 1
    %p517 = scmp.eq.s32.totalorder %s70, 1
    %p518 = scmp.ne.s32.totalorder %s513, %s515
    %p519 = scmp.eq.s32.totalorder %s70, 0
    %p520 = por %p518, %p519
    %p521 = scmp.ne.s32.totalorder %s513, %s515
    %p522 = scmp.eq.s32.totalorder %s75, 1
    %p523 = por %p521, %p522
    %p524 = scmp.ne.s32.totalorder %s515, %s516
    %p525 = scmp.eq.s32.totalorder %s75, 0
    %p526 = por %p524, %p525
    %p527 = scmp.ne.s32.totalorder %s515, %s516
    %p528 = scmp.eq.s32.totalorder %s76, 1
    %p529 = por %p527, %p528
    %p531 = scmp.ne.s32.totalorder %s516, %s530
    %p532 = scmp.eq.s32.totalorder %s76, 0
    %p533 = por %p531, %p532
    %s535 = sadd.s32 %s534, 1
    %p538 = scmp.eq.s32.totalorder %s70, 1
    %p539 = scmp.ne.s32.totalorder %s534, %s536
    %p540 = scmp.eq.s32.totalorder %s70, 0
    %p541 = por %p539, %p540
    %p542 = scmp.ne.s32.totalorder %s534, %s536
    %p543 = scmp.eq.s32.totalorder %s75, 1
    %p544 = por %p542, %p543
    %p545 = scmp.ne.s32.totalorder %s536, %s537
    %p546 = scmp.eq.s32.totalorder %s75, 0
    %p547 = por %p545, %p546
    %p548 = scmp.ne.s32.totalorder %s536, %s537
    %p549 = scmp.eq.s32.totalorder %s76, 1
    %p550 = por %p548, %p549
    %p552 = scmp.ne.s32.totalorder %s537, %s551
    %p553 = scmp.eq.s32.totalorder %s76, 0
    %p554 = por %p552, %p553
    %s556 = sadd.s32 %s555, 1
    %p559 = scmp.eq.s32.totalorder %s70, 1
    %p560 = scmp.ne.s32.totalorder %s555, %s557
    %p561 = scmp.eq.s32.totalorder %s70, 0
    %p562 = por %p560, %p561
    %p563 = scmp.ne.s32.totalorder %s555, %s557
    %p564 = scmp.eq.s32.totalorder %s75, 1
    %p565 = por %p563, %p564
    %p566 = scmp.ne.s32.totalorder %s557, %s558
    %p567 = scmp.eq.s32.totalorder %s75, 0
    %p568 = por %p566, %p567
    %p569 = scmp.ne.s32.totalorder %s557, %s558
    %p570 = scmp.eq.s32.totalorder %s76, 1
    %p571 = por %p569, %p570
    %p573 = scmp.ne.s32.totalorder %s558, %s572
    %p574 = scmp.eq.s32.totalorder %s76, 0
    %p575 = por %p573, %p574
    %s577 = sadd.s32 %s576, 1
    %p580 = scmp.eq.s32.totalorder %s70, 1
    %p581 = scmp.ne.s32.totalorder %s576, %s578
    %p582 = scmp.eq.s32.totalorder %s70, 0
    %p583 = por %p581, %p582
    %p584 = scmp.ne.s32.totalorder %s576, %s578
    %p585 = scmp.eq.s32.totalorder %s75, 1
    %p586 = por %p584, %p585
    %p587 = scmp.ne.s32.totalorder %s578, %s579
    %p588 = scmp.eq.s32.totalorder %s75, 0
    %p589 = por %p587, %p588
    %p590 = scmp.ne.s32.totalorder %s578, %s579
    %p591 = scmp.eq.s32.totalorder %s76, 1
    %p592 = por %p590, %p591
    %p594 = scmp.ne.s32.totalorder %s579, %s593
    %p595 = scmp.eq.s32.totalorder %s76, 0
    %p596 = por %p594, %p595
    %s598 = sadd.s32 %s597, 1
    %p601 = scmp.eq.s32.totalorder %s70, 1
    %p602 = scmp.ne.s32.totalorder %s597, %s599
    %p603 = scmp.eq.s32.totalorder %s70, 0
    %p604 = por %p602, %p603
    %p605 = scmp.ne.s32.totalorder %s597, %s599
    %p606 = scmp.eq.s32.totalorder %s75, 1
    %p607 = por %p605, %p606
    %p608 = scmp.ne.s32.totalorder %s599, %s600
    %p609 = scmp.eq.s32.totalorder %s75, 0
    %p610 = por %p608, %p609
    %p611 = scmp.ne.s32.totalorder %s599, %s600
    %p612 = scmp.eq.s32.totalorder %s76, 1
    %p613 = por %p611, %p612
    %p615 = scmp.ne.s32.totalorder %s600, %s614
    %p616 = scmp.eq.s32.totalorder %s76, 0
    %p617 = por %p615, %p616
    %s619 = sadd.s32 %s618, 1
    %p622 = scmp.eq.s32.totalorder %s70, 1
    %p623 = scmp.ne.s32.totalorder %s618, %s620
    %p624 = scmp.eq.s32.totalorder %s70, 0
    %p625 = por %p623, %p624
    %p626 = scmp.ne.s32.totalorder %s618, %s620
    %p627 = scmp.eq.s32.totalorder %s75, 1
    %p628 = por %p626, %p627
    %p629 = scmp.ne.s32.totalorder %s620, %s621
    %p630 = scmp.eq.s32.totalorder %s75, 0
    %p631 = por %p629, %p630
    %p632 = scmp.ne.s32.totalorder %s620, %s621
    %p633 = scmp.eq.s32.totalorder %s76, 1
    %p634 = por %p632, %p633
    %p636 = scmp.ne.s32.totalorder %s621, %s635
    %p637 = scmp.eq.s32.totalorder %s76, 0
    %p638 = por %p636, %p637
    %s640 = sadd.s32 %s639, 1
    %p643 = scmp.eq.s32.totalorder %s70, 1
    %p644 = scmp.ne.s32.totalorder %s639, %s641
    %p645 = scmp.eq.s32.totalorder %s70, 0
    %p646 = por %p644, %p645
    %p647 = scmp.ne.s32.totalorder %s639, %s641
    %p648 = scmp.eq.s32.totalorder %s75, 1
    %p649 = por %p647, %p648
    %p650 = scmp.ne.s32.totalorder %s641, %s642
    %p651 = scmp.eq.s32.totalorder %s75, 0
    %p652 = por %p650, %p651
    %p653 = scmp.ne.s32.totalorder %s641, %s642
    %p654 = scmp.eq.s32.totalorder %s76, 1
    %p655 = por %p653, %p654
    %p657 = scmp.ne.s32.totalorder %s642, %s656
    %p658 = scmp.eq.s32.totalorder %s76, 0
    %p659 = por %p657, %p658
    %s661 = sadd.s32 %s660, 1
    %p664 = scmp.eq.s32.totalorder %s70, 1
    %p665 = scmp.ne.s32.totalorder %s660, %s662
    %p666 = scmp.eq.s32.totalorder %s70, 0
    %p667 = por %p665, %p666
    %p668 = scmp.ne.s32.totalorder %s660, %s662
    %p669 = scmp.eq.s32.totalorder %s75, 1
    %p670 = por %p668, %p669
    %p671 = scmp.ne.s32.totalorder %s662, %s663
    %p672 = scmp.eq.s32.totalorder %s75, 0
    %p673 = por %p671, %p672
    %p674 = scmp.ne.s32.totalorder %s662, %s663
    %p675 = scmp.eq.s32.totalorder %s76, 1
    %p676 = por %p674, %p675
    %p678 = scmp.ne.s32.totalorder %s663, %s677
    %p679 = scmp.eq.s32.totalorder %s76, 0
    %p680 = por %p678, %p679
    %s682 = sadd.s32 %s681, 1
    %p685 = scmp.eq.s32.totalorder %s70, 1
    %p686 = scmp.ne.s32.totalorder %s681, %s683
    %p687 = scmp.eq.s32.totalorder %s70, 0
    %p688 = por %p686, %p687
    %p689 = scmp.ne.s32.totalorder %s681, %s683
    %p690 = scmp.eq.s32.totalorder %s75, 1
    %p691 = por %p689, %p690
    %p692 = scmp.ne.s32.totalorder %s683, %s684
    %p693 = scmp.eq.s32.totalorder %s75, 0
    %p694 = por %p692, %p693
    %p695 = scmp.ne.s32.totalorder %s683, %s684
    %p696 = scmp.eq.s32.totalorder %s76, 1
    %p697 = por %p695, %p696
    %p699 = scmp.ne.s32.totalorder %s684, %s698
    %p700 = scmp.eq.s32.totalorder %s76, 0
    %p701 = por %p699, %p700
    %s703 = sadd.s32 %s702, 1
    %p706 = scmp.eq.s32.totalorder %s70, 1
    %p707 = scmp.ne.s32.totalorder %s702, %s704
    %p708 = scmp.eq.s32.totalorder %s70, 0
    %p709 = por %p707, %p708
    %p710 = scmp.ne.s32.totalorder %s702, %s704
    %p711 = scmp.eq.s32.totalorder %s75, 1
    %p712 = por %p710, %p711
    %p713 = scmp.ne.s32.totalorder %s704, %s705
    %p714 = scmp.eq.s32.totalorder %s75, 0
    %p715 = por %p713, %p714
    %p716 = scmp.ne.s32.totalorder %s704, %s705
    %p717 = scmp.eq.s32.totalorder %s76, 1
    %p718 = por %p716, %p717
    %p720 = scmp.ne.s32.totalorder %s705, %s719
    %p721 = scmp.eq.s32.totalorder %s76, 0
    %p722 = por %p720, %p721
    %s723 = ssub.s32 %s70, %s77
    %p724 = scmp.eq.s32.totalorder %s723, 0
    %s726 = sadd.s32 %s725, 1
    %s727 = scalar_select %p724, %s725, %s726
    %p730 = pneg %p724
    %p731 = scmp.eq.s32.totalorder %s70, 1
    %p732 = por %p730, %p731
    %p733 = scmp.ne.s32.totalorder %s725, %s728
    %p734 = scmp.eq.s32.totalorder %s70, 0
    %p735 = por %p733, %p734
    %p736 = scmp.ne.s32.totalorder %s725, %s728
    %p737 = scmp.eq.s32.totalorder %s75, 1
    %p738 = por %p736, %p737
    %p739 = scmp.ne.s32.totalorder %s728, %s729
    %p740 = scmp.eq.s32.totalorder %s75, 0
    %p741 = por %p739, %p740
    %p742 = scmp.ne.s32.totalorder %s728, %s729
    %p743 = scmp.eq.s32.totalorder %s76, 1
    %p744 = por %p742, %p743
    %p746 = scmp.ne.s32.totalorder %s729, %s745
    %p747 = scmp.eq.s32.totalorder %s76, 0
    %p748 = por %p746, %p747
    %s749 = ssub.s32 %s70, %s77
    %p750 = scmp.eq.s32.totalorder %s749, 0
    %s752 = sadd.s32 %s751, 1
    %s753 = scalar_select %p750, %s751, %s752
    %p756 = pneg %p750
    %p757 = scmp.eq.s32.totalorder %s70, 1
    %p758 = por %p756, %p757
    %p759 = scmp.ne.s32.totalorder %s751, %s754
    %p760 = scmp.eq.s32.totalorder %s70, 0
    %p761 = por %p759, %p760
    %p762 = scmp.ne.s32.totalorder %s751, %s754
    %p763 = scmp.eq.s32.totalorder %s75, 1
    %p764 = por %p762, %p763
    %p765 = scmp.ne.s32.totalorder %s754, %s755
    %p766 = scmp.eq.s32.totalorder %s75, 0
    %p767 = por %p765, %p766
    %p768 = scmp.ne.s32.totalorder %s754, %s755
    %p769 = scmp.eq.s32.totalorder %s76, 1
    %p770 = por %p768, %p769
    %p772 = scmp.ne.s32.totalorder %s755, %s771
    %p773 = scmp.eq.s32.totalorder %s76, 0
    %p774 = por %p772, %p773
    %p775 = scmp.le.s32.totalorder 1, %s70
    %p776 = scmp.lt.s32.totalorder %s70, 3
    %p777 = pnand %p775, %p776
    %p778 = pneg %p777
    // Predicated region
    $region9: #{mesh_refinement_stage_forward.1} parent=5 // pred_check
      _
    $region10: #{mesh_refinement_stage_forward.1} parent=5 // pred_check_branch
      %780 = sbr.rel (%p777) target = $region12
    $region11: #{mesh_refinement_stage_forward.1} parent=5 // pred_region
      %s781 = ssub.s32 %s70, 1
      // Predicated region
      $region13: #{mesh_refinement_stage_forward.1} parent=11 // pred_check
        %p782 = pneg %p169
      $region14: #{mesh_refinement_stage_forward.1} parent=11 // pred_check_branch
        %784 = sbr.rel (%p782) target = $region16
      $region15: #{mesh_refinement_stage_forward.1} parent=11 // pred_region
        _
      $region16: #{mesh_refinement_stage_forward.1} parent=11 // pred_fallthru
        _
      // Predicated region
      $region17: #{mesh_refinement_stage_forward.1} parent=11 // pred_check
        %p785 = pneg %p190
      $region18: #{mesh_refinement_stage_forward.1} parent=11 // pred_check_branch
        %787 = sbr.rel (%p785) target = $region20
      $region19: #{mesh_refinement_stage_forward.1} parent=11 // pred_region
        _
      $region20: #{mesh_refinement_stage_forward.1} parent=11 // pred_fallthru
        _
      // Predicated region
      $region21: #{mesh_refinement_stage_forward.1} parent=11 // pred_check
        %p788 = pneg %p211
      $region22: #{mesh_refinement_stage_forward.1} parent=11 // pred_check_branch
        %790 = sbr.rel (%p788) target = $region24
      $region23: #{mesh_refinement_stage_forward.1} parent=11 // pred_region
        _
      $region24: #{mesh_refinement_stage_forward.1} parent=11 // pred_fallthru
        _
      // Predicated region
      $region25: #{mesh_refinement_stage_forward.1} parent=11 // pred_check
        %p791 = pneg %p232
      $region26: #{mesh_refinement_stage_forward.1} parent=11 // pred_check_branch
        %793 = sbr.rel (%p791) target = $region28
      $region27: #{mesh_refinement_stage_forward.1} parent=11 // pred_region
        _
      $region28: #{mesh_refinement_stage_forward.1} parent=11 // pred_fallthru
        _
      // Predicated region
      $region29: #{mesh_refinement_stage_forward.1} parent=11 // pred_check
        %p794 = pneg %p253
      $region30: #{mesh_refinement_stage_forward.1} parent=11 // pred_check_branch
        %796 = sbr.rel (%p794) target = $region32
      $region31: #{mesh_refinement_stage_forward.1} parent=11 // pred_region
        _
      $region32: #{mesh_refinement_stage_forward.1} parent=11 // pred_fallthru
        _
      // Predicated region
      $region33: #{mesh_refinement_stage_forward.1} parent=11 // pred_check
        %p797 = pneg %p274
      $region34: #{mesh_refinement_stage_forward.1} parent=11 // pred_check_branch
        %799 = sbr.rel (%p797) target = $region36
      $region35: #{mesh_refinement_stage_forward.1} parent=11 // pred_region
        _
      $region36: #{mesh_refinement_stage_forward.1} parent=11 // pred_fallthru
        _
      // Predicated region
      $region37: #{mesh_refinement_stage_forward.1} parent=11 // pred_check
        %p800 = pneg %p295
      $region38: #{mesh_refinement_stage_forward.1} parent=11 // pred_check_branch
        %802 = sbr.rel (%p800) target = $region40
      $region39: #{mesh_refinement_stage_forward.1} parent=11 // pred_region
        _
      $region40: #{mesh_refinement_stage_forward.1} parent=11 // pred_fallthru
        _
      // Predicated region
      $region41: #{mesh_refinement_stage_forward.1} parent=11 // pred_check
        %p803 = pneg %p316
      $region42: #{mesh_refinement_stage_forward.1} parent=11 // pred_check_branch
        %805 = sbr.rel (%p803) target = $region44
      $region43: #{mesh_refinement_stage_forward.1} parent=11 // pred_region
        _
      $region44: #{mesh_refinement_stage_forward.1} parent=11 // pred_fallthru
        _
      // Predicated region
      $region45: #{mesh_refinement_stage_forward.1} parent=11 // pred_check
        %p806 = pneg %p337
      $region46: #{mesh_refinement_stage_forward.1} parent=11 // pred_check_branch
        %808 = sbr.rel (%p806) target = $region48
      $region47: #{mesh_refinement_stage_forward.1} parent=11 // pred_region
        _
      $region48: #{mesh_refinement_stage_forward.1} parent=11 // pred_fallthru
        _
      // Predicated region
      $region49: #{mesh_refinement_stage_forward.1} parent=11 // pred_check
        %p809 = pneg %p358
      $region50: #{mesh_refinement_stage_forward.1} parent=11 // pred_check_branch
        %811 = sbr.rel (%p809) target = $region52
      $region51: #{mesh_refinement_stage_forward.1} parent=11 // pred_region
        _
      $region52: #{mesh_refinement_stage_forward.1} parent=11 // pred_fallthru
        _
      // Predicated region
      $region53: #{mesh_refinement_stage_forward.1} parent=11 // pred_check
        %p812 = pneg %p379
      $region54: #{mesh_refinement_stage_forward.1} parent=11 // pred_check_branch
        %814 = sbr.rel (%p812) target = $region56
      $region55: #{mesh_refinement_stage_forward.1} parent=11 // pred_region
        _
      $region56: #{mesh_refinement_stage_forward.1} parent=11 // pred_fallthru
        _
      // Predicated region
      $region57: #{mesh_refinement_stage_forward.1} parent=11 // pred_check
        %p815 = pneg %p400
      $region58: #{mesh_refinement_stage_forward.1} parent=11 // pred_check_branch
        %817 = sbr.rel (%p815) target = $region60
      $region59: #{mesh_refinement_stage_forward.1} parent=11 // pred_region
        _
      $region60: #{mesh_refinement_stage_forward.1} parent=11 // pred_fallthru
        _
      // Predicated region
      $region61: #{mesh_refinement_stage_forward.1} parent=11 // pred_check
        %p818 = pneg %p421
      $region62: #{mesh_refinement_stage_forward.1} parent=11 // pred_check_branch
        %820 = sbr.rel (%p818) target = $region64
      $region63: #{mesh_refinement_stage_forward.1} parent=11 // pred_region
        _
      $region64: #{mesh_refinement_stage_forward.1} parent=11 // pred_fallthru
        _
      // Predicated region
      $region65: #{mesh_refinement_stage_forward.1} parent=11 // pred_check
        %p821 = pneg %p442
      $region66: #{mesh_refinement_stage_forward.1} parent=11 // pred_check_branch
        %823 = sbr.rel (%p821) target = $region68
      $region67: #{mesh_refinement_stage_forward.1} parent=11 // pred_region
        _
      $region68: #{mesh_refinement_stage_forward.1} parent=11 // pred_fallthru
        _
      // Predicated region
      $region69: #{mesh_refinement_stage_forward.1} parent=11 // pred_check
        %p824 = pneg %p463
      $region70: #{mesh_refinement_stage_forward.1} parent=11 // pred_check_branch
        %826 = sbr.rel (%p824) target = $region72
      $region71: #{mesh_refinement_stage_forward.1} parent=11 // pred_region
        _
      $region72: #{mesh_refinement_stage_forward.1} parent=11 // pred_fallthru
        _
      // Predicated region
      $region73: #{mesh_refinement_stage_forward.1} parent=11 // pred_check
        %p827 = pneg %p484
      $region74: #{mesh_refinement_stage_forward.1} parent=11 // pred_check_branch
        %829 = sbr.rel (%p827) target = $region76
      $region75: #{mesh_refinement_stage_forward.1} parent=11 // pred_region
        _
      $region76: #{mesh_refinement_stage_forward.1} parent=11 // pred_fallthru
        _
      // Predicated region
      $region77: #{mesh_refinement_stage_forward.1} parent=11 // pred_check
        %p830 = pneg %p505
      $region78: #{mesh_refinement_stage_forward.1} parent=11 // pred_check_branch
        %832 = sbr.rel (%p830) target = $region80
      $region79: #{mesh_refinement_stage_forward.1} parent=11 // pred_region
        _
      $region80: #{mesh_refinement_stage_forward.1} parent=11 // pred_fallthru
        _
      // Predicated region
      $region81: #{mesh_refinement_stage_forward.1} parent=11 // pred_check
        %p833 = pneg %p526
      $region82: #{mesh_refinement_stage_forward.1} parent=11 // pred_check_branch
        %835 = sbr.rel (%p833) target = $region84
      $region83: #{mesh_refinement_stage_forward.1} parent=11 // pred_region
        _
      $region84: #{mesh_refinement_stage_forward.1} parent=11 // pred_fallthru
        _
      // Predicated region
      $region85: #{mesh_refinement_stage_forward.1} parent=11 // pred_check
        %p836 = pneg %p547
      $region86: #{mesh_refinement_stage_forward.1} parent=11 // pred_check_branch
        %838 = sbr.rel (%p836) target = $region88
      $region87: #{mesh_refinement_stage_forward.1} parent=11 // pred_region
        _
      $region88: #{mesh_refinement_stage_forward.1} parent=11 // pred_fallthru
        _
      // Predicated region
      $region89: #{mesh_refinement_stage_forward.1} parent=11 // pred_check
        %p839 = pneg %p568
      $region90: #{mesh_refinement_stage_forward.1} parent=11 // pred_check_branch
        %841 = sbr.rel (%p839) target = $region92
      $region91: #{mesh_refinement_stage_forward.1} parent=11 // pred_region
        _
      $region92: #{mesh_refinement_stage_forward.1} parent=11 // pred_fallthru
        _
      // Predicated region
      $region93: #{mesh_refinement_stage_forward.1} parent=11 // pred_check
        %p842 = pneg %p589
      $region94: #{mesh_refinement_stage_forward.1} parent=11 // pred_check_branch
        %844 = sbr.rel (%p842) target = $region96
      $region95: #{mesh_refinement_stage_forward.1} parent=11 // pred_region
        _
      $region96: #{mesh_refinement_stage_forward.1} parent=11 // pred_fallthru
        _
      // Predicated region
      $region97: #{mesh_refinement_stage_forward.1} parent=11 // pred_check
        %p845 = pneg %p610
      $region98: #{mesh_refinement_stage_forward.1} parent=11 // pred_check_branch
        %847 = sbr.rel (%p845) target = $region100
      $region99: #{mesh_refinement_stage_forward.1} parent=11 // pred_region
        _
      $region100: #{mesh_refinement_stage_forward.1} parent=11 // pred_fallthru
        _
      // Predicated region
      $region101: #{mesh_refinement_stage_forward.1} parent=11 // pred_check
        %p848 = pneg %p631
      $region102: #{mesh_refinement_stage_forward.1} parent=11 // pred_check_branch
        %850 = sbr.rel (%p848) target = $region104
      $region103: #{mesh_refinement_stage_forward.1} parent=11 // pred_region
        _
      $region104: #{mesh_refinement_stage_forward.1} parent=11 // pred_fallthru
        _
      // Predicated region
      $region105: #{mesh_refinement_stage_forward.1} parent=11 // pred_check
        %p851 = pneg %p652
      $region106: #{mesh_refinement_stage_forward.1} parent=11 // pred_check_branch
        %853 = sbr.rel (%p851) target = $region108
      $region107: #{mesh_refinement_stage_forward.1} parent=11 // pred_region
        _
      $region108: #{mesh_refinement_stage_forward.1} parent=11 // pred_fallthru
        _
      // Predicated region
      $region109: #{mesh_refinement_stage_forward.1} parent=11 // pred_check
        %p854 = pneg %p673
      $region110: #{mesh_refinement_stage_forward.1} parent=11 // pred_check_branch
        %856 = sbr.rel (%p854) target = $region112
      $region111: #{mesh_refinement_stage_forward.1} parent=11 // pred_region
        _
      $region112: #{mesh_refinement_stage_forward.1} parent=11 // pred_fallthru
        _
      // Predicated region
      $region113: #{mesh_refinement_stage_forward.1} parent=11 // pred_check
        %p857 = pneg %p694
      $region114: #{mesh_refinement_stage_forward.1} parent=11 // pred_check_branch
        %859 = sbr.rel (%p857) target = $region116
      $region115: #{mesh_refinement_stage_forward.1} parent=11 // pred_region
        _
      $region116: #{mesh_refinement_stage_forward.1} parent=11 // pred_fallthru
        _
      // Predicated region
      $region117: #{mesh_refinement_stage_forward.1} parent=11 // pred_check
        %p860 = pneg %p715
      $region118: #{mesh_refinement_stage_forward.1} parent=11 // pred_check_branch
        %862 = sbr.rel (%p860) target = $region120
      $region119: #{mesh_refinement_stage_forward.1} parent=11 // pred_region
        _
      $region120: #{mesh_refinement_stage_forward.1} parent=11 // pred_fallthru
        _
    $region12: #{mesh_refinement_stage_forward.1} parent=5 // pred_fallthru
      _
    %p863 = scmp.lt.s32.totalorder %s70, 2
    // Predicated region
    $region121: #{mesh_refinement_stage_forward.1} parent=5 // pred_check
      %p864 = pneg %p863
    $region122: #{mesh_refinement_stage_forward.1} parent=5 // pred_check_branch
      %866 = sbr.rel (%p864) target = $region124
    $region123: #{mesh_refinement_stage_forward.1} parent=5 // pred_region
      // Predicated region
      $region125: #{mesh_refinement_stage_forward.1} parent=123 // pred_check
        %p867 = pneg %p90
      $region126: #{mesh_refinement_stage_forward.1} parent=123 // pred_check_branch
        %869 = sbr.rel (%p867) target = $region128
      $region127: #{mesh_refinement_stage_forward.1} parent=123 // pred_region
        %p870 = scmp.lt.s32.totalorder %s70, 1
        %s871 = scalar_select %p870, %s70, 1
        %s872 = smul.addr %s871, 2
        %s873 = smul.addr %s872, 8
        %s874 = scalar_lea.vmem %s1, %s873
      $region128: #{mesh_refinement_stage_forward.1} parent=123 // pred_fallthru
        _
      // Predicated region
      $region129: #{mesh_refinement_stage_forward.1} parent=123 // pred_check
        %p875 = pneg %p116
      $region130: #{mesh_refinement_stage_forward.1} parent=123 // pred_check_branch
        %877 = sbr.rel (%p875) target = $region132
      $region131: #{mesh_refinement_stage_forward.1} parent=123 // pred_region
        %p878 = scmp.lt.s32.totalorder %s70, 1
        %s879 = scalar_select %p878, %s70, 1
        %s880 = smul.addr %s879, 2
        %s881 = smul.addr %s880, 8
        %s882 = scalar_lea.vmem %s3, %s881
      $region132: #{mesh_refinement_stage_forward.1} parent=123 // pred_fallthru
        _
      // Predicated region
      $region133: #{mesh_refinement_stage_forward.1} parent=123 // pred_check
        %p883 = pneg %p142
      $region134: #{mesh_refinement_stage_forward.1} parent=123 // pred_check_branch
        %885 = sbr.rel (%p883) target = $region136
      $region135: #{mesh_refinement_stage_forward.1} parent=123 // pred_region
        %p886 = scmp.lt.s32.totalorder %s70, 1
        %s887 = scalar_select %p886, %s70, 1
        %s888 = smul.addr %s887, 2
        %s889 = smul.addr %s888, 8
        %s890 = scalar_lea.vmem %s5, %s889
      $region136: #{mesh_refinement_stage_forward.1} parent=123 // pred_fallthru
        _
    $region124: #{mesh_refinement_stage_forward.1} parent=5 // pred_fallthru
      _
    %p891 = scmp.le.s32.totalorder 1, %s70
    %p892 = scmp.lt.s32.totalorder %s70, 3
    %p893 = pnand %p891, %p892
    %p894 = pneg %p893
    // Predicated region
    $region137: #{mesh_refinement_stage_forward.1} parent=5 // pred_check
      _
    $region138: #{mesh_refinement_stage_forward.1} parent=5 // pred_check_branch
      %896 = sbr.rel (%p893) target = $region140
    $region139: #{mesh_refinement_stage_forward.1} parent=5 // pred_region
      %s897 = ssub.s32 %s70, 1
      %p898 = scmp.lt.s32.totalorder %s75, 1
      %s899 = scalar_select %p898, %s75, 1
      %s900 = smul.addr %s899, 2
      %s901 = smul.addr %s900, 8
      %s902 = scalar_lea.vmem %s1, %s901
      %p903 = pneg %p96
      %p904 = pneg %p93
      %p905 = scmp.lt.s32.totalorder %s75, 1
      %s906 = scalar_select %p905, %s75, 1
      %s907 = smul.addr %s906, 2
      %s908 = smul.addr %s907, 8
      %s909 = scalar_lea.vmem %s3, %s908
      %p910 = pneg %p122
      %p911 = pneg %p119
      %p912 = scmp.lt.s32.totalorder %s75, 1
      %s913 = scalar_select %p912, %s75, 1
      %s914 = smul.addr %s913, 2
      %s915 = smul.addr %s914, 8
      %s916 = scalar_lea.vmem %s5, %s915
      %p917 = pneg %p148
      %p918 = pneg %p145
      %p919 = pneg %p169
      %p920 = pneg %p166
      %p921 = pneg %p190
      %p922 = pneg %p187
      %p923 = pneg %p211
      %p924 = pneg %p208
      %p925 = pneg %p232
      %p926 = pneg %p229
      %p927 = pneg %p253
      %p928 = pneg %p250
      %p929 = pneg %p274
      %p930 = pneg %p271
      %p931 = pneg %p295
      %p932 = pneg %p292
      %p933 = pneg %p316
      %p934 = pneg %p313
      %p935 = pneg %p337
      %p936 = pneg %p334
      %p937 = pneg %p358
      %p938 = pneg %p355
      %p939 = pneg %p379
      %p940 = pneg %p376
      %p941 = pneg %p400
      %p942 = pneg %p397
      %p943 = pneg %p421
      %p944 = pneg %p418
      %p945 = pneg %p442
      %p946 = pneg %p439
      %p947 = pneg %p463
      %p948 = pneg %p460
      %p949 = pneg %p484
      %p950 = pneg %p481
      %p951 = pneg %p505
      %p952 = pneg %p502
      %p953 = pneg %p526
      %p954 = pneg %p523
      %p955 = pneg %p547
      %p956 = pneg %p544
      %p957 = pneg %p568
      %p958 = pneg %p565
      %p959 = pneg %p589
      %p960 = pneg %p586
      %p961 = pneg %p610
      %p962 = pneg %p607
      %p963 = pneg %p631
      %p964 = pneg %p628
      %p965 = pneg %p652
      %p966 = pneg %p649
      %p967 = pneg %p673
      %p968 = pneg %p670
      %p969 = pneg %p694
      %p970 = pneg %p691
      %p971 = pneg %p715
      %p972 = pneg %p712
      %p973 = pneg %p741
      %p974 = pneg %p738
      %p975 = scmp.lt.s32.totalorder %s75, 1
      %s976 = scalar_select %p975, %s75, 1
      %s977 = smul.addr %s976, 2
      %s978 = smul.addr %s977, 8
      %s979 = scalar_lea.vmem %s61, %s978
      %p980 = pneg %p767
      %p981 = pneg %p764
      %p982 = scmp.lt.s32.totalorder %s75, 1
      %s983 = scalar_select %p982, %s75, 1
      %s984 = smul.addr %s983, 2
      %s985 = smul.addr %s984, 8
      %s986 = scalar_lea.vmem %s63, %s985
      %p987 = scmp.lt.s32.totalorder %s75, 1
      %s988 = scalar_select %p987, %s75, 1
      %s989 = smul.addr %s988, 2
      %s990 = smul.addr %s989, 8
      %s991 = scalar_lea.vmem %s1, %s990
      %p992 = scmp.lt.s32.totalorder %s75, 1
      %s993 = scalar_select %p992, %s75, 1
      %s994 = smul.addr %s993, 2
      %s995 = smul.addr %s994, 8
      %s996 = scalar_lea.vmem %s3, %s995
      %p997 = scmp.lt.s32.totalorder %s75, 1
      %s998 = scalar_select %p997, %s75, 1
      %s999 = smul.addr %s998, 2
      %s1000 = smul.addr %s999, 8
      %s1001 = scalar_lea.vmem %s5, %s1000
      %p1002 = scmp.lt.s32.totalorder %s75, 1
      %s1003 = scalar_select %p1002, %s75, 1
      %s1004 = smul.addr %s1003, 2
      %s1005 = smul.addr %s1004, 8
      %s1006 = scalar_lea.vmem %s61, %s1005
      %p1007 = scmp.lt.s32.totalorder %s75, 1
      %s1008 = scalar_select %p1007, %s75, 1
      %s1009 = smul.addr %s1008, 2
      %s1010 = smul.addr %s1009, 8
      %s1011 = scalar_lea.vmem %s63, %s1010
      %v1012 = vld [vmem:[%s1001] sm:$0xff]
      %v1013 = vld [vmem:[%s1001 + $0x8] sm:$0xf]
      %v1014 = vld [vmem:[%s996] sm:$0xff]
      %v1015 = vld [vmem:[%s996 + $0x8] sm:$0xf]
      %v1016 = vld [vmem:[%s991] sm:$0xff]
      %v1017 = vld [vmem:[%s991 + $0x8] sm:$0xf]
      %v1018 = vld [vmem:[%s7] sm:$0xff]
      %v1019 = vld [vmem:[%s7 + $0x8] sm:$0xff]
      %v1020 = vld [vmem:[%s7 + $0x10] sm:$0xff]
      %v1021 = vld [vmem:[%s7 + $0x18] sm:$0xff]
      %v1022 = vld [vmem:[%s7 + $0x20] sm:$0xf]
      %v1023 = vld [vmem:[%s9] sm:$0x1]
      %v1025 = vlaneseq
      %v1026 = vshrl.u32 %v1025, 7
      %v1027 = vsub.s32 0, %v1026
      %v1028 = vrot.slane %v1023, %v1027
      %vm1030 = vcmask 293888
      %v1032 = vsel %vm1030, %v1016, 0
      %v1035 = vsel %vm1030, %v1017, 0
      %vm1037 = vcmask 1043456
      %v1039 = vsel %vm1037, %v1022, 0
      %1041 = vmatprep.subr.mxu0 0.0
      %1042 = vmatpush1.msra.mxu0 %v1018
      %1043 = vmatprep.subr.mxu0 0.0
      %1044 = vmatpush1.msra.mxu0 %v1019
      %1045 = vmatprep.subr.mxu0 0.0
      %1046 = vmatpush1.msra.mxu0 %v1020
      %1047 = vmatprep.subr.mxu0 0.0
      %1048 = vmatpush1.msra.mxu0 %v1021
      %1049 = vmatprep.subr.mxu0 0.0
      %1050 = vmatpush1.msra.mxu0 %v1039
      %1051 = vmatprep.subr.mxu0 0.0
      %1052 = vmatpush1.msra.mxu0 0.0
      %1053 = vmatprep.subr.mxu0 0.0
      %1054 = vmatpush1.msra.mxu0 0.0
      %1055 = vmatprep.subr.mxu0 0.0
      %1056 = vmatpush1.msra.mxu0 0.0
      %1057 = vmatprep.subr.mxu0 0.0
      %1058 = vmatpush1.msra.mxu0 0.0
      %1059 = vmatprep.subr.mxu0 0.0
      %1060 = vmatpush1.msra.mxu0 0.0
      %1061 = vmatprep.subr.mxu0 0.0
      %1062 = vmatpush1.msra.mxu0 0.0
      %1063 = vmatprep.subr.mxu0 0.0
      %1064 = vmatpush1.msra.mxu0 0.0
      %1065 = vmatprep.subr.mxu0 0.0
      %1066 = vmatpush1.msra.mxu0 0.0
      %1067 = vmatprep.subr.mxu0 0.0
      %1068 = vmatpush1.msra.mxu0 0.0
      %1069 = vmatprep.subr.mxu0 0.0
      %1070 = vmatpush1.msra.mxu0 0.0
      %1071 = vmatprep.subr.mxu0 0.0
      %1072 = vmatpush1.msra.mxu0 0.0
      %1073 = vmatprep.subr.mxu0 0.0
      %1074 = vmatpush1.msra.mxu0 0.0
      %1075 = vmatprep.subr.mxu0 0.0
      %1076 = vmatpush1.msra.mxu0 0.0
      %1077 = vmatprep.subr.mxu0 0.0
      %1078 = vmatpush1.msra.mxu0 0.0
      %1079 = vmatprep.subr.mxu0 0.0
      %1080 = vmatpush1.msra.mxu0 0.0
      %1081 = vmatprep.subr.mxu0 0.0
      %1082 = vmatpush1.msra.mxu0 0.0
      %1083 = vmatprep.subr.mxu0 0.0
      %1084 = vmatpush1.msra.mxu0 0.0
      %1085 = vmatprep.subr.mxu0 0.0
      %1086 = vmatpush1.msra.mxu0 0.0
      %1087 = vmatprep.subr.mxu0 0.0
      %1088 = vmatpush1.msra.mxu0 0.0
      %1089 = vmatprep.subr.mxu0 0.0
      %1090 = vmatpush1.msra.mxu0 0.0
      %1091 = vmatprep.subr.mxu0 0.0
      %1092 = vmatpush1.msra.mxu0 0.0
      %1093 = vmatprep.subr.mxu0 0.0
      %1094 = vmatpush1.msra.mxu0 0.0
      %1095 = vmatprep.subr.mxu0 0.0
      %1096 = vmatpush1.msra.mxu0 0.0
      %1097 = vmatprep.subr.mxu0 0.0
      %1098 = vmatpush1.msra.mxu0 0.0
      %1099 = vmatprep.subr.mxu0 0.0
      %1100 = vmatpush1.msra.mxu0 0.0
      %1101 = vmatprep.subr.mxu0 0.0
      %1102 = vmatpush1.msra.mxu0 0.0
      %1103 = vmatprep.subr.mxu0 0.0
      %1104 = vmatpush1.msra.mxu0 0.0
      %1105 = vmatprep.mubr.f32.mxu0 0.0
      %1106 = vmatmul.mubr.f32.gmra.mrb[0].mxu0 %v1032
      %v1107 = vpop.f32.mrb[0].mxu0
      %v1108 = vadd.f32 %v1028, %v1107
      %v1109 = vpop.f32.mrb[0].mxu0
      %1110 = vmatprep.mubr.f32.mxu0 0.0
      %1111 = vmatmul.mubr.f32.gmra.mrb[0].mxu0 %v1035
      %v1112 = vpop.f32.mrb[0].mxu0
      %v1113 = vadd.f32 %v1028, %v1112
      %v1114 = vpop.f32.mrb[0].mxu0
      %1115 = vdwg.mxu0
      %v1116 = vmax.f32 %v1108, 0.0
      %v1117 = vmax.f32 %v1113, 0.0
      %v1118 = vmax.f32 %v1014, 0.0
      %v1119 = vmax.f32 %v1015, 0.0
      %v1120 = vld [vmem:[%s23] sm:$0x1]
      %v1121 = vld [vmem:[%s25] sm:$0x1]
      %v1122 = vld [vmem:[%s27] sm:$0x1]
      %v1123 = vld [vmem:[%s11] sm:$0xff]
      %v1124 = vld [vmem:[%s11 + $0x8] sm:$0xff]
      %v1125 = vld [vmem:[%s11 + $0x10] sm:$0xff]
      %v1126 = vld [vmem:[%s11 + $0x18] sm:$0xff]
      %vm1127 = vcmask 261120
      %v1129 = vsel %vm1127, %v1116, 0
      %v1132 = vsel %vm1127, %v1117, 0
      %1134 = vmatprep.subr.mxu0 0.0
      %1135 = vmatpush1.msra.mxu0 %v1123
      %1136 = vmatprep.subr.mxu0 0.0
      %1137 = vmatpush1.msra.mxu0 %v1124
      %1138 = vmatprep.subr.mxu0 0.0
      %1139 = vmatpush1.msra.mxu0 %v1125
      %1140 = vmatprep.subr.mxu0 0.0
      %1141 = vmatpush1.msra.mxu0 %v1126
      %1142 = vmatprep.subr.mxu0 0.0
      %1143 = vmatpush1.msra.mxu0 0.0
      %1144 = vmatprep.subr.mxu0 0.0
      %1145 = vmatpush1.msra.mxu0 0.0
      %1146 = vmatprep.subr.mxu0 0.0
      %1147 = vmatpush1.msra.mxu0 0.0
      %1148 = vmatprep.subr.mxu0 0.0
      %1149 = vmatpush1.msra.mxu0 0.0
      %1150 = vmatprep.subr.mxu0 0.0
      %1151 = vmatpush1.msra.mxu0 0.0
      %1152 = vmatprep.subr.mxu0 0.0
      %1153 = vmatpush1.msra.mxu0 0.0
      %1154 = vmatprep.subr.mxu0 0.0
      %1155 = vmatpush1.msra.mxu0 0.0
      %1156 = vmatprep.subr.mxu0 0.0
      %1157 = vmatpush1.msra.mxu0 0.0
      %1158 = vmatprep.subr.mxu0 0.0
      %1159 = vmatpush1.msra.mxu0 0.0
      %1160 = vmatprep.subr.mxu0 0.0
      %1161 = vmatpush1.msra.mxu0 0.0
      %1162 = vmatprep.subr.mxu0 0.0
      %1163 = vmatpush1.msra.mxu0 0.0
      %1164 = vmatprep.subr.mxu0 0.0
      %1165 = vmatpush1.msra.mxu0 0.0
      %1166 = vmatprep.subr.mxu0 0.0
      %1167 = vmatpush1.msra.mxu0 0.0
      %1168 = vmatprep.subr.mxu0 0.0
      %1169 = vmatpush1.msra.mxu0 0.0
      %1170 = vmatprep.subr.mxu0 0.0
      %1171 = vmatpush1.msra.mxu0 0.0
      %1172 = vmatprep.subr.mxu0 0.0
      %1173 = vmatpush1.msra.mxu0 0.0
      %1174 = vmatprep.subr.mxu0 0.0
      %1175 = vmatpush1.msra.mxu0 0.0
      %1176 = vmatprep.subr.mxu0 0.0
      %1177 = vmatpush1.msra.mxu0 0.0
      %1178 = vmatprep.subr.mxu0 0.0
      %1179 = vmatpush1.msra.mxu0 0.0
      %1180 = vmatprep.subr.mxu0 0.0
      %1181 = vmatpush1.msra.mxu0 0.0
      %1182 = vmatprep.subr.mxu0 0.0
      %1183 = vmatpush1.msra.mxu0 0.0
      %1184 = vmatprep.subr.mxu0 0.0
      %1185 = vmatpush1.msra.mxu0 0.0
      %1186 = vmatprep.subr.mxu0 0.0
      %1187 = vmatpush1.msra.mxu0 0.0
      %1188 = vmatprep.subr.mxu0 0.0
      %1189 = vmatpush1.msra.mxu0 0.0
      %1190 = vmatprep.subr.mxu0 0.0
      %1191 = vmatpush1.msra.mxu0 0.0
      %1192 = vmatprep.subr.mxu0 0.0
      %1193 = vmatpush1.msra.mxu0 0.0
      %1194 = vmatprep.subr.mxu0 0.0
      %1195 = vmatpush1.msra.mxu0 0.0
      %1196 = vmatprep.subr.mxu0 0.0
      %1197 = vmatpush1.msra.mxu0 0.0
      %1198 = vmatprep.mubr.f32.mxu0 0.0
      %1199 = vmatmul.mubr.f32.gmra.mrb[0].mxu0 %v1129
      %v1200 = vpop.f32.mrb[0].mxu0
      %v1201 = vadd.f32 0.0, %v1200
      %v1202 = vpop.f32.mrb[0].mxu0
      %1203 = vmatprep.mubr.f32.mxu0 0.0
      %1204 = vmatmul.mubr.f32.gmra.mrb[0].mxu0 %v1132
      %v1205 = vpop.f32.mrb[0].mxu0
      %v1206 = vadd.f32 0.0, %v1205
      %v1207 = vpop.f32.mrb[0].mxu0
      %1208 = vdwg.mxu0
      %v1210 = vlaneseq
      %v1211 = vshrl.u32 %v1210, 7
      %v1212 = vsub.s32 0, %v1211
      %v1213 = vrot.slane %v1120, %v1212
      %v1215 = vadd.f32 %v1213, %v1201
      %v1216 = vadd.f32 %v1213, %v1206
      %v1217 = vld [vmem:[%s13] sm:$0xff]
      %v1218 = vld [vmem:[%s13 + $0x8] sm:$0xff]
      %v1219 = vld [vmem:[%s13 + $0x10] sm:$0xff]
      %v1220 = vld [vmem:[%s13 + $0x18] sm:$0xff]
      %1221 = vmatprep.subr.mxu0 0.0
      %1222 = vmatpush1.msra.mxu0 %v1217
      %1223 = vmatprep.subr.mxu0 0.0
      %1224 = vmatpush1.msra.mxu0 %v1218
      %1225 = vmatprep.subr.mxu0 0.0
      %1226 = vmatpush1.msra.mxu0 %v1219
      %1227 = vmatprep.subr.mxu0 0.0
      %1228 = vmatpush1.msra.mxu0 %v1220
      %1229 = vmatprep.subr.mxu0 0.0
      %1230 = vmatpush1.msra.mxu0 0.0
      %1231 = vmatprep.subr.mxu0 0.0
      %1232 = vmatpush1.msra.mxu0 0.0
      %1233 = vmatprep.subr.mxu0 0.0
      %1234 = vmatpush1.msra.mxu0 0.0
      %1235 = vmatprep.subr.mxu0 0.0
      %1236 = vmatpush1.msra.mxu0 0.0
      %1237 = vmatprep.subr.mxu0 0.0
      %1238 = vmatpush1.msra.mxu0 0.0
      %1239 = vmatprep.subr.mxu0 0.0
      %1240 = vmatpush1.msra.mxu0 0.0
      %1241 = vmatprep.subr.mxu0 0.0
      %1242 = vmatpush1.msra.mxu0 0.0
      %1243 = vmatprep.subr.mxu0 0.0
      %1244 = vmatpush1.msra.mxu0 0.0
      %1245 = vmatprep.subr.mxu0 0.0
      %1246 = vmatpush1.msra.mxu0 0.0
      %1247 = vmatprep.subr.mxu0 0.0
      %1248 = vmatpush1.msra.mxu0 0.0
      %1249 = vmatprep.subr.mxu0 0.0
      %1250 = vmatpush1.msra.mxu0 0.0
      %1251 = vmatprep.subr.mxu0 0.0
      %1252 = vmatpush1.msra.mxu0 0.0
      %1253 = vmatprep.subr.mxu0 0.0
      %1254 = vmatpush1.msra.mxu0 0.0
      %1255 = vmatprep.subr.mxu0 0.0
      %1256 = vmatpush1.msra.mxu0 0.0
      %1257 = vmatprep.subr.mxu0 0.0
      %1258 = vmatpush1.msra.mxu0 0.0
      %1259 = vmatprep.subr.mxu0 0.0
      %1260 = vmatpush1.msra.mxu0 0.0
      %1261 = vmatprep.subr.mxu0 0.0
      %1262 = vmatpush1.msra.mxu0 0.0
      %1263 = vmatprep.subr.mxu0 0.0
      %1264 = vmatpush1.msra.mxu0 0.0
      %1265 = vmatprep.subr.mxu0 0.0
      %1266 = vmatpush1.msra.mxu0 0.0
      %1267 = vmatprep.subr.mxu0 0.0
      %1268 = vmatpush1.msra.mxu0 0.0
      %1269 = vmatprep.subr.mxu0 0.0
      %1270 = vmatpush1.msra.mxu0 0.0
      %1271 = vmatprep.subr.mxu0 0.0
      %1272 = vmatpush1.msra.mxu0 0.0
      %1273 = vmatprep.subr.mxu0 0.0
      %1274 = vmatpush1.msra.mxu0 0.0
      %1275 = vmatprep.subr.mxu0 0.0
      %1276 = vmatpush1.msra.mxu0 0.0
      %1277 = vmatprep.subr.mxu0 0.0
      %1278 = vmatpush1.msra.mxu0 0.0
      %1279 = vmatprep.subr.mxu0 0.0
      %1280 = vmatpush1.msra.mxu0 0.0
      %1281 = vmatprep.subr.mxu0 0.0
      %1282 = vmatpush1.msra.mxu0 0.0
      %1283 = vmatprep.subr.mxu0 0.0
      %1284 = vmatpush1.msra.mxu0 0.0
      %1285 = vmatprep.mubr.f32.mxu0 0.0
      %1286 = vmatmul.mubr.f32.gmra.mrb[0].mxu0 %v1129
      %v1287 = vpop.f32.mrb[0].mxu0
      %v1288 = vadd.f32 0.0, %v1287
      %v1289 = vpop.f32.mrb[0].mxu0
      %1290 = vmatprep.mubr.f32.mxu0 0.0
      %1291 = vmatmul.mubr.f32.gmra.mrb[0].mxu0 %v1132
      %v1292 = vpop.f32.mrb[0].mxu0
      %v1293 = vadd.f32 0.0, %v1292
      %v1294 = vpop.f32.mrb[0].mxu0
      %1295 = vdwg.mxu0
      %v1297 = vlaneseq
      %v1298 = vshrl.u32 %v1297, 7
      %v1299 = vsub.s32 0, %v1298
      %v1300 = vrot.slane %v1121, %v1299
      %v1302 = vadd.f32 %v1300, %v1288
      %v1303 = vadd.f32 %v1300, %v1293
      %v1304 = vld [vmem:[%s15] sm:$0xff]
      %v1305 = vld [vmem:[%s15 + $0x8] sm:$0xff]
      %v1306 = vld [vmem:[%s15 + $0x10] sm:$0xff]
      %v1307 = vld [vmem:[%s15 + $0x18] sm:$0xff]
      %1308 = vmatprep.subr.mxu0 0.0
      %1309 = vmatpush1.msra.mxu0 %v1304
      %1310 = vmatprep.subr.mxu0 0.0
      %1311 = vmatpush1.msra.mxu0 %v1305
      %1312 = vmatprep.subr.mxu0 0.0
      %1313 = vmatpush1.msra.mxu0 %v1306
      %1314 = vmatprep.subr.mxu0 0.0
      %1315 = vmatpush1.msra.mxu0 %v1307
      %1316 = vmatprep.subr.mxu0 0.0
      %1317 = vmatpush1.msra.mxu0 0.0
      %1318 = vmatprep.subr.mxu0 0.0
      %1319 = vmatpush1.msra.mxu0 0.0
      %1320 = vmatprep.subr.mxu0 0.0
      %1321 = vmatpush1.msra.mxu0 0.0
      %1322 = vmatprep.subr.mxu0 0.0
      %1323 = vmatpush1.msra.mxu0 0.0
      %1324 = vmatprep.subr.mxu0 0.0
      %1325 = vmatpush1.msra.mxu0 0.0
      %1326 = vmatprep.subr.mxu0 0.0
      %1327 = vmatpush1.msra.mxu0 0.0
      %1328 = vmatprep.subr.mxu0 0.0
      %1329 = vmatpush1.msra.mxu0 0.0
      %1330 = vmatprep.subr.mxu0 0.0
      %1331 = vmatpush1.msra.mxu0 0.0
      %1332 = vmatprep.subr.mxu0 0.0
      %1333 = vmatpush1.msra.mxu0 0.0
      %1334 = vmatprep.subr.mxu0 0.0
      %1335 = vmatpush1.msra.mxu0 0.0
      %1336 = vmatprep.subr.mxu0 0.0
      %1337 = vmatpush1.msra.mxu0 0.0
      %1338 = vmatprep.subr.mxu0 0.0
      %1339 = vmatpush1.msra.mxu0 0.0
      %1340 = vmatprep.subr.mxu0 0.0
      %1341 = vmatpush1.msra.mxu0 0.0
      %1342 = vmatprep.subr.mxu0 0.0
      %1343 = vmatpush1.msra.mxu0 0.0
      %1344 = vmatprep.subr.mxu0 0.0
      %1345 = vmatpush1.msra.mxu0 0.0
      %1346 = vmatprep.subr.mxu0 0.0
      %1347 = vmatpush1.msra.mxu0 0.0
      %1348 = vmatprep.subr.mxu0 0.0
      %1349 = vmatpush1.msra.mxu0 0.0
      %1350 = vmatprep.subr.mxu0 0.0
      %1351 = vmatpush1.msra.mxu0 0.0
      %1352 = vmatprep.subr.mxu0 0.0
      %1353 = vmatpush1.msra.mxu0 0.0
      %1354 = vmatprep.subr.mxu0 0.0
      %1355 = vmatpush1.msra.mxu0 0.0
      %1356 = vmatprep.subr.mxu0 0.0
      %1357 = vmatpush1.msra.mxu0 0.0
      %1358 = vmatprep.subr.mxu0 0.0
      %1359 = vmatpush1.msra.mxu0 0.0
      %1360 = vmatprep.subr.mxu0 0.0
      %1361 = vmatpush1.msra.mxu0 0.0
      %1362 = vmatprep.subr.mxu0 0.0
      %1363 = vmatpush1.msra.mxu0 0.0
      %1364 = vmatprep.subr.mxu0 0.0
      %1365 = vmatpush1.msra.mxu0 0.0
      %1366 = vmatprep.subr.mxu0 0.0
      %1367 = vmatpush1.msra.mxu0 0.0
      %1368 = vmatprep.subr.mxu0 0.0
      %1369 = vmatpush1.msra.mxu0 0.0
      %1370 = vmatprep.subr.mxu0 0.0
      %1371 = vmatpush1.msra.mxu0 0.0
      %1372 = vmatprep.mubr.f32.mxu0 0.0
      %1373 = vmatmul.mubr.f32.gmra.mrb[0].mxu0 %v1129
      %v1374 = vpop.f32.mrb[0].mxu0
      %v1375 = vadd.f32 0.0, %v1374
      %v1376 = vpop.f32.mrb[0].mxu0
      %1377 = vmatprep.mubr.f32.mxu0 0.0
      %1378 = vmatmul.mubr.f32.gmra.mrb[0].mxu0 %v1132
      %v1379 = vpop.f32.mrb[0].mxu0
      %v1380 = vadd.f32 0.0, %v1379
      %v1381 = vpop.f32.mrb[0].mxu0
      %1382 = vdwg.mxu0
      %v1384 = vlaneseq
      %v1385 = vshrl.u32 %v1384, 7
      %v1386 = vsub.s32 0, %v1385
      %v1387 = vrot.slane %v1122, %v1386
      %v1389 = vadd.f32 %v1387, %v1375
      %v1390 = vadd.f32 %v1387, %v1380
      %v1391 = vld [vmem:[%s17] sm:$0x7]
      %vm1392 = vcmask 23552
      %v1394 = vsel %vm1392, %v1118, 0
      %v1397 = vsel %vm1392, %v1119, 0
      %vm1399 = vcmask 1042432
      %v1401 = vsel %vm1399, %v1391, 0
      %1403 = vmatprep.subr.mxu0 0.0
      %1404 = vmatpush1.msra.mxu0 %v1401
      %1405 = vmatprep.subr.mxu0 0.0
      %1406 = vmatpush1.msra.mxu0 0.0
      %1407 = vmatprep.subr.mxu0 0.0
      %1408 = vmatpush1.msra.mxu0 0.0
      %1409 = vmatprep.subr.mxu0 0.0
      %1410 = vmatpush1.msra.mxu0 0.0
      %1411 = vmatprep.subr.mxu0 0.0
      %1412 = vmatpush1.msra.mxu0 0.0
      %1413 = vmatprep.subr.mxu0 0.0
      %1414 = vmatpush1.msra.mxu0 0.0
      %1415 = vmatprep.subr.mxu0 0.0
      %1416 = vmatpush1.msra.mxu0 0.0
      %1417 = vmatprep.subr.mxu0 0.0
      %1418 = vmatpush1.msra.mxu0 0.0
      %1419 = vmatprep.subr.mxu0 0.0
      %1420 = vmatpush1.msra.mxu0 0.0
      %1421 = vmatprep.subr.mxu0 0.0
      %1422 = vmatpush1.msra.mxu0 0.0
      %1423 = vmatprep.subr.mxu0 0.0
      %1424 = vmatpush1.msra.mxu0 0.0
      %1425 = vmatprep.subr.mxu0 0.0
      %1426 = vmatpush1.msra.mxu0 0.0
      %1427 = vmatprep.subr.mxu0 0.0
      %1428 = vmatpush1.msra.mxu0 0.0
      %1429 = vmatprep.subr.mxu0 0.0
      %1430 = vmatpush1.msra.mxu0 0.0
      %1431 = vmatprep.subr.mxu0 0.0
      %1432 = vmatpush1.msra.mxu0 0.0
      %1433 = vmatprep.subr.mxu0 0.0
      %1434 = vmatpush1.msra.mxu0 0.0
      %1435 = vmatprep.subr.mxu0 0.0
      %1436 = vmatpush1.msra.mxu0 0.0
      %1437 = vmatprep.subr.mxu0 0.0
      %1438 = vmatpush1.msra.mxu0 0.0
      %1439 = vmatprep.subr.mxu0 0.0
      %1440 = vmatpush1.msra.mxu0 0.0
      %1441 = vmatprep.subr.mxu0 0.0
      %1442 = vmatpush1.msra.mxu0 0.0
      %1443 = vmatprep.subr.mxu0 0.0
      %1444 = vmatpush1.msra.mxu0 0.0
      %1445 = vmatprep.subr.mxu0 0.0
      %1446 = vmatpush1.msra.mxu0 0.0
      %1447 = vmatprep.subr.mxu0 0.0
      %1448 = vmatpush1.msra.mxu0 0.0
      %1449 = vmatprep.subr.mxu0 0.0
      %1450 = vmatpush1.msra.mxu0 0.0
      %1451 = vmatprep.subr.mxu0 0.0
      %1452 = vmatpush1.msra.mxu0 0.0
      %1453 = vmatprep.subr.mxu0 0.0
      %1454 = vmatpush1.msra.mxu0 0.0
      %1455 = vmatprep.subr.mxu0 0.0
      %1456 = vmatpush1.msra.mxu0 0.0
      %1457 = vmatprep.subr.mxu0 0.0
      %1458 = vmatpush1.msra.mxu0 0.0
      %1459 = vmatprep.subr.mxu0 0.0
      %1460 = vmatpush1.msra.mxu0 0.0
      %1461 = vmatprep.subr.mxu0 0.0
      %1462 = vmatpush1.msra.mxu0 0.0
      %1463 = vmatprep.subr.mxu0 0.0
      %1464 = vmatpush1.msra.mxu0 0.0
      %1465 = vmatprep.subr.mxu0 0.0
      %1466 = vmatpush1.msra.mxu0 0.0
      %1467 = vmatprep.mubr.f32.mxu0 0.0
      %1468 = vmatmul.mubr.f32.gmra.mrb[0].mxu0 %v1394
      %v1469 = vpop.f32.mrb[0].mxu0
      %v1470 = vadd.f32 0.0, %v1469
      %v1471 = vpop.f32.mrb[0].mxu0
      %1472 = vmatprep.mubr.f32.mxu0 0.0
      %1473 = vmatmul.mubr.f32.gmra.mrb[0].mxu0 %v1397
      %v1474 = vpop.f32.mrb[0].mxu0
      %v1475 = vadd.f32 0.0, %v1474
      %v1476 = vpop.f32.mrb[0].mxu0
      %1477 = vdwg.mxu0
      %v1478 = vadd.f32 %v1215, %v1470
      %v1479 = vadd.f32 %v1216, %v1475
      %v1480 = vld [vmem:[%s19] sm:$0x7]
      %v1482 = vsel %vm1399, %v1480, 0
      %1484 = vmatprep.subr.mxu0 0.0
      %1485 = vmatpush1.msra.mxu0 %v1482
      %1486 = vmatprep.subr.mxu0 0.0
      %1487 = vmatpush1.msra.mxu0 0.0
      %1488 = vmatprep.subr.mxu0 0.0
      %1489 = vmatpush1.msra.mxu0 0.0
      %1490 = vmatprep.subr.mxu0 0.0
      %1491 = vmatpush1.msra.mxu0 0.0
      %1492 = vmatprep.subr.mxu0 0.0
      %1493 = vmatpush1.msra.mxu0 0.0
      %1494 = vmatprep.subr.mxu0 0.0
      %1495 = vmatpush1.msra.mxu0 0.0
      %1496 = vmatprep.subr.mxu0 0.0
      %1497 = vmatpush1.msra.mxu0 0.0
      %1498 = vmatprep.subr.mxu0 0.0
      %1499 = vmatpush1.msra.mxu0 0.0
      %1500 = vmatprep.subr.mxu0 0.0
      %1501 = vmatpush1.msra.mxu0 0.0
      %1502 = vmatprep.subr.mxu0 0.0
      %1503 = vmatpush1.msra.mxu0 0.0
      %1504 = vmatprep.subr.mxu0 0.0
      %1505 = vmatpush1.msra.mxu0 0.0
      %1506 = vmatprep.subr.mxu0 0.0
      %1507 = vmatpush1.msra.mxu0 0.0
      %1508 = vmatprep.subr.mxu0 0.0
      %1509 = vmatpush1.msra.mxu0 0.0
      %1510 = vmatprep.subr.mxu0 0.0
      %1511 = vmatpush1.msra.mxu0 0.0
      %1512 = vmatprep.subr.mxu0 0.0
      %1513 = vmatpush1.msra.mxu0 0.0
      %1514 = vmatprep.subr.mxu0 0.0
      %1515 = vmatpush1.msra.mxu0 0.0
      %1516 = vmatprep.subr.mxu0 0.0
      %1517 = vmatpush1.msra.mxu0 0.0
      %1518 = vmatprep.subr.mxu0 0.0
      %1519 = vmatpush1.msra.mxu0 0.0
      %1520 = vmatprep.subr.mxu0 0.0
      %1521 = vmatpush1.msra.mxu0 0.0
      %1522 = vmatprep.subr.mxu0 0.0
      %1523 = vmatpush1.msra.mxu0 0.0
      %1524 = vmatprep.subr.mxu0 0.0
      %1525 = vmatpush1.msra.mxu0 0.0
      %1526 = vmatprep.subr.mxu0 0.0
      %1527 = vmatpush1.msra.mxu0 0.0
      %1528 = vmatprep.subr.mxu0 0.0
      %1529 = vmatpush1.msra.mxu0 0.0
      %1530 = vmatprep.subr.mxu0 0.0
      %1531 = vmatpush1.msra.mxu0 0.0
      %1532 = vmatprep.subr.mxu0 0.0
      %1533 = vmatpush1.msra.mxu0 0.0
      %1534 = vmatprep.subr.mxu0 0.0
      %1535 = vmatpush1.msra.mxu0 0.0
      %1536 = vmatprep.subr.mxu0 0.0
      %1537 = vmatpush1.msra.mxu0 0.0
      %1538 = vmatprep.subr.mxu0 0.0
      %1539 = vmatpush1.msra.mxu0 0.0
      %1540 = vmatprep.subr.mxu0 0.0
      %1541 = vmatpush1.msra.mxu0 0.0
      %1542 = vmatprep.subr.mxu0 0.0
      %1543 = vmatpush1.msra.mxu0 0.0
      %1544 = vmatprep.subr.mxu0 0.0
      %1545 = vmatpush1.msra.mxu0 0.0
      %1546 = vmatprep.subr.mxu0 0.0
      %1547 = vmatpush1.msra.mxu0 0.0
      %1548 = vmatprep.mubr.f32.mxu0 0.0
      %1549 = vmatmul.mubr.f32.gmra.mrb[0].mxu0 %v1394
      %v1550 = vpop.f32.mrb[0].mxu0
      %v1551 = vadd.f32 0.0, %v1550
      %v1552 = vpop.f32.mrb[0].mxu0
      %1553 = vmatprep.mubr.f32.mxu0 0.0
      %1554 = vmatmul.mubr.f32.gmra.mrb[0].mxu0 %v1397
      %v1555 = vpop.f32.mrb[0].mxu0
      %v1556 = vadd.f32 0.0, %v1555
      %v1557 = vpop.f32.mrb[0].mxu0
      %1558 = vdwg.mxu0
      %v1559 = vadd.f32 %v1302, %v1551
      %v1560 = vadd.f32 %v1303, %v1556
      %v1561 = vld [vmem:[%s21] sm:$0x7]
      %v1563 = vsel %vm1399, %v1561, 0
      %1565 = vmatprep.subr.mxu0 0.0
      %1566 = vmatpush1.msra.mxu0 %v1563
      %1567 = vmatprep.subr.mxu0 0.0
      %1568 = vmatpush1.msra.mxu0 0.0
      %1569 = vmatprep.subr.mxu0 0.0
      %1570 = vmatpush1.msra.mxu0 0.0
      %1571 = vmatprep.subr.mxu0 0.0
      %1572 = vmatpush1.msra.mxu0 0.0
      %1573 = vmatprep.subr.mxu0 0.0
      %1574 = vmatpush1.msra.mxu0 0.0
      %1575 = vmatprep.subr.mxu0 0.0
      %1576 = vmatpush1.msra.mxu0 0.0
      %1577 = vmatprep.subr.mxu0 0.0
      %1578 = vmatpush1.msra.mxu0 0.0
      %1579 = vmatprep.subr.mxu0 0.0
      %1580 = vmatpush1.msra.mxu0 0.0
      %1581 = vmatprep.subr.mxu0 0.0
      %1582 = vmatpush1.msra.mxu0 0.0
      %1583 = vmatprep.subr.mxu0 0.0
      %1584 = vmatpush1.msra.mxu0 0.0
      %1585 = vmatprep.subr.mxu0 0.0
      %1586 = vmatpush1.msra.mxu0 0.0
      %1587 = vmatprep.subr.mxu0 0.0
      %1588 = vmatpush1.msra.mxu0 0.0
      %1589 = vmatprep.subr.mxu0 0.0
      %1590 = vmatpush1.msra.mxu0 0.0
      %1591 = vmatprep.subr.mxu0 0.0
      %1592 = vmatpush1.msra.mxu0 0.0
      %1593 = vmatprep.subr.mxu0 0.0
      %1594 = vmatpush1.msra.mxu0 0.0
      %1595 = vmatprep.subr.mxu0 0.0
      %1596 = vmatpush1.msra.mxu0 0.0
      %1597 = vmatprep.subr.mxu0 0.0
      %1598 = vmatpush1.msra.mxu0 0.0
      %1599 = vmatprep.subr.mxu0 0.0
      %1600 = vmatpush1.msra.mxu0 0.0
      %1601 = vmatprep.subr.mxu0 0.0
      %1602 = vmatpush1.msra.mxu0 0.0
      %1603 = vmatprep.subr.mxu0 0.0
      %1604 = vmatpush1.msra.mxu0 0.0
      %1605 = vmatprep.subr.mxu0 0.0
      %1606 = vmatpush1.msra.mxu0 0.0
      %1607 = vmatprep.subr.mxu0 0.0
      %1608 = vmatpush1.msra.mxu0 0.0
      %1609 = vmatprep.subr.mxu0 0.0
      %1610 = vmatpush1.msra.mxu0 0.0
      %1611 = vmatprep.subr.mxu0 0.0
      %1612 = vmatpush1.msra.mxu0 0.0
      %1613 = vmatprep.subr.mxu0 0.0
      %1614 = vmatpush1.msra.mxu0 0.0
      %1615 = vmatprep.subr.mxu0 0.0
      %1616 = vmatpush1.msra.mxu0 0.0
      %1617 = vmatprep.subr.mxu0 0.0
      %1618 = vmatpush1.msra.mxu0 0.0
      %1619 = vmatprep.subr.mxu0 0.0
      %1620 = vmatpush1.msra.mxu0 0.0
      %1621 = vmatprep.subr.mxu0 0.0
      %1622 = vmatpush1.msra.mxu0 0.0
      %1623 = vmatprep.subr.mxu0 0.0
      %1624 = vmatpush1.msra.mxu0 0.0
      %1625 = vmatprep.subr.mxu0 0.0
      %1626 = vmatpush1.msra.mxu0 0.0
      %1627 = vmatprep.subr.mxu0 0.0
      %1628 = vmatpush1.msra.mxu0 0.0
      %1629 = vmatprep.mubr.f32.mxu0 0.0
      %1630 = vmatmul.mubr.f32.gmra.mrb[0].mxu0 %v1394
      %v1631 = vpop.f32.mrb[0].mxu0
      %v1632 = vadd.f32 0.0, %v1631
      %v1633 = vpop.f32.mrb[0].mxu0
      %1634 = vmatprep.mubr.f32.mxu0 0.0
      %1635 = vmatmul.mubr.f32.gmra.mrb[0].mxu0 %v1397
      %v1636 = vpop.f32.mrb[0].mxu0
      %v1637 = vadd.f32 0.0, %v1636
      %v1638 = vpop.f32.mrb[0].mxu0
      %1639 = vdwg.mxu0
      %v1640 = vadd.f32 %v1389, %v1632
      %v1641 = vadd.f32 %v1390, %v1637
      %vm1642 = vcmask 97280
      %v1644 = vsel %vm1642, %v1012, 0
      %v1647 = vsel %vm1642, %v1013, 0
      %v1650 = vsel %vm1037, %v1560, 0
      %1652 = vmatprep.subr.mxu0 0.0
      %1653 = vmatpush1.msra.mxu0 %v1559
      %1654 = vmatprep.subr.mxu0 0.0
      %1655 = vmatpush1.msra.mxu0 %v1650
      %1656 = vmatprep.subr.mxu0 0.0
      %1657 = vmatpush1.msra.mxu0 0.0
      %1658 = vmatprep.subr.mxu0 0.0
      %1659 = vmatpush1.msra.mxu0 0.0
      %1660 = vmatprep.subr.mxu0 0.0
      %1661 = vmatpush1.msra.mxu0 0.0
      %1662 = vmatprep.subr.mxu0 0.0
      %1663 = vmatpush1.msra.mxu0 0.0
      %1664 = vmatprep.subr.mxu0 0.0
      %1665 = vmatpush1.msra.mxu0 0.0
      %1666 = vmatprep.subr.mxu0 0.0
      %1667 = vmatpush1.msra.mxu0 0.0
      %1668 = vmatprep.subr.mxu0 0.0
      %1669 = vmatpush1.msra.mxu0 0.0
      %1670 = vmatprep.subr.mxu0 0.0
      %1671 = vmatpush1.msra.mxu0 0.0
      %1672 = vmatprep.subr.mxu0 0.0
      %1673 = vmatpush1.msra.mxu0 0.0
      %1674 = vmatprep.subr.mxu0 0.0
      %1675 = vmatpush1.msra.mxu0 0.0
      %1676 = vmatprep.subr.mxu0 0.0
      %1677 = vmatpush1.msra.mxu0 0.0
      %1678 = vmatprep.subr.mxu0 0.0
      %1679 = vmatpush1.msra.mxu0 0.0
      %1680 = vmatprep.subr.mxu0 0.0
      %1681 = vmatpush1.msra.mxu0 0.0
      %1682 = vmatprep.subr.mxu0 0.0
      %1683 = vmatpush1.msra.mxu0 0.0
      %1684 = vmatprep.subr.mxu0 0.0
      %1685 = vmatpush1.msra.mxu0 0.0
      %1686 = vmatprep.subr.mxu0 0.0
      %1687 = vmatpush1.msra.mxu0 0.0
      %1688 = vmatprep.subr.mxu0 0.0
      %1689 = vmatpush1.msra.mxu0 0.0
      %1690 = vmatprep.subr.mxu0 0.0
      %1691 = vmatpush1.msra.mxu0 0.0
      %1692 = vmatprep.subr.mxu0 0.0
      %1693 = vmatpush1.msra.mxu0 0.0
      %1694 = vmatprep.subr.mxu0 0.0
      %1695 = vmatpush1.msra.mxu0 0.0
      %1696 = vmatprep.subr.mxu0 0.0
      %1697 = vmatpush1.msra.mxu0 0.0
      %1698 = vmatprep.subr.mxu0 0.0
      %1699 = vmatpush1.msra.mxu0 0.0
      %1700 = vmatprep.subr.mxu0 0.0
      %1701 = vmatpush1.msra.mxu0 0.0
      %1702 = vmatprep.subr.mxu0 0.0
      %1703 = vmatpush1.msra.mxu0 0.0
      %1704 = vmatprep.subr.mxu0 0.0
      %1705 = vmatpush1.msra.mxu0 0.0
      %1706 = vmatprep.subr.mxu0 0.0
      %1707 = vmatpush1.msra.mxu0 0.0
      %1708 = vmatprep.subr.mxu0 0.0
      %1709 = vmatpush1.msra.mxu0 0.0
      %1710 = vmatprep.subr.mxu0 0.0
      %1711 = vmatpush1.msra.mxu0 0.0
      %1712 = vmatprep.subr.mxu0 0.0
      %1713 = vmatpush1.msra.mxu0 0.0
      %1714 = vmatprep.subr.mxu0 0.0
      %1715 = vmatpush1.msra.mxu0 0.0
      %1716 = vmatprep.mubr.f32.mxu0 0.0
      %1717 = vmatmul.mubr.f32.gmra.mrb[0].mxu0 %v1644
      %v1718 = vpop.f32.mrb[0].mxu0
      %v1719 = vadd.f32 0.0, %v1718
      %v1720 = vpop.f32.mrb[0].mxu0
      %1721 = vmatprep.mubr.f32.mxu0 0.0
      %1722 = vmatmul.mubr.f32.gmra.mrb[0].mxu0 %v1647
      %v1723 = vpop.f32.mrb[0].mxu0
      %v1724 = vadd.f32 0.0, %v1723
      %v1725 = vpop.f32.mrb[0].mxu0
      %1726 = vdwg.mxu0
      %v1727 = vadd.f32 %v1478, %v1719
      %v1728 = vadd.f32 %v1479, %v1724
      %v1729 = vmax.f32 %v1727, 0.0
      %v1730 = vmax.f32 %v1728, 0.0
      %v1731 = vld [vmem:[%s29] sm:$0xff]
      %v1732 = vld [vmem:[%s29 + $0x8] sm:$0xff]
      %v1733 = vld [vmem:[%s29 + $0x10] sm:$0xff]
      %v1734 = vld [vmem:[%s29 + $0x18] sm:$0xff]
      %v1735 = vld [vmem:[%s31] sm:$0x1]
      %v1737 = vlaneseq
      %v1738 = vshrl.u32 %v1737, 7
      %v1739 = vsub.s32 0, %v1738
      %v1740 = vrot.slane %v1735, %v1739
      %v1743 = vsel %vm1127, %v1729, 0
      %v1746 = vsel %vm1127, %v1730, 0
      %1748 = vmatprep.subr.mxu0 0.0
      %1749 = vmatpush1.msra.mxu0 %v1731
      %1750 = vmatprep.subr.mxu0 0.0
      %1751 = vmatpush1.msra.mxu0 %v1732
      %1752 = vmatprep.subr.mxu0 0.0
      %1753 = vmatpush1.msra.mxu0 %v1733
      %1754 = vmatprep.subr.mxu0 0.0
      %1755 = vmatpush1.msra.mxu0 %v1734
      %1756 = vmatprep.subr.mxu0 0.0
      %1757 = vmatpush1.msra.mxu0 0.0
      %1758 = vmatprep.subr.mxu0 0.0
      %1759 = vmatpush1.msra.mxu0 0.0
      %1760 = vmatprep.subr.mxu0 0.0
      %1761 = vmatpush1.msra.mxu0 0.0
      %1762 = vmatprep.subr.mxu0 0.0
      %1763 = vmatpush1.msra.mxu0 0.0
      %1764 = vmatprep.subr.mxu0 0.0
      %1765 = vmatpush1.msra.mxu0 0.0
      %1766 = vmatprep.subr.mxu0 0.0
      %1767 = vmatpush1.msra.mxu0 0.0
      %1768 = vmatprep.subr.mxu0 0.0
      %1769 = vmatpush1.msra.mxu0 0.0
      %1770 = vmatprep.subr.mxu0 0.0
      %1771 = vmatpush1.msra.mxu0 0.0
      %1772 = vmatprep.subr.mxu0 0.0
      %1773 = vmatpush1.msra.mxu0 0.0
      %1774 = vmatprep.subr.mxu0 0.0
      %1775 = vmatpush1.msra.mxu0 0.0
      %1776 = vmatprep.subr.mxu0 0.0
      %1777 = vmatpush1.msra.mxu0 0.0
      %1778 = vmatprep.subr.mxu0 0.0
      %1779 = vmatpush1.msra.mxu0 0.0
      %1780 = vmatprep.subr.mxu0 0.0
      %1781 = vmatpush1.msra.mxu0 0.0
      %1782 = vmatprep.subr.mxu0 0.0
      %1783 = vmatpush1.msra.mxu0 0.0
      %1784 = vmatprep.subr.mxu0 0.0
      %1785 = vmatpush1.msra.mxu0 0.0
      %1786 = vmatprep.subr.mxu0 0.0
      %1787 = vmatpush1.msra.mxu0 0.0
      %1788 = vmatprep.subr.mxu0 0.0
      %1789 = vmatpush1.msra.mxu0 0.0
      %1790 = vmatprep.subr.mxu0 0.0
      %1791 = vmatpush1.msra.mxu0 0.0
      %1792 = vmatprep.subr.mxu0 0.0
      %1793 = vmatpush1.msra.mxu0 0.0
      %1794 = vmatprep.subr.mxu0 0.0
      %1795 = vmatpush1.msra.mxu0 0.0
      %1796 = vmatprep.subr.mxu0 0.0
      %1797 = vmatpush1.msra.mxu0 0.0
      %1798 = vmatprep.subr.mxu0 0.0
      %1799 = vmatpush1.msra.mxu0 0.0
      %1800 = vmatprep.subr.mxu0 0.0
      %1801 = vmatpush1.msra.mxu0 0.0
      %1802 = vmatprep.subr.mxu0 0.0
      %1803 = vmatpush1.msra.mxu0 0.0
      %1804 = vmatprep.subr.mxu0 0.0
      %1805 = vmatpush1.msra.mxu0 0.0
      %1806 = vmatprep.subr.mxu0 0.0
      %1807 = vmatpush1.msra.mxu0 0.0
      %1808 = vmatprep.subr.mxu0 0.0
      %1809 = vmatpush1.msra.mxu0 0.0
      %1810 = vmatprep.subr.mxu0 0.0
      %1811 = vmatpush1.msra.mxu0 0.0
      %1812 = vmatprep.mubr.f32.mxu0 0.0
      %1813 = vmatmul.mubr.f32.gmra.mrb[0].mxu0 %v1743
      %v1814 = vpop.f32.mrb[0].mxu0
      %v1815 = vadd.f32 %v1740, %v1814
      %v1816 = vpop.f32.mrb[0].mxu0
      %1817 = vmatprep.mubr.f32.mxu0 0.0
      %1818 = vmatmul.mubr.f32.gmra.mrb[0].mxu0 %v1746
      %v1819 = vpop.f32.mrb[0].mxu0
      %v1820 = vadd.f32 %v1740, %v1819
      %v1821 = vpop.f32.mrb[0].mxu0
      %1822 = vdwg.mxu0
      %v1823 = vld [vmem:[%s33] sm:$0xff]
      %v1824 = vld [vmem:[%s33 + $0x8] sm:$0xff]
      %v1825 = vld [vmem:[%s33 + $0x10] sm:$0xff]
      %v1826 = vld [vmem:[%s33 + $0x18] sm:$0xff]
      %v1827 = vld [vmem:[%s35] sm:$0x1]
      %v1829 = vlaneseq
      %v1830 = vshrl.u32 %v1829, 7
      %v1831 = vsub.s32 0, %v1830
      %v1832 = vrot.slane %v1827, %v1831
      %1834 = vmatprep.subr.mxu0 0.0
      %1835 = vmatpush1.msra.mxu0 %v1823
      %1836 = vmatprep.subr.mxu0 0.0
      %1837 = vmatpush1.msra.mxu0 %v1824
      %1838 = vmatprep.subr.mxu0 0.0
      %1839 = vmatpush1.msra.mxu0 %v1825
      %1840 = vmatprep.subr.mxu0 0.0
      %1841 = vmatpush1.msra.mxu0 %v1826
      %1842 = vmatprep.subr.mxu0 0.0
      %1843 = vmatpush1.msra.mxu0 0.0
      %1844 = vmatprep.subr.mxu0 0.0
      %1845 = vmatpush1.msra.mxu0 0.0
      %1846 = vmatprep.subr.mxu0 0.0
      %1847 = vmatpush1.msra.mxu0 0.0
      %1848 = vmatprep.subr.mxu0 0.0
      %1849 = vmatpush1.msra.mxu0 0.0
      %1850 = vmatprep.subr.mxu0 0.0
      %1851 = vmatpush1.msra.mxu0 0.0
      %1852 = vmatprep.subr.mxu0 0.0
      %1853 = vmatpush1.msra.mxu0 0.0
      %1854 = vmatprep.subr.mxu0 0.0
      %1855 = vmatpush1.msra.mxu0 0.0
      %1856 = vmatprep.subr.mxu0 0.0
      %1857 = vmatpush1.msra.mxu0 0.0
      %1858 = vmatprep.subr.mxu0 0.0
      %1859 = vmatpush1.msra.mxu0 0.0
      %1860 = vmatprep.subr.mxu0 0.0
      %1861 = vmatpush1.msra.mxu0 0.0
      %1862 = vmatprep.subr.mxu0 0.0
      %1863 = vmatpush1.msra.mxu0 0.0
      %1864 = vmatprep.subr.mxu0 0.0
      %1865 = vmatpush1.msra.mxu0 0.0
      %1866 = vmatprep.subr.mxu0 0.0
      %1867 = vmatpush1.msra.mxu0 0.0
      %1868 = vmatprep.subr.mxu0 0.0
      %1869 = vmatpush1.msra.mxu0 0.0
      %1870 = vmatprep.subr.mxu0 0.0
      %1871 = vmatpush1.msra.mxu0 0.0
      %1872 = vmatprep.subr.mxu0 0.0
      %1873 = vmatpush1.msra.mxu0 0.0
      %1874 = vmatprep.subr.mxu0 0.0
      %1875 = vmatpush1.msra.mxu0 0.0
      %1876 = vmatprep.subr.mxu0 0.0
      %1877 = vmatpush1.msra.mxu0 0.0
      %1878 = vmatprep.subr.mxu0 0.0
      %1879 = vmatpush1.msra.mxu0 0.0
      %1880 = vmatprep.subr.mxu0 0.0
      %1881 = vmatpush1.msra.mxu0 0.0
      %1882 = vmatprep.subr.mxu0 0.0
      %1883 = vmatpush1.msra.mxu0 0.0
      %1884 = vmatprep.subr.mxu0 0.0
      %1885 = vmatpush1.msra.mxu0 0.0
      %1886 = vmatprep.subr.mxu0 0.0
      %1887 = vmatpush1.msra.mxu0 0.0
      %1888 = vmatprep.subr.mxu0 0.0
      %1889 = vmatpush1.msra.mxu0 0.0
      %1890 = vmatprep.subr.mxu0 0.0
      %1891 = vmatpush1.msra.mxu0 0.0
      %1892 = vmatprep.subr.mxu0 0.0
      %1893 = vmatpush1.msra.mxu0 0.0
      %1894 = vmatprep.subr.mxu0 0.0
      %1895 = vmatpush1.msra.mxu0 0.0
      %1896 = vmatprep.subr.mxu0 0.0
      %1897 = vmatpush1.msra.mxu0 0.0
      %1898 = vmatprep.mubr.f32.mxu0 0.0
      %1899 = vmatmul.mubr.f32.gmra.mrb[0].mxu0 %v1743
      %v1900 = vpop.f32.mrb[0].mxu0
      %v1901 = vadd.f32 %v1832, %v1900
      %v1902 = vpop.f32.mrb[0].mxu0
      %1903 = vmatprep.mubr.f32.mxu0 0.0
      %1904 = vmatmul.mubr.f32.gmra.mrb[0].mxu0 %v1746
      %v1905 = vpop.f32.mrb[0].mxu0
      %v1906 = vadd.f32 %v1832, %v1905
      %v1907 = vpop.f32.mrb[0].mxu0
      %1908 = vdwg.mxu0
      %v1910 = vsel %vm1037, %v1906, 0
      %1912 = vmatprep.subr.mxu0 0.0
      %1913 = vmatpush1.msra.mxu0 %v1901
      %1914 = vmatprep.subr.mxu0 0.0
      %1915 = vmatpush1.msra.mxu0 %v1910
      %1916 = vmatprep.subr.mxu0 0.0
      %1917 = vmatpush1.msra.mxu0 0.0
      %1918 = vmatprep.subr.mxu0 0.0
      %1919 = vmatpush1.msra.mxu0 0.0
      %1920 = vmatprep.subr.mxu0 0.0
      %1921 = vmatpush1.msra.mxu0 0.0
      %1922 = vmatprep.subr.mxu0 0.0
      %1923 = vmatpush1.msra.mxu0 0.0
      %1924 = vmatprep.subr.mxu0 0.0
      %1925 = vmatpush1.msra.mxu0 0.0
      %1926 = vmatprep.subr.mxu0 0.0
      %1927 = vmatpush1.msra.mxu0 0.0
      %1928 = vmatprep.subr.mxu0 0.0
      %1929 = vmatpush1.msra.mxu0 0.0
      %1930 = vmatprep.subr.mxu0 0.0
      %1931 = vmatpush1.msra.mxu0 0.0
      %1932 = vmatprep.subr.mxu0 0.0
      %1933 = vmatpush1.msra.mxu0 0.0
      %1934 = vmatprep.subr.mxu0 0.0
      %1935 = vmatpush1.msra.mxu0 0.0
      %1936 = vmatprep.subr.mxu0 0.0
      %1937 = vmatpush1.msra.mxu0 0.0
      %1938 = vmatprep.subr.mxu0 0.0
      %1939 = vmatpush1.msra.mxu0 0.0
      %1940 = vmatprep.subr.mxu0 0.0
      %1941 = vmatpush1.msra.mxu0 0.0
      %1942 = vmatprep.subr.mxu0 0.0
      %1943 = vmatpush1.msra.mxu0 0.0
      %1944 = vmatprep.subr.mxu0 0.0
      %1945 = vmatpush1.msra.mxu0 0.0
      %1946 = vmatprep.subr.mxu0 0.0
      %1947 = vmatpush1.msra.mxu0 0.0
      %1948 = vmatprep.subr.mxu0 0.0
      %1949 = vmatpush1.msra.mxu0 0.0
      %1950 = vmatprep.subr.mxu0 0.0
      %1951 = vmatpush1.msra.mxu0 0.0
      %1952 = vmatprep.subr.mxu0 0.0
      %1953 = vmatpush1.msra.mxu0 0.0
      %1954 = vmatprep.subr.mxu0 0.0
      %1955 = vmatpush1.msra.mxu0 0.0
      %1956 = vmatprep.subr.mxu0 0.0
      %1957 = vmatpush1.msra.mxu0 0.0
      %1958 = vmatprep.subr.mxu0 0.0
      %1959 = vmatpush1.msra.mxu0 0.0
      %1960 = vmatprep.subr.mxu0 0.0
      %1961 = vmatpush1.msra.mxu0 0.0
      %1962 = vmatprep.subr.mxu0 0.0
      %1963 = vmatpush1.msra.mxu0 0.0
      %1964 = vmatprep.subr.mxu0 0.0
      %1965 = vmatpush1.msra.mxu0 0.0
      %1966 = vmatprep.subr.mxu0 0.0
      %1967 = vmatpush1.msra.mxu0 0.0
      %1968 = vmatprep.subr.mxu0 0.0
      %1969 = vmatpush1.msra.mxu0 0.0
      %1970 = vmatprep.subr.mxu0 0.0
      %1971 = vmatpush1.msra.mxu0 0.0
      %1972 = vmatprep.subr.mxu0 0.0
      %1973 = vmatpush1.msra.mxu0 0.0
      %1974 = vmatprep.subr.mxu0 0.0
      %1975 = vmatpush1.msra.mxu0 0.0
      %1976 = vmatprep.mubr.f32.mxu0 0.0
      %1977 = vmatmul.mubr.f32.gmra.mrb[0].mxu0 %v1644
      %v1978 = vpop.f32.mrb[0].mxu0
      %v1979 = vadd.f32 0.0, %v1978
      %v1980 = vpop.f32.mrb[0].mxu0
      %1981 = vmatprep.mubr.f32.mxu0 0.0
      %1982 = vmatmul.mubr.f32.gmra.mrb[0].mxu0 %v1647
      %v1983 = vpop.f32.mrb[0].mxu0
      %v1984 = vadd.f32 0.0, %v1983
      %v1985 = vpop.f32.mrb[0].mxu0
      %1986 = vdwg.mxu0
      %v1987 = vadd.f32 %v1815, %v1979
      %v1988 = vadd.f32 %v1820, %v1984
      %v1989 = vadd.f32 %v1987, %v1640
      %v1990 = vadd.f32 %v1988, %v1641
      %v1991 = vmax.f32 %v1989, 0.0
      %v1992 = vmax.f32 %v1990, 0.0
      %v1993 = vld [vmem:[%s37] sm:$0xff]
      %v1994 = vld [vmem:[%s37 + $0x8] sm:$0xff]
      %v1995 = vld [vmem:[%s37 + $0x10] sm:$0xff]
      %v1996 = vld [vmem:[%s37 + $0x18] sm:$0xff]
      %v1997 = vld [vmem:[%s39] sm:$0x1]
      %v1999 = vlaneseq
      %v2000 = vshrl.u32 %v1999, 7
      %v2001 = vsub.s32 0, %v2000
      %v2002 = vrot.slane %v1997, %v2001
      %v2005 = vsel %vm1127, %v1991, 0
      %v2008 = vsel %vm1127, %v1992, 0
      %2010 = vmatprep.subr.mxu0 0.0
      %2011 = vmatpush1.msra.mxu0 %v1993
      %2012 = vmatprep.subr.mxu0 0.0
      %2013 = vmatpush1.msra.mxu0 %v1994
      %2014 = vmatprep.subr.mxu0 0.0
      %2015 = vmatpush1.msra.mxu0 %v1995
      %2016 = vmatprep.subr.mxu0 0.0
      %2017 = vmatpush1.msra.mxu0 %v1996
      %2018 = vmatprep.subr.mxu0 0.0
      %2019 = vmatpush1.msra.mxu0 0.0
      %2020 = vmatprep.subr.mxu0 0.0
      %2021 = vmatpush1.msra.mxu0 0.0
      %2022 = vmatprep.subr.mxu0 0.0
      %2023 = vmatpush1.msra.mxu0 0.0
      %2024 = vmatprep.subr.mxu0 0.0
      %2025 = vmatpush1.msra.mxu0 0.0
      %2026 = vmatprep.subr.mxu0 0.0
      %2027 = vmatpush1.msra.mxu0 0.0
      %2028 = vmatprep.subr.mxu0 0.0
      %2029 = vmatpush1.msra.mxu0 0.0
      %2030 = vmatprep.subr.mxu0 0.0
      %2031 = vmatpush1.msra.mxu0 0.0
      %2032 = vmatprep.subr.mxu0 0.0
      %2033 = vmatpush1.msra.mxu0 0.0
      %2034 = vmatprep.subr.mxu0 0.0
      %2035 = vmatpush1.msra.mxu0 0.0
      %2036 = vmatprep.subr.mxu0 0.0
      %2037 = vmatpush1.msra.mxu0 0.0
      %2038 = vmatprep.subr.mxu0 0.0
      %2039 = vmatpush1.msra.mxu0 0.0
      %2040 = vmatprep.subr.mxu0 0.0
      %2041 = vmatpush1.msra.mxu0 0.0
      %2042 = vmatprep.subr.mxu0 0.0
      %2043 = vmatpush1.msra.mxu0 0.0
      %2044 = vmatprep.subr.mxu0 0.0
      %2045 = vmatpush1.msra.mxu0 0.0
      %2046 = vmatprep.subr.mxu0 0.0
      %2047 = vmatpush1.msra.mxu0 0.0
      %2048 = vmatprep.subr.mxu0 0.0
      %2049 = vmatpush1.msra.mxu0 0.0
      %2050 = vmatprep.subr.mxu0 0.0
      %2051 = vmatpush1.msra.mxu0 0.0
      %2052 = vmatprep.subr.mxu0 0.0
      %2053 = vmatpush1.msra.mxu0 0.0
      %2054 = vmatprep.subr.mxu0 0.0
      %2055 = vmatpush1.msra.mxu0 0.0
      %2056 = vmatprep.subr.mxu0 0.0
      %2057 = vmatpush1.msra.mxu0 0.0
      %2058 = vmatprep.subr.mxu0 0.0
      %2059 = vmatpush1.msra.mxu0 0.0
      %2060 = vmatprep.subr.mxu0 0.0
      %2061 = vmatpush1.msra.mxu0 0.0
      %2062 = vmatprep.subr.mxu0 0.0
      %2063 = vmatpush1.msra.mxu0 0.0
      %2064 = vmatprep.subr.mxu0 0.0
      %2065 = vmatpush1.msra.mxu0 0.0
      %2066 = vmatprep.subr.mxu0 0.0
      %2067 = vmatpush1.msra.mxu0 0.0
      %2068 = vmatprep.subr.mxu0 0.0
      %2069 = vmatpush1.msra.mxu0 0.0
      %2070 = vmatprep.subr.mxu0 0.0
      %2071 = vmatpush1.msra.mxu0 0.0
      %2072 = vmatprep.subr.mxu0 0.0
      %2073 = vmatpush1.msra.mxu0 0.0
      %2074 = vmatprep.mubr.f32.mxu0 0.0
      %2075 = vmatmul.mubr.f32.gmra.mrb[0].mxu0 %v2005
      %v2076 = vpop.f32.mrb[0].mxu0
      %v2077 = vadd.f32 %v2002, %v2076
      %v2078 = vpop.f32.mrb[0].mxu0
      %2079 = vmatprep.mubr.f32.mxu0 0.0
      %2080 = vmatmul.mubr.f32.gmra.mrb[0].mxu0 %v2008
      %v2081 = vpop.f32.mrb[0].mxu0
      %v2082 = vadd.f32 %v2002, %v2081
      %v2083 = vpop.f32.mrb[0].mxu0
      %2084 = vdwg.mxu0
      %v2085 = vld [vmem:[%s41] sm:$0xff]
      %v2086 = vld [vmem:[%s41 + $0x8] sm:$0xff]
      %v2087 = vld [vmem:[%s41 + $0x10] sm:$0xff]
      %v2088 = vld [vmem:[%s41 + $0x18] sm:$0xff]
      %v2089 = vld [vmem:[%s43] sm:$0x1]
      %v2091 = vlaneseq
      %v2092 = vshrl.u32 %v2091, 7
      %v2093 = vsub.s32 0, %v2092
      %v2094 = vrot.slane %v2089, %v2093
      %2096 = vmatprep.subr.mxu0 0.0
      %2097 = vmatpush1.msra.mxu0 %v2085
      %2098 = vmatprep.subr.mxu0 0.0
      %2099 = vmatpush1.msra.mxu0 %v2086
      %2100 = vmatprep.subr.mxu0 0.0
      %2101 = vmatpush1.msra.mxu0 %v2087
      %2102 = vmatprep.subr.mxu0 0.0
      %2103 = vmatpush1.msra.mxu0 %v2088
      %2104 = vmatprep.subr.mxu0 0.0
      %2105 = vmatpush1.msra.mxu0 0.0
      %2106 = vmatprep.subr.mxu0 0.0
      %2107 = vmatpush1.msra.mxu0 0.0
      %2108 = vmatprep.subr.mxu0 0.0
      %2109 = vmatpush1.msra.mxu0 0.0
      %2110 = vmatprep.subr.mxu0 0.0
      %2111 = vmatpush1.msra.mxu0 0.0
      %2112 = vmatprep.subr.mxu0 0.0
      %2113 = vmatpush1.msra.mxu0 0.0
      %2114 = vmatprep.subr.mxu0 0.0
      %2115 = vmatpush1.msra.mxu0 0.0
      %2116 = vmatprep.subr.mxu0 0.0
      %2117 = vmatpush1.msra.mxu0 0.0
      %2118 = vmatprep.subr.mxu0 0.0
      %2119 = vmatpush1.msra.mxu0 0.0
      %2120 = vmatprep.subr.mxu0 0.0
      %2121 = vmatpush1.msra.mxu0 0.0
      %2122 = vmatprep.subr.mxu0 0.0
      %2123 = vmatpush1.msra.mxu0 0.0
      %2124 = vmatprep.subr.mxu0 0.0
      %2125 = vmatpush1.msra.mxu0 0.0
      %2126 = vmatprep.subr.mxu0 0.0
      %2127 = vmatpush1.msra.mxu0 0.0
      %2128 = vmatprep.subr.mxu0 0.0
      %2129 = vmatpush1.msra.mxu0 0.0
      %2130 = vmatprep.subr.mxu0 0.0
      %2131 = vmatpush1.msra.mxu0 0.0
      %2132 = vmatprep.subr.mxu0 0.0
      %2133 = vmatpush1.msra.mxu0 0.0
      %2134 = vmatprep.subr.mxu0 0.0
      %2135 = vmatpush1.msra.mxu0 0.0
      %2136 = vmatprep.subr.mxu0 0.0
      %2137 = vmatpush1.msra.mxu0 0.0
      %2138 = vmatprep.subr.mxu0 0.0
      %2139 = vmatpush1.msra.mxu0 0.0
      %2140 = vmatprep.subr.mxu0 0.0
      %2141 = vmatpush1.msra.mxu0 0.0
      %2142 = vmatprep.subr.mxu0 0.0
      %2143 = vmatpush1.msra.mxu0 0.0
      %2144 = vmatprep.subr.mxu0 0.0
      %2145 = vmatpush1.msra.mxu0 0.0
      %2146 = vmatprep.subr.mxu0 0.0
      %2147 = vmatpush1.msra.mxu0 0.0
      %2148 = vmatprep.subr.mxu0 0.0
      %2149 = vmatpush1.msra.mxu0 0.0
      %2150 = vmatprep.subr.mxu0 0.0
      %2151 = vmatpush1.msra.mxu0 0.0
      %2152 = vmatprep.subr.mxu0 0.0
      %2153 = vmatpush1.msra.mxu0 0.0
      %2154 = vmatprep.subr.mxu0 0.0
      %2155 = vmatpush1.msra.mxu0 0.0
      %2156 = vmatprep.subr.mxu0 0.0
      %2157 = vmatpush1.msra.mxu0 0.0
      %2158 = vmatprep.subr.mxu0 0.0
      %2159 = vmatpush1.msra.mxu0 0.0
      %2160 = vmatprep.mubr.f32.mxu0 0.0
      %2161 = vmatmul.mubr.f32.gmra.mrb[0].mxu0 %v2005
      %v2162 = vpop.f32.mrb[0].mxu0
      %v2163 = vadd.f32 %v2094, %v2162
      %v2164 = vpop.f32.mrb[0].mxu0
      %2165 = vmatprep.mubr.f32.mxu0 0.0
      %2166 = vmatmul.mubr.f32.gmra.mrb[0].mxu0 %v2008
      %v2167 = vpop.f32.mrb[0].mxu0
      %v2168 = vadd.f32 %v2094, %v2167
      %v2169 = vpop.f32.mrb[0].mxu0
      %2170 = vdwg.mxu0
      %v2172 = vsel %vm1037, %v2168, 0
      %2174 = vmatprep.subr.mxu0 0.0
      %2175 = vmatpush1.msra.mxu0 %v2163
      %2176 = vmatprep.subr.mxu0 0.0
      %2177 = vmatpush1.msra.mxu0 %v2172
      %2178 = vmatprep.subr.mxu0 0.0
      %2179 = vmatpush1.msra.mxu0 0.0
      %2180 = vmatprep.subr.mxu0 0.0
      %2181 = vmatpush1.msra.mxu0 0.0
      %2182 = vmatprep.subr.mxu0 0.0
      %2183 = vmatpush1.msra.mxu0 0.0
      %2184 = vmatprep.subr.mxu0 0.0
      %2185 = vmatpush1.msra.mxu0 0.0
      %2186 = vmatprep.subr.mxu0 0.0
      %2187 = vmatpush1.msra.mxu0 0.0
      %2188 = vmatprep.subr.mxu0 0.0
      %2189 = vmatpush1.msra.mxu0 0.0
      %2190 = vmatprep.subr.mxu0 0.0
      %2191 = vmatpush1.msra.mxu0 0.0
      %2192 = vmatprep.subr.mxu0 0.0
      %2193 = vmatpush1.msra.mxu0 0.0
      %2194 = vmatprep.subr.mxu0 0.0
      %2195 = vmatpush1.msra.mxu0 0.0
      %2196 = vmatprep.subr.mxu0 0.0
      %2197 = vmatpush1.msra.mxu0 0.0
      %2198 = vmatprep.subr.mxu0 0.0
      %2199 = vmatpush1.msra.mxu0 0.0
      %2200 = vmatprep.subr.mxu0 0.0
      %2201 = vmatpush1.msra.mxu0 0.0
      %2202 = vmatprep.subr.mxu0 0.0
      %2203 = vmatpush1.msra.mxu0 0.0
      %2204 = vmatprep.subr.mxu0 0.0
      %2205 = vmatpush1.msra.mxu0 0.0
      %2206 = vmatprep.subr.mxu0 0.0
      %2207 = vmatpush1.msra.mxu0 0.0
      %2208 = vmatprep.subr.mxu0 0.0
      %2209 = vmatpush1.msra.mxu0 0.0
      %2210 = vmatprep.subr.mxu0 0.0
      %2211 = vmatpush1.msra.mxu0 0.0
      %2212 = vmatprep.subr.mxu0 0.0
      %2213 = vmatpush1.msra.mxu0 0.0
      %2214 = vmatprep.subr.mxu0 0.0
      %2215 = vmatpush1.msra.mxu0 0.0
      %2216 = vmatprep.subr.mxu0 0.0
      %2217 = vmatpush1.msra.mxu0 0.0
      %2218 = vmatprep.subr.mxu0 0.0
      %2219 = vmatpush1.msra.mxu0 0.0
      %2220 = vmatprep.subr.mxu0 0.0
      %2221 = vmatpush1.msra.mxu0 0.0
      %2222 = vmatprep.subr.mxu0 0.0
      %2223 = vmatpush1.msra.mxu0 0.0
      %2224 = vmatprep.subr.mxu0 0.0
      %2225 = vmatpush1.msra.mxu0 0.0
      %2226 = vmatprep.subr.mxu0 0.0
      %2227 = vmatpush1.msra.mxu0 0.0
      %2228 = vmatprep.subr.mxu0 0.0
      %2229 = vmatpush1.msra.mxu0 0.0
      %2230 = vmatprep.subr.mxu0 0.0
      %2231 = vmatpush1.msra.mxu0 0.0
      %2232 = vmatprep.subr.mxu0 0.0
      %2233 = vmatpush1.msra.mxu0 0.0
      %2234 = vmatprep.subr.mxu0 0.0
      %2235 = vmatpush1.msra.mxu0 0.0
      %2236 = vmatprep.subr.mxu0 0.0
      %2237 = vmatpush1.msra.mxu0 0.0
      %2238 = vmatprep.mubr.f32.mxu0 0.0
      %2239 = vmatmul.mubr.f32.gmra.mrb[0].mxu0 %v1644
      %v2240 = vpop.f32.mrb[0].mxu0
      %v2241 = vadd.f32 0.0, %v2240
      %v2242 = vpop.f32.mrb[0].mxu0
      %2243 = vmatprep.mubr.f32.mxu0 0.0
      %2244 = vmatmul.mubr.f32.gmra.mrb[0].mxu0 %v1647
      %v2245 = vpop.f32.mrb[0].mxu0
      %v2246 = vadd.f32 0.0, %v2245
      %v2247 = vpop.f32.mrb[0].mxu0
      %2248 = vdwg.mxu0
      %v2249 = vadd.f32 %v2077, %v2241
      %v2250 = vadd.f32 %v2082, %v2246
      %v2251 = vmax.f32 %v2249, 0.0
      %v2252 = vmax.f32 %v2250, 0.0
      %v2253 = vld [vmem:[%s45] sm:$0xff]
      %v2254 = vld [vmem:[%s45 + $0x8] sm:$0xff]
      %v2255 = vld [vmem:[%s45 + $0x10] sm:$0xff]
      %v2256 = vld [vmem:[%s45 + $0x18] sm:$0xff]
      %v2257 = vld [vmem:[%s47] sm:$0x1]
      %v2259 = vlaneseq
      %v2260 = vshrl.u32 %v2259, 7
      %v2261 = vsub.s32 0, %v2260
      %v2262 = vrot.slane %v2257, %v2261
      %v2265 = vsel %vm1127, %v2251, 0
      %v2268 = vsel %vm1127, %v2252, 0
      %2270 = vmatprep.subr.mxu0 0.0
      %2271 = vmatpush1.msra.mxu0 %v2253
      %2272 = vmatprep.subr.mxu0 0.0
      %2273 = vmatpush1.msra.mxu0 %v2254
      %2274 = vmatprep.subr.mxu0 0.0
      %2275 = vmatpush1.msra.mxu0 %v2255
      %2276 = vmatprep.subr.mxu0 0.0
      %2277 = vmatpush1.msra.mxu0 %v2256
      %2278 = vmatprep.subr.mxu0 0.0
      %2279 = vmatpush1.msra.mxu0 0.0
      %2280 = vmatprep.subr.mxu0 0.0
      %2281 = vmatpush1.msra.mxu0 0.0
      %2282 = vmatprep.subr.mxu0 0.0
      %2283 = vmatpush1.msra.mxu0 0.0
      %2284 = vmatprep.subr.mxu0 0.0
      %2285 = vmatpush1.msra.mxu0 0.0
      %2286 = vmatprep.subr.mxu0 0.0
      %2287 = vmatpush1.msra.mxu0 0.0
      %2288 = vmatprep.subr.mxu0 0.0
      %2289 = vmatpush1.msra.mxu0 0.0
      %2290 = vmatprep.subr.mxu0 0.0
      %2291 = vmatpush1.msra.mxu0 0.0
      %2292 = vmatprep.subr.mxu0 0.0
      %2293 = vmatpush1.msra.mxu0 0.0
      %2294 = vmatprep.subr.mxu0 0.0
      %2295 = vmatpush1.msra.mxu0 0.0
      %2296 = vmatprep.subr.mxu0 0.0
      %2297 = vmatpush1.msra.mxu0 0.0
      %2298 = vmatprep.subr.mxu0 0.0
      %2299 = vmatpush1.msra.mxu0 0.0
      %2300 = vmatprep.subr.mxu0 0.0
      %2301 = vmatpush1.msra.mxu0 0.0
      %2302 = vmatprep.subr.mxu0 0.0
      %2303 = vmatpush1.msra.mxu0 0.0
      %2304 = vmatprep.subr.mxu0 0.0
      %2305 = vmatpush1.msra.mxu0 0.0
      %2306 = vmatprep.subr.mxu0 0.0
      %2307 = vmatpush1.msra.mxu0 0.0
      %2308 = vmatprep.subr.mxu0 0.0
      %2309 = vmatpush1.msra.mxu0 0.0
      %2310 = vmatprep.subr.mxu0 0.0
      %2311 = vmatpush1.msra.mxu0 0.0
      %2312 = vmatprep.subr.mxu0 0.0
      %2313 = vmatpush1.msra.mxu0 0.0
      %2314 = vmatprep.subr.mxu0 0.0
      %2315 = vmatpush1.msra.mxu0 0.0
      %2316 = vmatprep.subr.mxu0 0.0
      %2317 = vmatpush1.msra.mxu0 0.0
      %2318 = vmatprep.subr.mxu0 0.0
      %2319 = vmatpush1.msra.mxu0 0.0
      %2320 = vmatprep.subr.mxu0 0.0
      %2321 = vmatpush1.msra.mxu0 0.0
      %2322 = vmatprep.subr.mxu0 0.0
      %2323 = vmatpush1.msra.mxu0 0.0
      %2324 = vmatprep.subr.mxu0 0.0
      %2325 = vmatpush1.msra.mxu0 0.0
      %2326 = vmatprep.subr.mxu0 0.0
      %2327 = vmatpush1.msra.mxu0 0.0
      %2328 = vmatprep.subr.mxu0 0.0
      %2329 = vmatpush1.msra.mxu0 0.0
      %2330 = vmatprep.subr.mxu0 0.0
      %2331 = vmatpush1.msra.mxu0 0.0
      %2332 = vmatprep.subr.mxu0 0.0
      %2333 = vmatpush1.msra.mxu0 0.0
      %2334 = vmatprep.mubr.f32.mxu0 0.0
      %2335 = vmatmul.mubr.f32.gmra.mrb[0].mxu0 %v2265
      %v2336 = vpop.f32.mrb[0].mxu0
      %v2337 = vadd.f32 %v2262, %v2336
      %v2338 = vpop.f32.mrb[0].mxu0
      %2339 = vmatprep.mubr.f32.mxu0 0.0
      %2340 = vmatmul.mubr.f32.gmra.mrb[0].mxu0 %v2268
      %v2341 = vpop.f32.mrb[0].mxu0
      %v2342 = vadd.f32 %v2262, %v2341
      %v2343 = vpop.f32.mrb[0].mxu0
      %2344 = vdwg.mxu0
      %v2345 = vld [vmem:[%s49] sm:$0xff]
      %v2346 = vld [vmem:[%s49 + $0x8] sm:$0xff]
      %v2347 = vld [vmem:[%s49 + $0x10] sm:$0xff]
      %v2348 = vld [vmem:[%s49 + $0x18] sm:$0xff]
      %v2349 = vld [vmem:[%s51] sm:$0x1]
      %v2351 = vlaneseq
      %v2352 = vshrl.u32 %v2351, 7
      %v2353 = vsub.s32 0, %v2352
      %v2354 = vrot.slane %v2349, %v2353
      %2356 = vmatprep.subr.mxu0 0.0
      %2357 = vmatpush1.msra.mxu0 %v2345
      %2358 = vmatprep.subr.mxu0 0.0
      %2359 = vmatpush1.msra.mxu0 %v2346
      %2360 = vmatprep.subr.mxu0 0.0
      %2361 = vmatpush1.msra.mxu0 %v2347
      %2362 = vmatprep.subr.mxu0 0.0
      %2363 = vmatpush1.msra.mxu0 %v2348
      %2364 = vmatprep.subr.mxu0 0.0
      %2365 = vmatpush1.msra.mxu0 0.0
      %2366 = vmatprep.subr.mxu0 0.0
      %2367 = vmatpush1.msra.mxu0 0.0
      %2368 = vmatprep.subr.mxu0 0.0
      %2369 = vmatpush1.msra.mxu0 0.0
      %2370 = vmatprep.subr.mxu0 0.0
      %2371 = vmatpush1.msra.mxu0 0.0
      %2372 = vmatprep.subr.mxu0 0.0
      %2373 = vmatpush1.msra.mxu0 0.0
      %2374 = vmatprep.subr.mxu0 0.0
      %2375 = vmatpush1.msra.mxu0 0.0
      %2376 = vmatprep.subr.mxu0 0.0
      %2377 = vmatpush1.msra.mxu0 0.0
      %2378 = vmatprep.subr.mxu0 0.0
      %2379 = vmatpush1.msra.mxu0 0.0
      %2380 = vmatprep.subr.mxu0 0.0
      %2381 = vmatpush1.msra.mxu0 0.0
      %2382 = vmatprep.subr.mxu0 0.0
      %2383 = vmatpush1.msra.mxu0 0.0
      %2384 = vmatprep.subr.mxu0 0.0
      %2385 = vmatpush1.msra.mxu0 0.0
      %2386 = vmatprep.subr.mxu0 0.0
      %2387 = vmatpush1.msra.mxu0 0.0
      %2388 = vmatprep.subr.mxu0 0.0
      %2389 = vmatpush1.msra.mxu0 0.0
      %2390 = vmatprep.subr.mxu0 0.0
      %2391 = vmatpush1.msra.mxu0 0.0
      %2392 = vmatprep.subr.mxu0 0.0
      %2393 = vmatpush1.msra.mxu0 0.0
      %2394 = vmatprep.subr.mxu0 0.0
      %2395 = vmatpush1.msra.mxu0 0.0
      %2396 = vmatprep.subr.mxu0 0.0
      %2397 = vmatpush1.msra.mxu0 0.0
      %2398 = vmatprep.subr.mxu0 0.0
      %2399 = vmatpush1.msra.mxu0 0.0
      %2400 = vmatprep.subr.mxu0 0.0
      %2401 = vmatpush1.msra.mxu0 0.0
      %2402 = vmatprep.subr.mxu0 0.0
      %2403 = vmatpush1.msra.mxu0 0.0
      %2404 = vmatprep.subr.mxu0 0.0
      %2405 = vmatpush1.msra.mxu0 0.0
      %2406 = vmatprep.subr.mxu0 0.0
      %2407 = vmatpush1.msra.mxu0 0.0
      %2408 = vmatprep.subr.mxu0 0.0
      %2409 = vmatpush1.msra.mxu0 0.0
      %2410 = vmatprep.subr.mxu0 0.0
      %2411 = vmatpush1.msra.mxu0 0.0
      %2412 = vmatprep.subr.mxu0 0.0
      %2413 = vmatpush1.msra.mxu0 0.0
      %2414 = vmatprep.subr.mxu0 0.0
      %2415 = vmatpush1.msra.mxu0 0.0
      %2416 = vmatprep.subr.mxu0 0.0
      %2417 = vmatpush1.msra.mxu0 0.0
      %2418 = vmatprep.subr.mxu0 0.0
      %2419 = vmatpush1.msra.mxu0 0.0
      %2420 = vmatprep.mubr.f32.mxu0 0.0
      %2421 = vmatmul.mubr.f32.gmra.mrb[0].mxu0 %v2265
      %v2422 = vpop.f32.mrb[0].mxu0
      %v2423 = vadd.f32 %v2354, %v2422
      %v2424 = vpop.f32.mrb[0].mxu0
      %2425 = vmatprep.mubr.f32.mxu0 0.0
      %2426 = vmatmul.mubr.f32.gmra.mrb[0].mxu0 %v2268
      %v2427 = vpop.f32.mrb[0].mxu0
      %v2428 = vadd.f32 %v2354, %v2427
      %v2429 = vpop.f32.mrb[0].mxu0
      %2430 = vdwg.mxu0
      %v2432 = vsel %vm1037, %v2428, 0
      %2434 = vmatprep.subr.mxu0 0.0
      %2435 = vmatpush1.msra.mxu0 %v2423
      %2436 = vmatprep.subr.mxu0 0.0
      %2437 = vmatpush1.msra.mxu0 %v2432
      %2438 = vmatprep.subr.mxu0 0.0
      %2439 = vmatpush1.msra.mxu0 0.0
      %2440 = vmatprep.subr.mxu0 0.0
      %2441 = vmatpush1.msra.mxu0 0.0
      %2442 = vmatprep.subr.mxu0 0.0
      %2443 = vmatpush1.msra.mxu0 0.0
      %2444 = vmatprep.subr.mxu0 0.0
      %2445 = vmatpush1.msra.mxu0 0.0
      %2446 = vmatprep.subr.mxu0 0.0
      %2447 = vmatpush1.msra.mxu0 0.0
      %2448 = vmatprep.subr.mxu0 0.0
      %2449 = vmatpush1.msra.mxu0 0.0
      %2450 = vmatprep.subr.mxu0 0.0
      %2451 = vmatpush1.msra.mxu0 0.0
      %2452 = vmatprep.subr.mxu0 0.0
      %2453 = vmatpush1.msra.mxu0 0.0
      %2454 = vmatprep.subr.mxu0 0.0
      %2455 = vmatpush1.msra.mxu0 0.0
      %2456 = vmatprep.subr.mxu0 0.0
      %2457 = vmatpush1.msra.mxu0 0.0
      %2458 = vmatprep.subr.mxu0 0.0
      %2459 = vmatpush1.msra.mxu0 0.0
      %2460 = vmatprep.subr.mxu0 0.0
      %2461 = vmatpush1.msra.mxu0 0.0
      %2462 = vmatprep.subr.mxu0 0.0
      %2463 = vmatpush1.msra.mxu0 0.0
      %2464 = vmatprep.subr.mxu0 0.0
      %2465 = vmatpush1.msra.mxu0 0.0
      %2466 = vmatprep.subr.mxu0 0.0
      %2467 = vmatpush1.msra.mxu0 0.0
      %2468 = vmatprep.subr.mxu0 0.0
      %2469 = vmatpush1.msra.mxu0 0.0
      %2470 = vmatprep.subr.mxu0 0.0
      %2471 = vmatpush1.msra.mxu0 0.0
      %2472 = vmatprep.subr.mxu0 0.0
      %2473 = vmatpush1.msra.mxu0 0.0
      %2474 = vmatprep.subr.mxu0 0.0
      %2475 = vmatpush1.msra.mxu0 0.0
      %2476 = vmatprep.subr.mxu0 0.0
      %2477 = vmatpush1.msra.mxu0 0.0
      %2478 = vmatprep.subr.mxu0 0.0
      %2479 = vmatpush1.msra.mxu0 0.0
      %2480 = vmatprep.subr.mxu0 0.0
      %2481 = vmatpush1.msra.mxu0 0.0
      %2482 = vmatprep.subr.mxu0 0.0
      %2483 = vmatpush1.msra.mxu0 0.0
      %2484 = vmatprep.subr.mxu0 0.0
      %2485 = vmatpush1.msra.mxu0 0.0
      %2486 = vmatprep.subr.mxu0 0.0
      %2487 = vmatpush1.msra.mxu0 0.0
      %2488 = vmatprep.subr.mxu0 0.0
      %2489 = vmatpush1.msra.mxu0 0.0
      %2490 = vmatprep.subr.mxu0 0.0
      %2491 = vmatpush1.msra.mxu0 0.0
      %2492 = vmatprep.subr.mxu0 0.0
      %2493 = vmatpush1.msra.mxu0 0.0
      %2494 = vmatprep.subr.mxu0 0.0
      %2495 = vmatpush1.msra.mxu0 0.0
      %2496 = vmatprep.subr.mxu0 0.0
      %2497 = vmatpush1.msra.mxu0 0.0
      %2498 = vmatprep.mubr.f32.mxu0 0.0
      %2499 = vmatmul.mubr.f32.gmra.mrb[0].mxu0 %v1644
      %v2500 = vpop.f32.mrb[0].mxu0
      %v2501 = vadd.f32 0.0, %v2500
      %v2502 = vpop.f32.mrb[0].mxu0
      %2503 = vmatprep.mubr.f32.mxu0 0.0
      %2504 = vmatmul.mubr.f32.gmra.mrb[0].mxu0 %v1647
      %v2505 = vpop.f32.mrb[0].mxu0
      %v2506 = vadd.f32 0.0, %v2505
      %v2507 = vpop.f32.mrb[0].mxu0
      %2508 = vdwg.mxu0
      %v2509 = vadd.f32 %v2337, %v2501
      %v2510 = vadd.f32 %v2342, %v2506
      %v2511 = vadd.f32 %v2509, %v1991
      %v2512 = vadd.f32 %v2510, %v1992
      %2513 = vst.msk [vmem:[%s1011] sm:$0xff] %vm1127, %v2511
      %vm2514 = vcmask 257024
      %2515 = vst.msk [vmem:[%s1011 + $0x8] sm:$0xf] %vm2514, %v2512
      %v2516 = vld [vmem:[%s53] sm:$0xff]
      %v2517 = vld [vmem:[%s53 + $0x8] sm:$0xff]
      %v2518 = vld [vmem:[%s53 + $0x10] sm:$0xff]
      %v2519 = vld [vmem:[%s53 + $0x18] sm:$0xff]
      %v2520 = vld [vmem:[%s55] sm:$0x1]
      %v2522 = vlaneseq
      %v2523 = vshrl.u32 %v2522, 7
      %v2524 = vsub.s32 0, %v2523
      %v2525 = vrot.slane %v2520, %v2524
      %v2528 = vsel %vm1127, %v2511, 0
      %v2531 = vsel %vm1127, %v2512, 0
      %2533 = vmatprep.subr.mxu0 0.0
      %2534 = vmatpush1.msra.mxu0 %v2516
      %2535 = vmatprep.subr.mxu0 0.0
      %2536 = vmatpush1.msra.mxu0 %v2517
      %2537 = vmatprep.subr.mxu0 0.0
      %2538 = vmatpush1.msra.mxu0 %v2518
      %2539 = vmatprep.subr.mxu0 0.0
      %2540 = vmatpush1.msra.mxu0 %v2519
      %2541 = vmatprep.subr.mxu0 0.0
      %2542 = vmatpush1.msra.mxu0 0.0
      %2543 = vmatprep.subr.mxu0 0.0
      %2544 = vmatpush1.msra.mxu0 0.0
      %2545 = vmatprep.subr.mxu0 0.0
      %2546 = vmatpush1.msra.mxu0 0.0
      %2547 = vmatprep.subr.mxu0 0.0
      %2548 = vmatpush1.msra.mxu0 0.0
      %2549 = vmatprep.subr.mxu0 0.0
      %2550 = vmatpush1.msra.mxu0 0.0
      %2551 = vmatprep.subr.mxu0 0.0
      %2552 = vmatpush1.msra.mxu0 0.0
      %2553 = vmatprep.subr.mxu0 0.0
      %2554 = vmatpush1.msra.mxu0 0.0
      %2555 = vmatprep.subr.mxu0 0.0
      %2556 = vmatpush1.msra.mxu0 0.0
      %2557 = vmatprep.subr.mxu0 0.0
      %2558 = vmatpush1.msra.mxu0 0.0
      %2559 = vmatprep.subr.mxu0 0.0
      %2560 = vmatpush1.msra.mxu0 0.0
      %2561 = vmatprep.subr.mxu0 0.0
      %2562 = vmatpush1.msra.mxu0 0.0
      %2563 = vmatprep.subr.mxu0 0.0
      %2564 = vmatpush1.msra.mxu0 0.0
      %2565 = vmatprep.subr.mxu0 0.0
      %2566 = vmatpush1.msra.mxu0 0.0
      %2567 = vmatprep.subr.mxu0 0.0
      %2568 = vmatpush1.msra.mxu0 0.0
      %2569 = vmatprep.subr.mxu0 0.0
      %2570 = vmatpush1.msra.mxu0 0.0
      %2571 = vmatprep.subr.mxu0 0.0
      %2572 = vmatpush1.msra.mxu0 0.0
      %2573 = vmatprep.subr.mxu0 0.0
      %2574 = vmatpush1.msra.mxu0 0.0
      %2575 = vmatprep.subr.mxu0 0.0
      %2576 = vmatpush1.msra.mxu0 0.0
      %2577 = vmatprep.subr.mxu0 0.0
      %2578 = vmatpush1.msra.mxu0 0.0
      %2579 = vmatprep.subr.mxu0 0.0
      %2580 = vmatpush1.msra.mxu0 0.0
      %2581 = vmatprep.subr.mxu0 0.0
      %2582 = vmatpush1.msra.mxu0 0.0
      %2583 = vmatprep.subr.mxu0 0.0
      %2584 = vmatpush1.msra.mxu0 0.0
      %2585 = vmatprep.subr.mxu0 0.0
      %2586 = vmatpush1.msra.mxu0 0.0
      %2587 = vmatprep.subr.mxu0 0.0
      %2588 = vmatpush1.msra.mxu0 0.0
      %2589 = vmatprep.subr.mxu0 0.0
      %2590 = vmatpush1.msra.mxu0 0.0
      %2591 = vmatprep.subr.mxu0 0.0
      %2592 = vmatpush1.msra.mxu0 0.0
      %2593 = vmatprep.subr.mxu0 0.0
      %2594 = vmatpush1.msra.mxu0 0.0
      %2595 = vmatprep.subr.mxu0 0.0
      %2596 = vmatpush1.msra.mxu0 0.0
      %2597 = vmatprep.mubr.f32.mxu0 0.0
      %2598 = vmatmul.mubr.f32.gmra.mrb[0].mxu0 %v2528
      %v2599 = vpop.f32.mrb[0].mxu0
      %v2600 = vadd.f32 %v2525, %v2599
      %v2601 = vpop.f32.mrb[0].mxu0
      %2602 = vmatprep.mubr.f32.mxu0 0.0
      %2603 = vmatmul.mubr.f32.gmra.mrb[0].mxu0 %v2531
      %v2604 = vpop.f32.mrb[0].mxu0
      %v2605 = vadd.f32 %v2525, %v2604
      %v2606 = vpop.f32.mrb[0].mxu0
      %2607 = vdwg.mxu0
      %v2608 = vld [vmem:[%s57] sm:$0xff]
      %v2609 = vld [vmem:[%s57 + $0x8] sm:$0xff]
      %v2610 = vld [vmem:[%s57 + $0x10] sm:$0xff]
      %v2611 = vld [vmem:[%s57 + $0x18] sm:$0xff]
      %v2612 = vld [vmem:[%s59] sm:$0x1]
      %v2614 = vlaneseq
      %v2615 = vshrl.u32 %v2614, 7
      %v2616 = vsub.s32 0, %v2615
      %v2617 = vrot.slane %v2612, %v2616
      %2619 = vmatprep.subr.mxu0 0.0
      %2620 = vmatpush1.msra.mxu0 %v2608
      %2621 = vmatprep.subr.mxu0 0.0
      %2622 = vmatpush1.msra.mxu0 %v2609
      %2623 = vmatprep.subr.mxu0 0.0
      %2624 = vmatpush1.msra.mxu0 %v2610
      %2625 = vmatprep.subr.mxu0 0.0
      %2626 = vmatpush1.msra.mxu0 %v2611
      %2627 = vmatprep.subr.mxu0 0.0
      %2628 = vmatpush1.msra.mxu0 0.0
      %2629 = vmatprep.subr.mxu0 0.0
      %2630 = vmatpush1.msra.mxu0 0.0
      %2631 = vmatprep.subr.mxu0 0.0
      %2632 = vmatpush1.msra.mxu0 0.0
      %2633 = vmatprep.subr.mxu0 0.0
      %2634 = vmatpush1.msra.mxu0 0.0
      %2635 = vmatprep.subr.mxu0 0.0
      %2636 = vmatpush1.msra.mxu0 0.0
      %2637 = vmatprep.subr.mxu0 0.0
      %2638 = vmatpush1.msra.mxu0 0.0
      %2639 = vmatprep.subr.mxu0 0.0
      %2640 = vmatpush1.msra.mxu0 0.0
      %2641 = vmatprep.subr.mxu0 0.0
      %2642 = vmatpush1.msra.mxu0 0.0
      %2643 = vmatprep.subr.mxu0 0.0
      %2644 = vmatpush1.msra.mxu0 0.0
      %2645 = vmatprep.subr.mxu0 0.0
      %2646 = vmatpush1.msra.mxu0 0.0
      %2647 = vmatprep.subr.mxu0 0.0
      %2648 = vmatpush1.msra.mxu0 0.0
      %2649 = vmatprep.subr.mxu0 0.0
      %2650 = vmatpush1.msra.mxu0 0.0
      %2651 = vmatprep.subr.mxu0 0.0
      %2652 = vmatpush1.msra.mxu0 0.0
      %2653 = vmatprep.subr.mxu0 0.0
      %2654 = vmatpush1.msra.mxu0 0.0
      %2655 = vmatprep.subr.mxu0 0.0
      %2656 = vmatpush1.msra.mxu0 0.0
      %2657 = vmatprep.subr.mxu0 0.0
      %2658 = vmatpush1.msra.mxu0 0.0
      %2659 = vmatprep.subr.mxu0 0.0
      %2660 = vmatpush1.msra.mxu0 0.0
      %2661 = vmatprep.subr.mxu0 0.0
      %2662 = vmatpush1.msra.mxu0 0.0
      %2663 = vmatprep.subr.mxu0 0.0
      %2664 = vmatpush1.msra.mxu0 0.0
      %2665 = vmatprep.subr.mxu0 0.0
      %2666 = vmatpush1.msra.mxu0 0.0
      %2667 = vmatprep.subr.mxu0 0.0
      %2668 = vmatpush1.msra.mxu0 0.0
      %2669 = vmatprep.subr.mxu0 0.0
      %2670 = vmatpush1.msra.mxu0 0.0
      %2671 = vmatprep.subr.mxu0 0.0
      %2672 = vmatpush1.msra.mxu0 0.0
      %2673 = vmatprep.subr.mxu0 0.0
      %2674 = vmatpush1.msra.mxu0 0.0
      %2675 = vmatprep.subr.mxu0 0.0
      %2676 = vmatpush1.msra.mxu0 0.0
      %2677 = vmatprep.subr.mxu0 0.0
      %2678 = vmatpush1.msra.mxu0 0.0
      %2679 = vmatprep.subr.mxu0 0.0
      %2680 = vmatpush1.msra.mxu0 0.0
      %2681 = vmatprep.subr.mxu0 0.0
      %2682 = vmatpush1.msra.mxu0 0.0
      %2683 = vmatprep.mubr.f32.mxu0 0.0
      %2684 = vmatmul.mubr.f32.gmra.mrb[0].mxu0 %v2528
      %v2685 = vpop.f32.mrb[0].mxu0
      %v2686 = vadd.f32 %v2617, %v2685
      %v2687 = vpop.f32.mrb[0].mxu0
      %2688 = vmatprep.mubr.f32.mxu0 0.0
      %2689 = vmatmul.mubr.f32.gmra.mrb[0].mxu0 %v2531
      %v2690 = vpop.f32.mrb[0].mxu0
      %v2691 = vadd.f32 %v2617, %v2690
      %v2692 = vpop.f32.mrb[0].mxu0
      %2693 = vdwg.mxu0
      %v2695 = vsel %vm1037, %v2691, 0
      %2697 = vmatprep.subr.mxu0 0.0
      %2698 = vmatpush1.msra.mxu0 %v2686
      %2699 = vmatprep.subr.mxu0 0.0
      %2700 = vmatpush1.msra.mxu0 %v2695
      %2701 = vmatprep.subr.mxu0 0.0
      %2702 = vmatpush1.msra.mxu0 0.0
      %2703 = vmatprep.subr.mxu0 0.0
      %2704 = vmatpush1.msra.mxu0 0.0
      %2705 = vmatprep.subr.mxu0 0.0
      %2706 = vmatpush1.msra.mxu0 0.0
      %2707 = vmatprep.subr.mxu0 0.0
      %2708 = vmatpush1.msra.mxu0 0.0
      %2709 = vmatprep.subr.mxu0 0.0
      %2710 = vmatpush1.msra.mxu0 0.0
      %2711 = vmatprep.subr.mxu0 0.0
      %2712 = vmatpush1.msra.mxu0 0.0
      %2713 = vmatprep.subr.mxu0 0.0
      %2714 = vmatpush1.msra.mxu0 0.0
      %2715 = vmatprep.subr.mxu0 0.0
      %2716 = vmatpush1.msra.mxu0 0.0
      %2717 = vmatprep.subr.mxu0 0.0
      %2718 = vmatpush1.msra.mxu0 0.0
      %2719 = vmatprep.subr.mxu0 0.0
      %2720 = vmatpush1.msra.mxu0 0.0
      %2721 = vmatprep.subr.mxu0 0.0
      %2722 = vmatpush1.msra.mxu0 0.0
      %2723 = vmatprep.subr.mxu0 0.0
      %2724 = vmatpush1.msra.mxu0 0.0
      %2725 = vmatprep.subr.mxu0 0.0
      %2726 = vmatpush1.msra.mxu0 0.0
      %2727 = vmatprep.subr.mxu0 0.0
      %2728 = vmatpush1.msra.mxu0 0.0
      %2729 = vmatprep.subr.mxu0 0.0
      %2730 = vmatpush1.msra.mxu0 0.0
      %2731 = vmatprep.subr.mxu0 0.0
      %2732 = vmatpush1.msra.mxu0 0.0
      %2733 = vmatprep.subr.mxu0 0.0
      %2734 = vmatpush1.msra.mxu0 0.0
      %2735 = vmatprep.subr.mxu0 0.0
      %2736 = vmatpush1.msra.mxu0 0.0
      %2737 = vmatprep.subr.mxu0 0.0
      %2738 = vmatpush1.msra.mxu0 0.0
      %2739 = vmatprep.subr.mxu0 0.0
      %2740 = vmatpush1.msra.mxu0 0.0
      %2741 = vmatprep.subr.mxu0 0.0
      %2742 = vmatpush1.msra.mxu0 0.0
      %2743 = vmatprep.subr.mxu0 0.0
      %2744 = vmatpush1.msra.mxu0 0.0
      %2745 = vmatprep.subr.mxu0 0.0
      %2746 = vmatpush1.msra.mxu0 0.0
      %2747 = vmatprep.subr.mxu0 0.0
      %2748 = vmatpush1.msra.mxu0 0.0
      %2749 = vmatprep.subr.mxu0 0.0
      %2750 = vmatpush1.msra.mxu0 0.0
      %2751 = vmatprep.subr.mxu0 0.0
      %2752 = vmatpush1.msra.mxu0 0.0
      %2753 = vmatprep.subr.mxu0 0.0
      %2754 = vmatpush1.msra.mxu0 0.0
      %2755 = vmatprep.subr.mxu0 0.0
      %2756 = vmatpush1.msra.mxu0 0.0
      %2757 = vmatprep.subr.mxu0 0.0
      %2758 = vmatpush1.msra.mxu0 0.0
      %2759 = vmatprep.subr.mxu0 0.0
      %2760 = vmatpush1.msra.mxu0 0.0
      %2761 = vmatprep.mubr.f32.mxu0 0.0
      %2762 = vmatmul.mubr.f32.gmra.mrb[0].mxu0 %v1644
      %v2763 = vpop.f32.mrb[0].mxu0
      %v2764 = vadd.f32 0.0, %v2763
      %v2765 = vpop.f32.mrb[0].mxu0
      %2766 = vmatprep.mubr.f32.mxu0 0.0
      %2767 = vmatmul.mubr.f32.gmra.mrb[0].mxu0 %v1647
      %v2768 = vpop.f32.mrb[0].mxu0
      %v2769 = vadd.f32 0.0, %v2768
      %v2770 = vpop.f32.mrb[0].mxu0
      %2771 = vdwg.mxu0
      %v2772 = vadd.f32 %v2600, %v2764
      %v2773 = vadd.f32 %v2605, %v2769
      %v2774 = vtanh.pop %v2772
      %v2775 = vtanh.pop %v2773
      %v2776 = vadd.f32 %v1014, %v2774
      %v2777 = vadd.f32 %v1015, %v2775
      %2778 = vst.msk [vmem:[%s1006] sm:$0xff] %vm1392, %v2776
      %vm2779 = vcmask 19456
      %2780 = vst.msk [vmem:[%s1006 + $0x8] sm:$0xf] %vm2779, %v2777
      %p2781 = scmp.lt.s32.totalorder %s75, 1
      %s2782 = scalar_select %p2781, %s75, 1
      %s2783 = smul.addr %s2782, 2
      %s2784 = smul.addr %s2783, 8
      %s2785 = scalar_lea.vmem %s61, %s2784
      %p2786 = scmp.lt.s32.totalorder %s75, 1
      %s2787 = scalar_select %p2786, %s75, 1
      %s2788 = smul.addr %s2787, 2
      %s2789 = smul.addr %s2788, 8
      %s2790 = scalar_lea.vmem %s63, %s2789
      // Predicated region
      $region141: #{mesh_refinement_stage_forward.1} parent=139 // pred_check
        %p2791 = pneg %p738
      $region142: #{mesh_refinement_stage_forward.1} parent=139 // pred_check_branch
        %2793 = sbr.rel (%p2791) target = $region144
      $region143: #{mesh_refinement_stage_forward.1} parent=139 // pred_region
        _
      $region144: #{mesh_refinement_stage_forward.1} parent=139 // pred_fallthru
        _
      // Predicated region
      $region145: #{mesh_refinement_stage_forward.1} parent=139 // pred_check
        %p2794 = pneg %p764
      $region146: #{mesh_refinement_stage_forward.1} parent=139 // pred_check_branch
        %2796 = sbr.rel (%p2794) target = $region148
      $region147: #{mesh_refinement_stage_forward.1} parent=139 // pred_region
        _
      $region148: #{mesh_refinement_stage_forward.1} parent=139 // pred_fallthru
        _
    $region140: #{mesh_refinement_stage_forward.1} parent=5 // pred_fallthru
      _
    %p2797 = scmp.le.s32.totalorder 2, %s70
    // Predicated region
    $region149: #{mesh_refinement_stage_forward.1} parent=5 // pred_check
      %p2798 = pneg %p2797
    $region150: #{mesh_refinement_stage_forward.1} parent=5 // pred_check_branch
      %2800 = sbr.rel (%p2798) target = $region152
    $region151: #{mesh_refinement_stage_forward.1} parent=5 // pred_region
      %s2801 = ssub.s32 %s70, 2
      // Predicated region
      $region153: #{mesh_refinement_stage_forward.1} parent=151 // pred_check
        %p2802 = pneg %p744
      $region154: #{mesh_refinement_stage_forward.1} parent=151 // pred_check_branch
        %2804 = sbr.rel (%p2802) target = $region156
      $region155: #{mesh_refinement_stage_forward.1} parent=151 // pred_region
        %p2805 = scmp.lt.s32.totalorder %s76, 1
        %s2806 = scalar_select %p2805, %s76, 1
        %s2807 = smul.addr %s2806, 2
        %s2808 = smul.addr %s2807, 8
        %s2809 = scalar_lea.vmem %s61, %s2808
      $region156: #{mesh_refinement_stage_forward.1} parent=151 // pred_fallthru
        _
      // Predicated region
      $region157: #{mesh_refinement_stage_forward.1} parent=151 // pred_check
        %p2810 = pneg %p770
      $region158: #{mesh_refinement_stage_forward.1} parent=151 // pred_check_branch
        %2812 = sbr.rel (%p2810) target = $region160
      $region159: #{mesh_refinement_stage_forward.1} parent=151 // pred_region
        %p2813 = scmp.lt.s32.totalorder %s76, 1
        %s2814 = scalar_select %p2813, %s76, 1
        %s2815 = smul.addr %s2814, 2
        %s2816 = smul.addr %s2815, 8
        %s2817 = scalar_lea.vmem %s63, %s2816
      $region160: #{mesh_refinement_stage_forward.1} parent=151 // pred_fallthru
        _
    $region152: #{mesh_refinement_stage_forward.1} parent=5 // pred_fallthru
      _
  $region6: #{mesh_refinement_stage_forward.1} parent=0 // loop_footer
    %s74 = sadd.s32 1, %s70
  $region7: #{mesh_refinement_stage_forward.1} parent=0 // loop_footer_branch
    %69 = sbr.rel target = $region3
  $region8: #{mesh_refinement_stage_forward.1} parent=0 // loop_exit
    _

</llo_original>
